<compile_context>
chip_gen: v6e
topology: v6e:2x2x1
jax: 0.10.0
libtpu: 0.0.40
codegen_flags: <defaults>
</compile_context>

<pallas_src>
import jax
import jax.numpy as jnp
from jax import lax
from jax.experimental import pallas as pl
from jax.experimental.pallas import tpu as pltpu


_X_CHUNK_BYTES = 512 * 1024   # per-buffer VMEM budget for one streamed X chunk
_VPU_LSE_MAX_C = 16           # at/below this label count, do the LSE on the VPU


def _pick_s_chunk(S, D, tile_n):
    """Largest multiple-of-8 divisor of S whose X chunk fits _X_CHUNK_BYTES (else S)."""
    best = None
    for c in range(8, S + 1, 8):
        if S % c == 0 and c * D * tile_n * 4 <= _X_CHUNK_BYTES:
            best = c
    return best if best is not None else S


def _make_crf_kernel(S, C, s_chunk, tile_n):
    use_vpu_lse = C <= _VPU_LSE_MAX_C

    def kernel(x_ref, wt_ref, t_ref, lab_ref, mask_ref, bw_ref, out_ref, npot_ref):
        # x_ref:    (tile_n, s_chunk, D)  native-layout X chunk (streamed over S)
        # wt_ref:   (C, D)                W^T, resident
        # t_ref:    (C, C)                transition matrix, resident
        # lab_ref:  (S, 1, tile_n) int32  gold label indices, batch on lanes
        # mask_ref: (S, 1, tile_n)        pad mask, batch on lanes
        # bw_ref:   (1, tile_n)           1.0 real sample, 0.0 batch padding
        # out_ref:  (1, tile_n)           per-sample (gold_score - logZ) * bw
        # npot_ref: (S, C, tile_n)        VMEM scratch: node potentials (resident)
        s_idx = pl.program_id(1)
        n_s = pl.num_programs(1)
        wt = wt_ref[...]
        base = s_idx * s_chunk

        # ---- phase 1: stream this S-chunk of X -> raw node potentials -----------
        # Statically unrolled; the rhs transpose is fused into the MXU matmul
        # (same pattern as q @ k.T in the flash-attention reference kernel).
        for k in range(s_chunk):
            xk = x_ref[:, k, :]                                        # (tile_n, D)
            npot_ref[base + k] = jnp.dot(
                wt, xk.T, preferred_element_type=jnp.float32)          # (C, tile_n)

        # ---- epilogue: only once all S chunks are in the resident scratch -------
        @pl.when(s_idx == n_s - 1)
        def _epilogue():
            T = t_ref[...]

            # phase 2: sequential pad-mask smear (exact reference semantics,
            # including the t=0 read of the *raw* last timestep).
            def smear_body(t, prev):
                m = mask_ref[t]                                        # (1, tile_n)
                new = (1.0 - m) * prev + m * npot_ref[t]               # (C, tile_n)
                npot_ref[t] = new
                return new

            lax.fori_loop(0, S, smear_body, npot_ref[S - 1])

            # phases 3+4 fused: backward log messages / logZ + gold-path score.
            iota_c = lax.broadcasted_iota(jnp.int32, (C, tile_n), 0)

            def onehot(t):
                return (iota_c == lab_ref[t]).astype(jnp.float32)      # (C, tile_n)

            # Overflow-safe LSE:  lse_k(np+T[j,:]+msg)
            #   = m_bar + Tmax_j + log(sum_k exp(T[j,k]-Tmax_j) * exp(np_k+msg_k-m_bar))
            t_rowmax = jnp.max(T, axis=1, keepdims=True)               # (C, 1)
            expT = jnp.exp(T - t_rowmax)                               # entries in (0, 1]
            if use_vpu_lse:
                # hoisted lane-broadcasts of the expT columns (loop-invariant)
                expT_cols = [jnp.broadcast_to(expT[:, k:k + 1], (C, tile_n))
                             for k in range(C)]

            oh_last = onehot(S - 1)
            acc0 = npot_ref[S - 1] * oh_last * mask_ref[S - 1]         # unary @ S-1

            def bwd_body(step, carry):
                msgs, acc, oh_next = carry                             # oh_next = onehot(i1)
                i1 = S - 1 - step                                      # S-1 .. 1
                m_i1 = mask_ref[i1]
                a = npot_ref[i1] + msgs                                # (C, tile_n)
                m_bar = jnp.max(a, axis=0, keepdims=True)              # (1, tile_n)
                ea = jnp.exp(a - m_bar)
                if use_vpu_lse:
                    ssum = expT_cols[0] * ea[0:1, :]
                    for k in range(1, C):
                        ssum = ssum + expT_cols[k] * ea[k:k + 1, :]
                else:
                    ssum = jnp.dot(expT, ea, preferred_element_type=jnp.float32)
                new_msgs = (m_bar + t_rowmax +
                            jnp.log(jnp.maximum(ssum, 1e-37))) * m_i1

                # gold score for timestep i1-1 (order-independent, hides under
                # the serial LSE chain): unary(i1-1) + transition(i1-1 -> i1).
                oh_prev = onehot(i1 - 1)
                acc = acc + npot_ref[i1 - 1] * oh_prev * mask_ref[i1 - 1]
                acc = acc + oh_prev * jnp.dot(
                    T, oh_next, preferred_element_type=jnp.float32) * m_i1
                return new_msgs, acc, oh_prev

            msgs0, acc, _ = lax.fori_loop(
                0, S - 1, bwd_body,
                (jnp.zeros((C, tile_n), jnp.float32), acc0, oh_last))

            a0 = npot_ref[0] + msgs0
            m0 = jnp.max(a0, axis=0, keepdims=True)
            logz = m0 + jnp.log(jnp.sum(jnp.exp(a0 - m0), axis=0, keepdims=True))
            gold = jnp.sum(acc, axis=0, keepdims=True)                 # (1, tile_n)
            out_ref[...] = (gold - logz) * bw_ref[...]

    return kernel


def crf_loss(X, W, T, labels, pad_mask):
    """Negative conditional log-likelihood averaged over the batch (crf_loss_func.forward)."""
    X = jnp.asarray(X, jnp.float32)
    W = jnp.asarray(W, jnp.float32)
    T = jnp.asarray(T, jnp.float32)
    labels = jnp.asarray(labels, jnp.float32)
    pad_mask = jnp.asarray(pad_mask, jnp.float32)

    N, S, D = X.shape
    C = W.shape[1]
    # Wider lane tile when the batch can feed it.  (On v7x, >=2 batch tiles are
    # needed for the 'parallel' axis to light up both TensorCores.)
    tile_n = 128 if N <= 128 else 256
    num_tiles = pl.cdiv(N, tile_n)
    n_pad = num_tiles * tile_n
    s_chunk = _pick_s_chunk(S, D, tile_n)
    n_s = S // s_chunk

    # Labels as int32 indices (exact for one-hot labels; one-hot rebuilt in-kernel).
    lab_idx = jnp.argmax(labels, axis=-1).astype(jnp.int32)            # (N, S)

    # Batch padding only when needed; X stays in its native (N, S, D) layout.
    if n_pad != N:
        Xp = jnp.pad(X, ((0, n_pad - N), (0, 0), (0, 0)))
        lab_idx = jnp.pad(lab_idx, ((0, n_pad - N), (0, 0)))
        pad_mask_p = jnp.pad(pad_mask, ((0, n_pad - N), (0, 0)))
    else:
        Xp, pad_mask_p = X, pad_mask
    labt = jnp.transpose(lab_idx).reshape(S, 1, n_pad)                 # tiny
    maskt = jnp.transpose(pad_mask_p).reshape(S, 1, n_pad)             # tiny
    wt = jnp.transpose(W)                                              # (C, D), tiny
    bw = (jnp.arange(n_pad) < N).astype(jnp.float32).reshape(1, n_pad)

    # Explicit VMEM budget: double-buffered blocks + resident npot scratch + headroom.
    block_elems = (tile_n * s_chunk * D   # X chunk
                   + C * D + C * C        # W^T, T
                   + 2 * S * tile_n       # labels, mask
                   + 2 * tile_n)          # bw, out
    vmem_bytes = 2 * block_elems * 4 + S * C * tile_n * 4
    vmem_limit = int(min(128 * 1024 * 1024, max(vmem_bytes + (8 << 20), 32 << 20)))

    kernel = _make_crf_kernel(S, C, s_chunk, tile_n)
    grid_spec = pltpu.PrefetchScalarGridSpec(
        num_scalar_prefetch=0,
        grid=(num_tiles, n_s),
        in_specs=[
            pl.BlockSpec((tile_n, s_chunk, D), lambda i, s: (i, s, 0)),  # X (native, streamed)
            pl.BlockSpec((C, D), lambda i, s: (0, 0)),                   # W^T (resident)
            pl.BlockSpec((C, C), lambda i, s: (0, 0)),                   # T   (resident)
            pl.BlockSpec((S, 1, tile_n), lambda i, s: (0, 0, i)),        # label indices
            pl.BlockSpec((S, 1, tile_n), lambda i, s: (0, 0, i)),        # pad mask
            pl.BlockSpec((1, tile_n), lambda i, s: (0, i)),              # batch validity
        ],
        out_specs=pl.BlockSpec((1, tile_n), lambda i, s: (0, i)),        # lane-dense scores
        scratch_shapes=[pltpu.VMEM((S, C, tile_n), jnp.float32)],
    )
    per_sample = pl.pallas_call(
        kernel,
        out_shape=jax.ShapeDtypeStruct((1, n_pad), jnp.float32),
        grid_spec=grid_spec,
        compiler_params=pltpu.CompilerParams(
            dimension_semantics=("parallel", "arbitrary"),
            vmem_limit_bytes=vmem_limit),
    )(Xp, wt, T, labt, maskt, bw)

    # Padded lanes were already zeroed by bw inside the kernel.
    return -jnp.sum(per_sample) / N


def _lse(mat):
    # log-sum-exp over the last axis (matches the PyTorch log_sum_exp helper).
    m = jnp.max(mat, axis=-1, keepdims=True)
    return m[..., 0] + jnp.log(jnp.sum(jnp.exp(mat - m), axis=-1))


def crf_loss_ref(X, W, T, labels, pad_mask):
    """Plain-JAX reference that follows the PyTorch code literally (argmax + gather)."""
    N, S, D = X.shape
    C = W.shape[1]
    np0 = X @ W
    cols = []
    for t in range(S):
        m = pad_mask[:, t][:, None]
        prev = cols[t - 1] if t > 0 else np0[:, S - 1, :]
        cols.append((1.0 - m) * prev + m * np0[:, t, :])
    node_pot = jnp.stack(cols, axis=1)
    msgs = jnp.zeros((N, S, C), jnp.float32)
    for i in range(S - 2, -1, -1):
        arg = node_pot[:, i + 1, None, :] + T[None, :, :] + msgs[:, i + 1, None, :]
        new = _lse(arg)
        msgs = msgs.at[:, i, :].set(new * pad_mask[:, i + 1][:, None])
    logZ = _lse(node_pot[:, 0, :] + msgs[:, 0, :])
    labels_idx = jnp.argmax(labels, axis=-1)
    unnorm = jnp.zeros((N,), jnp.float32)
    for t in range(S):
        unnorm += jnp.sum(node_pot[:, t, :] * labels[:, t, :], axis=-1) * pad_mask[:, t]
    for t in range(S - 1):
        unnorm += jnp.sum(T[labels_idx[:, t], :] * labels[:, t + 1, :], axis=-1) * pad_mask[:, t + 1]
    return -jnp.mean(unnorm - logZ)


if __name__ == "__main__":
    key = jax.random.PRNGKey(0)
    # batch, seq-len, feature dim, num labels.  S=32 / D=128 exercises the
    # multi-chunk S-streaming path (4 chunks of 8 timesteps) on top of the
    # batch-tiled grid.
    N, S, D, C = 5, 32, 128, 8

    k1, k2, k3, k4 = jax.random.split(key, 4)
    X = jax.random.normal(k1, (N, S, D), dtype=jnp.float32)
    W = 0.1 * jax.random.normal(k2, (D, C), dtype=jnp.float32)
    T = 0.1 * jax.random.normal(k3, (C, C), dtype=jnp.float32)
    lab_idx = jax.random.randint(k4, (N, S), 0, C)
    labels = jax.nn.one_hot(lab_idx, C, dtype=jnp.float32)
    lengths = jnp.array([S, S - 5, 17, 9, 1], dtype=jnp.int32)
    pad_mask = (jnp.arange(S)[None, :] < lengths[:, None]).astype(jnp.float32)

    out = jax.block_until_ready(crf_loss(X, W, T, labels, pad_mask))
    ref = crf_loss_ref(X, W, T, labels, pad_mask)

    assert bool(jnp.isfinite(out)), "kernel produced non-finite loss"
    assert jnp.allclose(out, ref, rtol=2e-4, atol=2e-4), (out, ref)
    print("KERNEL_OK")
</pallas_src>

<mosaic_0001>
module attributes {stable_mosaic.version = 11 : i64} {
  func.func @kernel(%arg0: i32, %arg1: i32, %arg2: memref<128x8x128xf32, #tpu.memory_space<vmem>>, %arg3: memref<8x128xf32, #tpu.memory_space<vmem>>, %arg4: memref<8x8xf32, #tpu.memory_space<vmem>>, %arg5: memref<32x1x128xi32, #tpu.memory_space<vmem>>, %arg6: memref<32x1x128xf32, #tpu.memory_space<vmem>>, %arg7: memref<1x128xf32, #tpu.memory_space<vmem>>, %arg8: memref<1x128xf32, #tpu.memory_space<vmem>>, %arg9: memref<32x8x128xf32, #tpu.memory_space<vmem>>) attributes {dimension_semantics = [#tpu.dimension_semantics<parallel>, #tpu.dimension_semantics<arbitrary>], iteration_bounds = array<i64: 1, 4>, scalar_prefetch = 0 : i64, scratch_operands = 1 : i64, tpu.core_type = #tpu.core_type<tc>, window_params = [{transform_indices = @transform_0, window_bounds = array<i64: 128, 8, 128>}, {pipeline_mode = #tpu.pipeline_mode<synchronous>, transform_indices = @transform_1, window_bounds = array<i64: 8, 128>}, {pipeline_mode = #tpu.pipeline_mode<synchronous>, transform_indices = @transform_2, window_bounds = array<i64: 8, 8>}, {transform_indices = @transform_3, window_bounds = array<i64: 32, 1, 128>}, {transform_indices = @transform_4, window_bounds = array<i64: 32, 1, 128>}, {transform_indices = @transform_5, window_bounds = array<i64: 1, 128>}, {transform_indices = @transform_6, window_bounds = array<i64: 1, 128>}]} {
    %c0 = arith.constant 0 : index
    %c0_0 = arith.constant 0 : index
    %0 = vector.load %arg3[%c0, %c0_0] : memref<8x128xf32, #tpu.memory_space<vmem>>, vector<8x128xf32>
    %c8_i32 = arith.constant 8 : i32
    %1 = arith.muli %arg1, %c8_i32 : i32
    %c0_1 = arith.constant 0 : index
    %c0_2 = arith.constant 0 : index
    %c0_3 = arith.constant 0 : index
    %2 = vector.load %arg2[%c0_1, %c0_2, %c0_3] : memref<128x8x128xf32, #tpu.memory_space<vmem>>, vector<128x1x128xf32>
    %3 = vector.shape_cast %2 : vector<128x1x128xf32> to vector<128x128xf32>
    %4 = tpu.transpose %3, [1, 0] : vector<128x128xf32> -> vector<128x128xf32>
    %cst = arith.constant dense<0.000000e+00> : vector<8x128xf32>
    %5 = tpu.matmul %0, %4, %cst {dimension_numbers = #tpu.dot_dimension_numbers<[1], [0], [0], [1], [0, 0, 1, 1], [], []>} : vector<8x128xf32>, vector<128x128xf32>, vector<8x128xf32> -> vector<8x128xf32>
    %c0_i32 = arith.constant 0 : i32
    %6 = arith.addi %1, %c0_i32 : i32
    %7 = arith.index_cast %6 : i32 to index
    %c0_4 = arith.constant 0 : index
    %c0_5 = arith.constant 0 : index
    %8 = vector.load %arg9[%7, %c0_4, %c0_5] : memref<32x8x128xf32, #tpu.memory_space<vmem>>, vector<1x8x128xf32>
    %9 = vector.shape_cast %8 : vector<1x8x128xf32> to vector<8x128xf32>
    %10 = vector.shape_cast %5 : vector<8x128xf32> to vector<1x8x128xf32>
    tpu.vector_store %arg9[%7, %c0_4, %c0_5], %10 {strides = array<i32>} : memref<32x8x128xf32, #tpu.memory_space<vmem>>, vector<1x8x128xf32>,
    %c0_6 = arith.constant 0 : index
    %c1 = arith.constant 1 : index
    %c0_7 = arith.constant 0 : index
    %11 = vector.load %arg2[%c0_6, %c1, %c0_7] : memref<128x8x128xf32, #tpu.memory_space<vmem>>, vector<128x1x128xf32>
    %12 = vector.shape_cast %11 : vector<128x1x128xf32> to vector<128x128xf32>
    %13 = tpu.transpose %12, [1, 0] : vector<128x128xf32> -> vector<128x128xf32>
    %cst_8 = arith.constant dense<0.000000e+00> : vector<8x128xf32>
    %14 = tpu.matmul %0, %13, %cst_8 {dimension_numbers = #tpu.dot_dimension_numbers<[1], [0], [0], [1], [0, 0, 1, 1], [], []>} : vector<8x128xf32>, vector<128x128xf32>, vector<8x128xf32> -> vector<8x128xf32>
    %c1_i32 = arith.constant 1 : i32
    %15 = arith.addi %1, %c1_i32 : i32
    %16 = arith.index_cast %15 : i32 to index
    %c0_9 = arith.constant 0 : index
    %c0_10 = arith.constant 0 : index
    %17 = vector.load %arg9[%16, %c0_9, %c0_10] : memref<32x8x128xf32, #tpu.memory_space<vmem>>, vector<1x8x128xf32>
    %18 = vector.shape_cast %17 : vector<1x8x128xf32> to vector<8x128xf32>
    %19 = vector.shape_cast %14 : vector<8x128xf32> to vector<1x8x128xf32>
    tpu.vector_store %arg9[%16, %c0_9, %c0_10], %19 {strides = array<i32>} : memref<32x8x128xf32, #tpu.memory_space<vmem>>, vector<1x8x128xf32>,
    %c0_11 = arith.constant 0 : index
    %c2 = arith.constant 2 : index
    %c0_12 = arith.constant 0 : index
    %20 = vector.load %arg2[%c0_11, %c2, %c0_12] : memref<128x8x128xf32, #tpu.memory_space<vmem>>, vector<128x1x128xf32>
    %21 = vector.shape_cast %20 : vector<128x1x128xf32> to vector<128x128xf32>
    %22 = tpu.transpose %21, [1, 0] : vector<128x128xf32> -> vector<128x128xf32>
    %cst_13 = arith.constant dense<0.000000e+00> : vector<8x128xf32>
    %23 = tpu.matmul %0, %22, %cst_13 {dimension_numbers = #tpu.dot_dimension_numbers<[1], [0], [0], [1], [0, 0, 1, 1], [], []>} : vector<8x128xf32>, vector<128x128xf32>, vector<8x128xf32> -> vector<8x128xf32>
    %c2_i32 = arith.constant 2 : i32
    %24 = arith.addi %1, %c2_i32 : i32
    %25 = arith.index_cast %24 : i32 to index
    %c0_14 = arith.constant 0 : index
    %c0_15 = arith.constant 0 : index
    %26 = vector.load %arg9[%25, %c0_14, %c0_15] : memref<32x8x128xf32, #tpu.memory_space<vmem>>, vector<1x8x128xf32>
    %27 = vector.shape_cast %26 : vector<1x8x128xf32> to vector<8x128xf32>
    %28 = vector.shape_cast %23 : vector<8x128xf32> to vector<1x8x128xf32>
    tpu.vector_store %arg9[%25, %c0_14, %c0_15], %28 {strides = array<i32>} : memref<32x8x128xf32, #tpu.memory_space<vmem>>, vector<1x8x128xf32>,
    %c0_16 = arith.constant 0 : index
    %c3 = arith.constant 3 : index
    %c0_17 = arith.constant 0 : index
    %29 = vector.load %arg2[%c0_16, %c3, %c0_17] : memref<128x8x128xf32, #tpu.memory_space<vmem>>, vector<128x1x128xf32>
    %30 = vector.shape_cast %29 : vector<128x1x128xf32> to vector<128x128xf32>
    %31 = tpu.transpose %30, [1, 0] : vector<128x128xf32> -> vector<128x128xf32>
    %cst_18 = arith.constant dense<0.000000e+00> : vector<8x128xf32>
    %32 = tpu.matmul %0, %31, %cst_18 {dimension_numbers = #tpu.dot_dimension_numbers<[1], [0], [0], [1], [0, 0, 1, 1], [], []>} : vector<8x128xf32>, vector<128x128xf32>, vector<8x128xf32> -> vector<8x128xf32>
    %c3_i32 = arith.constant 3 : i32
    %33 = arith.addi %1, %c3_i32 : i32
    %34 = arith.index_cast %33 : i32 to index
    %c0_19 = arith.constant 0 : index
    %c0_20 = arith.constant 0 : index
    %35 = vector.load %arg9[%34, %c0_19, %c0_20] : memref<32x8x128xf32, #tpu.memory_space<vmem>>, vector<1x8x128xf32>
    %36 = vector.shape_cast %35 : vector<1x8x128xf32> to vector<8x128xf32>
    %37 = vector.shape_cast %32 : vector<8x128xf32> to vector<1x8x128xf32>
    tpu.vector_store %arg9[%34, %c0_19, %c0_20], %37 {strides = array<i32>} : memref<32x8x128xf32, #tpu.memory_space<vmem>>, vector<1x8x128xf32>,
    %c0_21 = arith.constant 0 : index
    %c4 = arith.constant 4 : index
    %c0_22 = arith.constant 0 : index
    %38 = vector.load %arg2[%c0_21, %c4, %c0_22] : memref<128x8x128xf32, #tpu.memory_space<vmem>>, vector<128x1x128xf32>
    %39 = vector.shape_cast %38 : vector<128x1x128xf32> to vector<128x128xf32>
    %40 = tpu.transpose %39, [1, 0] : vector<128x128xf32> -> vector<128x128xf32>
    %cst_23 = arith.constant dense<0.000000e+00> : vector<8x128xf32>
    %41 = tpu.matmul %0, %40, %cst_23 {dimension_numbers = #tpu.dot_dimension_numbers<[1], [0], [0], [1], [0, 0, 1, 1], [], []>} : vector<8x128xf32>, vector<128x128xf32>, vector<8x128xf32> -> vector<8x128xf32>
    %c4_i32 = arith.constant 4 : i32
    %42 = arith.addi %1, %c4_i32 : i32
    %43 = arith.index_cast %42 : i32 to index
    %c0_24 = arith.constant 0 : index
    %c0_25 = arith.constant 0 : index
    %44 = vector.load %arg9[%43, %c0_24, %c0_25] : memref<32x8x128xf32, #tpu.memory_space<vmem>>, vector<1x8x128xf32>
    %45 = vector.shape_cast %44 : vector<1x8x128xf32> to vector<8x128xf32>
    %46 = vector.shape_cast %41 : vector<8x128xf32> to vector<1x8x128xf32>
    tpu.vector_store %arg9[%43, %c0_24, %c0_25], %46 {strides = array<i32>} : memref<32x8x128xf32, #tpu.memory_space<vmem>>, vector<1x8x128xf32>,
    %c0_26 = arith.constant 0 : index
    %c5 = arith.constant 5 : index
    %c0_27 = arith.constant 0 : index
    %47 = vector.load %arg2[%c0_26, %c5, %c0_27] : memref<128x8x128xf32, #tpu.memory_space<vmem>>, vector<128x1x128xf32>
    %48 = vector.shape_cast %47 : vector<128x1x128xf32> to vector<128x128xf32>
    %49 = tpu.transpose %48, [1, 0] : vector<128x128xf32> -> vector<128x128xf32>
    %cst_28 = arith.constant dense<0.000000e+00> : vector<8x128xf32>
    %50 = tpu.matmul %0, %49, %cst_28 {dimension_numbers = #tpu.dot_dimension_numbers<[1], [0], [0], [1], [0, 0, 1, 1], [], []>} : vector<8x128xf32>, vector<128x128xf32>, vector<8x128xf32> -> vector<8x128xf32>
    %c5_i32 = arith.constant 5 : i32
    %51 = arith.addi %1, %c5_i32 : i32
    %52 = arith.index_cast %51 : i32 to index
    %c0_29 = arith.constant 0 : index
    %c0_30 = arith.constant 0 : index
    %53 = vector.load %arg9[%52, %c0_29, %c0_30] : memref<32x8x128xf32, #tpu.memory_space<vmem>>, vector<1x8x128xf32>
    %54 = vector.shape_cast %53 : vector<1x8x128xf32> to vector<8x128xf32>
    %55 = vector.shape_cast %50 : vector<8x128xf32> to vector<1x8x128xf32>
    tpu.vector_store %arg9[%52, %c0_29, %c0_30], %55 {strides = array<i32>} : memref<32x8x128xf32, #tpu.memory_space<vmem>>, vector<1x8x128xf32>,
    %c0_31 = arith.constant 0 : index
    %c6 = arith.constant 6 : index
    %c0_32 = arith.constant 0 : index
    %56 = vector.load %arg2[%c0_31, %c6, %c0_32] : memref<128x8x128xf32, #tpu.memory_space<vmem>>, vector<128x1x128xf32>
    %57 = vector.shape_cast %56 : vector<128x1x128xf32> to vector<128x128xf32>
    %58 = tpu.transpose %57, [1, 0] : vector<128x128xf32> -> vector<128x128xf32>
    %cst_33 = arith.constant dense<0.000000e+00> : vector<8x128xf32>
    %59 = tpu.matmul %0, %58, %cst_33 {dimension_numbers = #tpu.dot_dimension_numbers<[1], [0], [0], [1], [0, 0, 1, 1], [], []>} : vector<8x128xf32>, vector<128x128xf32>, vector<8x128xf32> -> vector<8x128xf32>
    %c6_i32 = arith.constant 6 : i32
    %60 = arith.addi %1, %c6_i32 : i32
    %61 = arith.index_cast %60 : i32 to index
    %c0_34 = arith.constant 0 : index
    %c0_35 = arith.constant 0 : index
    %62 = vector.load %arg9[%61, %c0_34, %c0_35] : memref<32x8x128xf32, #tpu.memory_space<vmem>>, vector<1x8x128xf32>
    %63 = vector.shape_cast %62 : vector<1x8x128xf32> to vector<8x128xf32>
    %64 = vector.shape_cast %59 : vector<8x128xf32> to vector<1x8x128xf32>
    tpu.vector_store %arg9[%61, %c0_34, %c0_35], %64 {strides = array<i32>} : memref<32x8x128xf32, #tpu.memory_space<vmem>>, vector<1x8x128xf32>,
    %c0_36 = arith.constant 0 : index
    %c7 = arith.constant 7 : index
    %c0_37 = arith.constant 0 : index
    %65 = vector.load %arg2[%c0_36, %c7, %c0_37] : memref<128x8x128xf32, #tpu.memory_space<vmem>>, vector<128x1x128xf32>
    %66 = vector.shape_cast %65 : vector<128x1x128xf32> to vector<128x128xf32>
    %67 = tpu.transpose %66, [1, 0] : vector<128x128xf32> -> vector<128x128xf32>
    %cst_38 = arith.constant dense<0.000000e+00> : vector<8x128xf32>
    %68 = tpu.matmul %0, %67, %cst_38 {dimension_numbers = #tpu.dot_dimension_numbers<[1], [0], [0], [1], [0, 0, 1, 1], [], []>} : vector<8x128xf32>, vector<128x128xf32>, vector<8x128xf32> -> vector<8x128xf32>
    %c7_i32 = arith.constant 7 : i32
    %69 = arith.addi %1, %c7_i32 : i32
    %70 = arith.index_cast %69 : i32 to index
    %c0_39 = arith.constant 0 : index
    %c0_40 = arith.constant 0 : index
    %71 = vector.load %arg9[%70, %c0_39, %c0_40] : memref<32x8x128xf32, #tpu.memory_space<vmem>>, vector<1x8x128xf32>
    %72 = vector.shape_cast %71 : vector<1x8x128xf32> to vector<8x128xf32>
    %73 = vector.shape_cast %68 : vector<8x128xf32> to vector<1x8x128xf32>
    tpu.vector_store %arg9[%70, %c0_39, %c0_40], %73 {strides = array<i32>} : memref<32x8x128xf32, #tpu.memory_space<vmem>>, vector<1x8x128xf32>,
    %c3_i32_41 = arith.constant 3 : i32
    %74 = arith.cmpi eq, %arg1, %c3_i32_41 : i32
    %75 = arith.extui %74 : i1 to i32
    %c0_i32_42 = arith.constant 0 : i32
    %76 = arith.cmpi ne, %75, %c0_i32_42 : i32
    scf.if %76 {
      %c0_43 = arith.constant 0 : index
      %c0_44 = arith.constant 0 : index
      %77 = vector.load %arg4[%c0_43, %c0_44] : memref<8x8xf32, #tpu.memory_space<vmem>>, vector<8x8xf32>
      %c31 = arith.constant 31 : index
      %c0_45 = arith.constant 0 : index
      %c0_46 = arith.constant 0 : index
      %78 = vector.load %arg9[%c31, %c0_45, %c0_46] : memref<32x8x128xf32, #tpu.memory_space<vmem>>, vector<1x8x128xf32>
      %79 = vector.shape_cast %78 : vector<1x8x128xf32> to vector<8x128xf32>
      %c0_i32_47 = arith.constant 0 : i32
      %c32_i32 = arith.constant 32 : i32
      %80 = arith.addi %c0_i32_47, %c32_i32 : i32
      %c1_i32_48 = arith.constant 1 : i32
      %81 = scf.for %arg10 = %c0_i32_47 to %80 step %c1_i32_48 iter_args(%arg11 = %79) -> (vector<8x128xf32>)  : i32 {
        %146 = arith.index_cast %arg10 : i32 to index
        %c0_74 = arith.constant 0 : index
        %c0_75 = arith.constant 0 : index
        %147 = vector.load %arg6[%146, %c0_74, %c0_75] : memref<32x1x128xf32, #tpu.memory_space<vmem>>, vector<1x1x128xf32>
        %148 = vector.shape_cast %147 : vector<1x1x128xf32> to vector<1x128xf32>
        %cst_76 = arith.constant 1.000000e+00 : f32
        %149 = vector.broadcast %cst_76 : f32 to vector<1x128xf32>
        %150 = arith.subf %149, %148 : vector<1x128xf32>
        %151 = vector.broadcast %150 : vector<1x128xf32> to vector<8x128xf32>
        %152 = arith.mulf %151, %arg11 : vector<8x128xf32>
        %153 = arith.index_cast %arg10 : i32 to index
        %c0_77 = arith.constant 0 : index
        %c0_78 = arith.constant 0 : index
        %154 = vector.load %arg9[%153, %c0_77, %c0_78] : memref<32x8x128xf32, #tpu.memory_space<vmem>>, vector<1x8x128xf32>
        %155 = vector.shape_cast %154 : vector<1x8x128xf32> to vector<8x128xf32>
        %156 = vector.broadcast %148 : vector<1x128xf32> to vector<8x128xf32>
        %157 = arith.mulf %156, %155 : vector<8x128xf32>
        %158 = arith.addf %152, %157 : vector<8x128xf32>
        %159 = arith.index_cast %arg10 : i32 to index
        %c0_79 = arith.constant 0 : index
        %c0_80 = arith.constant 0 : index
        %160 = vector.load %arg9[%159, %c0_79, %c0_80] : memref<32x8x128xf32, #tpu.memory_space<vmem>>, vector<1x8x128xf32>
        %161 = vector.shape_cast %160 : vector<1x8x128xf32> to vector<8x128xf32>
        %162 = vector.shape_cast %158 : vector<8x128xf32> to vector<1x8x128xf32>
        tpu.vector_store %arg9[%159, %c0_79, %c0_80], %162 {strides = array<i32>} : memref<32x8x128xf32, #tpu.memory_space<vmem>>, vector<1x8x128xf32>,
        scf.yield %158 : vector<8x128xf32>
      }
      %c32_i32_49 = arith.constant 32 : i32
      %82 = tpu.iota {dimensions = array<i32: 0>} : vector<8x128xi32>
      %cst_50 = arith.constant dense<0xFF800000> : vector<8xf32>
      %83 = vector.multi_reduction <maximumf>, %77, %cst_50 [1] : vector<8x8xf32> to vector<8xf32>
      %84 = vector.shape_cast %83 : vector<8xf32> to vector<8x1xf32>
      %85 = vector.broadcast %84 : vector<8x1xf32> to vector<8x8xf32>
      %86 = arith.subf %77, %85 : vector<8x8xf32>
      %87 = math.exp %86 : vector<8x8xf32>
      %88 = vector.extract_strided_slice %87 {offsets = [0, 0], sizes = [8, 1], strides = [1, 1]} : vector<8x8xf32> to vector<8x1xf32>
      %89 = vector.shape_cast %88 : vector<8x1xf32> to vector<8x1xf32>
      %90 = vector.broadcast %89 : vector<8x1xf32> to vector<8x128xf32>
      %91 = vector.extract_strided_slice %87 {offsets = [0, 1], sizes = [8, 1], strides = [1, 1]} : vector<8x8xf32> to vector<8x1xf32>
      %92 = vector.shape_cast %91 : vector<8x1xf32> to vector<8x1xf32>
      %93 = vector.broadcast %92 : vector<8x1xf32> to vector<8x128xf32>
      %94 = vector.extract_strided_slice %87 {offsets = [0, 2], sizes = [8, 1], strides = [1, 1]} : vector<8x8xf32> to vector<8x1xf32>
      %95 = vector.shape_cast %94 : vector<8x1xf32> to vector<8x1xf32>
      %96 = vector.broadcast %95 : vector<8x1xf32> to vector<8x128xf32>
      %97 = vector.extract_strided_slice %87 {offsets = [0, 3], sizes = [8, 1], strides = [1, 1]} : vector<8x8xf32> to vector<8x1xf32>
      %98 = vector.shape_cast %97 : vector<8x1xf32> to vector<8x1xf32>
      %99 = vector.broadcast %98 : vector<8x1xf32> to vector<8x128xf32>
      %100 = vector.extract_strided_slice %87 {offsets = [0, 4], sizes = [8, 1], strides = [1, 1]} : vector<8x8xf32> to vector<8x1xf32>
      %101 = vector.shape_cast %100 : vector<8x1xf32> to vector<8x1xf32>
      %102 = vector.broadcast %101 : vector<8x1xf32> to vector<8x128xf32>
      %103 = vector.extract_strided_slice %87 {offsets = [0, 5], sizes = [8, 1], strides = [1, 1]} : vector<8x8xf32> to vector<8x1xf32>
      %104 = vector.shape_cast %103 : vector<8x1xf32> to vector<8x1xf32>
      %105 = vector.broadcast %104 : vector<8x1xf32> to vector<8x128xf32>
      %106 = vector.extract_strided_slice %87 {offsets = [0, 6], sizes = [8, 1], strides = [1, 1]} : vector<8x8xf32> to vector<8x1xf32>
      %107 = vector.shape_cast %106 : vector<8x1xf32> to vector<8x1xf32>
      %108 = vector.broadcast %107 : vector<8x1xf32> to vector<8x128xf32>
      %109 = vector.extract_strided_slice %87 {offsets = [0, 7], sizes = [8, 1], strides = [1, 1]} : vector<8x8xf32> to vector<8x1xf32>
      %110 = vector.shape_cast %109 : vector<8x1xf32> to vector<8x1xf32>
      %111 = vector.broadcast %110 : vector<8x1xf32> to vector<8x128xf32>
      %c31_51 = arith.constant 31 : index
      %c0_52 = arith.constant 0 : index
      %c0_53 = arith.constant 0 : index
      %112 = vector.load %arg5[%c31_51, %c0_52, %c0_53] : memref<32x1x128xi32, #tpu.memory_space<vmem>>, vector<1x1x128xi32>
      %113 = vector.shape_cast %112 : vector<1x1x128xi32> to vector<1x128xi32>
      %114 = vector.broadcast %113 : vector<1x128xi32> to vector<8x128xi32>
      %115 = arith.cmpi eq, %82, %114 : vector<8x128xi32>
      %116 = arith.extui %115 : vector<8x128xi1> to vector<8x128xi32>
      %117 = arith.sitofp %116 : vector<8x128xi32> to vector<8x128xf32>
      %c31_54 = arith.constant 31 : index
      %c0_55 = arith.constant 0 : index
      %c0_56 = arith.constant 0 : index
      %118 = vector.load %arg9[%c31_54, %c0_55, %c0_56] : memref<32x8x128xf32, #tpu.memory_space<vmem>>, vector<1x8x128xf32>
      %119 = vector.shape_cast %118 : vector<1x8x128xf32> to vector<8x128xf32>
      %120 = arith.mulf %119, %117 : vector<8x128xf32>
      %c31_57 = arith.constant 31 : index
      %c0_58 = arith.constant 0 : index
      %c0_59 = arith.constant 0 : index
      %121 = vector.load %arg6[%c31_57, %c0_58, %c0_59] : memref<32x1x128xf32, #tpu.memory_space<vmem>>, vector<1x1x128xf32>
      %122 = vector.shape_cast %121 : vector<1x1x128xf32> to vector<1x128xf32>
      %123 = vector.broadcast %122 : vector<1x128xf32> to vector<8x128xf32>
      %124 = arith.mulf %120, %123 : vector<8x128xf32>
      %cst_60 = arith.constant 0.000000e+00 : f32
      %125 = vector.broadcast %cst_60 : f32 to vector<8x128xf32>
      %c0_i32_61 = arith.constant 0 : i32
      %c31_i32 = arith.constant 31 : i32
      %126 = arith.addi %c0_i32_61, %c31_i32 : i32
      %c1_i32_62 = arith.constant 1 : i32
      %127:3 = scf.for %arg10 = %c0_i32_61 to %126 step %c1_i32_62 iter_args(%arg11 = %125, %arg12 = %124, %arg13 = %117) -> (vector<8x128xf32>, vector<8x128xf32>, vector<8x128xf32>)  : i32 {
        %c31_i32_74 = arith.constant 31 : i32
        %146 = arith.subi %c31_i32_74, %arg10 : i32
        %147 = arith.index_cast %146 : i32 to index
        %c0_75 = arith.constant 0 : index
        %c0_76 = arith.constant 0 : index
        %148 = vector.load %arg6[%147, %c0_75, %c0_76] : memref<32x1x128xf32, #tpu.memory_space<vmem>>, vector<1x1x128xf32>
        %149 = vector.shape_cast %148 : vector<1x1x128xf32> to vector<1x128xf32>
        %150 = arith.index_cast %146 : i32 to index
        %c0_77 = arith.constant 0 : index
        %c0_78 = arith.constant 0 : index
        %151 = vector.load %arg9[%150, %c0_77, %c0_78] : memref<32x8x128xf32, #tpu.memory_space<vmem>>, vector<1x8x128xf32>
        %152 = vector.shape_cast %151 : vector<1x8x128xf32> to vector<8x128xf32>
        %153 = arith.addf %152, %arg11 : vector<8x128xf32>
        %cst_79 = arith.constant dense<0xFF800000> : vector<128xf32>
        %154 = vector.multi_reduction <maximumf>, %153, %cst_79 [0] : vector<8x128xf32> to vector<128xf32>
        %155 = vector.shape_cast %154 : vector<128xf32> to vector<1x128xf32>
        %156 = vector.broadcast %155 : vector<1x128xf32> to vector<8x128xf32>
        %157 = arith.subf %153, %156 : vector<8x128xf32>
        %158 = math.exp %157 : vector<8x128xf32>
        %159 = vector.extract_strided_slice %158 {offsets = [0, 0], sizes = [1, 128], strides = [1, 1]} : vector<8x128xf32> to vector<1x128xf32>
        %160 = vector.broadcast %159 : vector<1x128xf32> to vector<8x128xf32>
        %161 = arith.mulf %90, %160 : vector<8x128xf32>
        %162 = vector.extract_strided_slice %158 {offsets = [1, 0], sizes = [1, 128], strides = [1, 1]} : vector<8x128xf32> to vector<1x128xf32>
        %163 = vector.broadcast %162 : vector<1x128xf32> to vector<8x128xf32>
        %164 = arith.mulf %93, %163 : vector<8x128xf32>
        %165 = arith.addf %161, %164 : vector<8x128xf32>
        %166 = vector.extract_strided_slice %158 {offsets = [2, 0], sizes = [1, 128], strides = [1, 1]} : vector<8x128xf32> to vector<1x128xf32>
        %167 = vector.broadcast %166 : vector<1x128xf32> to vector<8x128xf32>
        %168 = arith.mulf %96, %167 : vector<8x128xf32>
        %169 = arith.addf %165, %168 : vector<8x128xf32>
        %170 = vector.extract_strided_slice %158 {offsets = [3, 0], sizes = [1, 128], strides = [1, 1]} : vector<8x128xf32> to vector<1x128xf32>
        %171 = vector.broadcast %170 : vector<1x128xf32> to vector<8x128xf32>
        %172 = arith.mulf %99, %171 : vector<8x128xf32>
        %173 = arith.addf %169, %172 : vector<8x128xf32>
        %174 = vector.extract_strided_slice %158 {offsets = [4, 0], sizes = [1, 128], strides = [1, 1]} : vector<8x128xf32> to vector<1x128xf32>
        %175 = vector.broadcast %174 : vector<1x128xf32> to vector<8x128xf32>
        %176 = arith.mulf %102, %175 : vector<8x128xf32>
        %177 = arith.addf %173, %176 : vector<8x128xf32>
        %178 = vector.extract_strided_slice %158 {offsets = [5, 0], sizes = [1, 128], strides = [1, 1]} : vector<8x128xf32> to vector<1x128xf32>
        %179 = vector.broadcast %178 : vector<1x128xf32> to vector<8x128xf32>
        %180 = arith.mulf %105, %179 : vector<8x128xf32>
        %181 = arith.addf %177, %180 : vector<8x128xf32>
        %182 = vector.extract_strided_slice %158 {offsets = [6, 0], sizes = [1, 128], strides = [1, 1]} : vector<8x128xf32> to vector<1x128xf32>
        %183 = vector.broadcast %182 : vector<1x128xf32> to vector<8x128xf32>
        %184 = arith.mulf %108, %183 : vector<8x128xf32>
        %185 = arith.addf %181, %184 : vector<8x128xf32>
        %186 = vector.extract_strided_slice %158 {offsets = [7, 0], sizes = [1, 128], strides = [1, 1]} : vector<8x128xf32> to vector<1x128xf32>
        %187 = vector.broadcast %186 : vector<1x128xf32> to vector<8x128xf32>
        %188 = arith.mulf %111, %187 : vector<8x128xf32>
        %189 = arith.addf %185, %188 : vector<8x128xf32>
        %190 = vector.broadcast %155 : vector<1x128xf32> to vector<8x128xf32>
        %191 = vector.broadcast %84 : vector<8x1xf32> to vector<8x128xf32>
        %192 = arith.addf %190, %191 : vector<8x128xf32>
        %cst_80 = arith.constant 9.99999991E-38 : f32
        %193 = vector.broadcast %cst_80 : f32 to vector<8x128xf32>
        %194 = arith.maximumf %189, %193 : vector<8x128xf32>
        %195 = math.log %194 : vector<8x128xf32>
        %196 = arith.addf %192, %195 : vector<8x128xf32>
        %197 = vector.broadcast %149 : vector<1x128xf32> to vector<8x128xf32>
        %198 = arith.mulf %196, %197 : vector<8x128xf32>
        %c1_i32_81 = arith.constant 1 : i32
        %199 = arith.subi %146, %c1_i32_81 : i32
        %200 = arith.index_cast %199 : i32 to index
        %c0_82 = arith.constant 0 : index
        %c0_83 = arith.constant 0 : index
        %201 = vector.load %arg5[%200, %c0_82, %c0_83] : memref<32x1x128xi32, #tpu.memory_space<vmem>>, vector<1x1x128xi32>
        %202 = vector.shape_cast %201 : vector<1x1x128xi32> to vector<1x128xi32>
        %203 = vector.broadcast %202 : vector<1x128xi32> to vector<8x128xi32>
        %204 = arith.cmpi eq, %82, %203 : vector<8x128xi32>
        %205 = arith.extui %204 : vector<8x128xi1> to vector<8x128xi32>
        %206 = arith.sitofp %205 : vector<8x128xi32> to vector<8x128xf32>
        %c1_i32_84 = arith.constant 1 : i32
        %207 = arith.subi %146, %c1_i32_84 : i32
        %208 = arith.index_cast %207 : i32 to index
        %c0_85 = arith.constant 0 : index
        %c0_86 = arith.constant 0 : index
        %209 = vector.load %arg9[%208, %c0_85, %c0_86] : memref<32x8x128xf32, #tpu.memory_space<vmem>>, vector<1x8x128xf32>
        %210 = vector.shape_cast %209 : vector<1x8x128xf32> to vector<8x128xf32>
        %211 = arith.mulf %210, %206 : vector<8x128xf32>
        %c1_i32_87 = arith.constant 1 : i32
        %212 = arith.subi %146, %c1_i32_87 : i32
        %213 = arith.index_cast %212 : i32 to index
        %c0_88 = arith.constant 0 : index
        %c0_89 = arith.constant 0 : index
        %214 = vector.load %arg6[%213, %c0_88, %c0_89] : memref<32x1x128xf32, #tpu.memory_space<vmem>>, vector<1x1x128xf32>
        %215 = vector.shape_cast %214 : vector<1x1x128xf32> to vector<1x128xf32>
        %216 = vector.broadcast %215 : vector<1x128xf32> to vector<8x128xf32>
        %217 = arith.mulf %211, %216 : vector<8x128xf32>
        %218 = arith.addf %arg12, %217 : vector<8x128xf32>
        %cst_90 = arith.constant dense<0.000000e+00> : vector<8x128xf32>
        %219 = tpu.matmul %77, %arg13, %cst_90 {dimension_numbers = #tpu.dot_dimension_numbers<[1], [0], [0], [1], [0, 0, 1, 1], [], []>} : vector<8x8xf32>, vector<8x128xf32>, vector<8x128xf32> -> vector<8x128xf32>
        %220 = arith.mulf %206, %219 : vector<8x128xf32>
        %221 = vector.broadcast %149 : vector<1x128xf32> to vector<8x128xf32>
        %222 = arith.mulf %220, %221 : vector<8x128xf32>
        %223 = arith.addf %218, %222 : vector<8x128xf32>
        scf.yield %198, %223, %206 : vector<8x128xf32>, vector<8x128xf32>, vector<8x128xf32>
      }
      %c31_i32_63 = arith.constant 31 : i32
      %c0_64 = arith.constant 0 : index
      %c0_65 = arith.constant 0 : index
      %c0_66 = arith.constant 0 : index
      %128 = vector.load %arg9[%c0_64, %c0_65, %c0_66] : memref<32x8x128xf32, #tpu.memory_space<vmem>>, vector<1x8x128xf32>
      %129 = vector.shape_cast %128 : vector<1x8x128xf32> to vector<8x128xf32>
      %130 = arith.addf %129, %127#0 : vector<8x128xf32>
      %cst_67 = arith.constant dense<0xFF800000> : vector<128xf32>
      %131 = vector.multi_reduction <maximumf>, %130, %cst_67 [0] : vector<8x128xf32> to vector<128xf32>
      %132 = vector.shape_cast %131 : vector<128xf32> to vector<1x128xf32>
      %133 = vector.broadcast %132 : vector<1x128xf32> to vector<8x128xf32>
      %134 = arith.subf %130, %133 : vector<8x128xf32>
      %135 = math.exp %134 : vector<8x128xf32>
      %cst_68 = arith.constant dense<0.000000e+00> : vector<128xf32>
      %136 = vector.multi_reduction <add>, %135, %cst_68 [0] : vector<8x128xf32> to vector<128xf32>
      %137 = vector.shape_cast %136 : vector<128xf32> to vector<1x128xf32>
      %138 = math.log %137 : vector<1x128xf32>
      %139 = arith.addf %132, %138 : vector<1x128xf32>
      %cst_69 = arith.constant dense<0.000000e+00> : vector<128xf32>
      %140 = vector.multi_reduction <add>, %127#1, %cst_69 [0] : vector<8x128xf32> to vector<128xf32>
      %141 = vector.shape_cast %140 : vector<128xf32> to vector<1x128xf32>
      %142 = arith.subf %141, %139 : vector<1x128xf32>
      %c0_70 = arith.constant 0 : index
      %c0_71 = arith.constant 0 : index
      %143 = vector.load %arg7[%c0_70, %c0_71] : memref<1x128xf32, #tpu.memory_space<vmem>>, vector<1x128xf32>
      %144 = arith.mulf %142, %143 : vector<1x128xf32>
      %c0_72 = arith.constant 0 : index
      %c0_73 = arith.constant 0 : index
      %145 = vector.load %arg8[%c0_72, %c0_73] : memref<1x128xf32, #tpu.memory_space<vmem>>, vector<1x128xf32>
      tpu.vector_store %arg8[%c0_72, %c0_73], %144 {strides = array<i32>} : memref<1x128xf32, #tpu.memory_space<vmem>>, vector<1x128xf32>,
    } else {
    }
    return
  }
  func.func @transform_0(%arg0: i32, %arg1: i32) -> (i32, i32, i32) {
    %c0_i32 = arith.constant 0 : i32
    %c0_i32_0 = arith.constant 0 : i32
    return %arg0, %arg1, %c0_i32 : i32, i32, i32
  }
  func.func @transform_1(%arg0: i32, %arg1: i32) -> (i32, i32) {
    %c0_i32 = arith.constant 0 : i32
    %c0_i32_0 = arith.constant 0 : i32
    %c0_i32_1 = arith.constant 0 : i32
    return %c0_i32, %c0_i32_0 : i32, i32
  }
  func.func @transform_2(%arg0: i32, %arg1: i32) -> (i32, i32) {
    %c0_i32 = arith.constant 0 : i32
    %c0_i32_0 = arith.constant 0 : i32
    %c0_i32_1 = arith.constant 0 : i32
    return %c0_i32, %c0_i32_0 : i32, i32
  }
  func.func @transform_3(%arg0: i32, %arg1: i32) -> (i32, i32, i32) {
    %c0_i32 = arith.constant 0 : i32
    %c0_i32_0 = arith.constant 0 : i32
    %c0_i32_1 = arith.constant 0 : i32
    return %c0_i32, %c0_i32_0, %arg0 : i32, i32, i32
  }
  func.func @transform_4(%arg0: i32, %arg1: i32) -> (i32, i32, i32) {
    %c0_i32 = arith.constant 0 : i32
    %c0_i32_0 = arith.constant 0 : i32
    %c0_i32_1 = arith.constant 0 : i32
    return %c0_i32, %c0_i32_0, %arg0 : i32, i32, i32
  }
  func.func @transform_5(%arg0: i32, %arg1: i32) -> (i32, i32) {
    %c0_i32 = arith.constant 0 : i32
    %c0_i32_0 = arith.constant 0 : i32
    return %c0_i32, %arg0 : i32, i32
  }
  func.func @transform_6(%arg0: i32, %arg1: i32) -> (i32, i32) {
    %c0_i32 = arith.constant 0 : i32
    %c0_i32_0 = arith.constant 0 : i32
    return %c0_i32, %arg0 : i32, i32
  }
}

</mosaic_0001>

<llo_original>
// kernel: tpu_custom_call.1
$region0: #{tpu_custom_call.1}
  #allocation0 [shape = 'u32[]', space=smem, size = 0x4, offset = 0x4, fixed_abs, tag = 'smem constant byte address 0x4 - core index']
  #allocation1 [shape = 'u32[144,128]{1,0:T(1,128)}', space=vmem, size = 0x12000, scoped, tag = 'internal scratch']
  #allocation2 [shape = 'f32[32,8,128]{2,1,0:T(8,128)}', space=vmem, size = 0x20000, scoped, tag = 'scratch operand']
  %s0 = inlined_call_operand.hbm [shape: f32[128,32,128], index: 0, kind: input, shape index: {}]
  %s1 = inlined_call_operand.hbm [shape: f32[8,128], index: 1, kind: input, shape index: {}]
  %s2 = inlined_call_operand.hbm [shape: f32[8,8], index: 2, kind: input, shape index: {}]
  %s3 = inlined_call_operand.hbm [shape: s32[32,1,128], index: 3, kind: input, shape index: {}]
  %s4 = inlined_call_operand.hbm [shape: f32[32,1,128], index: 4, kind: input, shape index: {}]
  %s5 = inlined_call_operand.hbm [shape: f32[1,128], index: 5, kind: input, shape index: {}]
  %s6 = inlined_call_operand.hbm [shape: f32[1,128], index: 6, kind: output, shape index: {}]
  %s7 = sld [smem:[#allocation0]]
  $region99: #{tpu_custom_call.1} parent=0
    _
  %s9 = ssub.s32 1, %s7
  %s10 = scalar_select 0, %s9, %s7
  $region1: #{tpu_custom_call.1} parent=0
    #allocation3 [shape = 'u8[1048576]{0}', space=vmem, size = 0x100000, scoped, tag = 'input window, operand 0']
    #allocation4 [shape = 's32[2]{0}', space=sflag, size = 0x8, scoped, tag = 'scoped memory for tpu_custom_call.1']
    #allocation5 [shape = 's32[2]{0}', space=sflag, size = 0x8, scoped, tag = 'scoped memory for tpu_custom_call.1']
    #allocation6 [shape = 'u8[4096]{0}', space=vmem, size = 0x1000, scoped, tag = 'input window, operand 1, single buffered']
    #allocation7 [shape = 's32[1]{0}', space=sflag, size = 0x4, scoped, tag = 'scoped memory for tpu_custom_call.1']
    #allocation8 [shape = 'u8[4096]{0}', space=vmem, size = 0x1000, scoped, tag = 'input window, operand 2, single buffered']
    #allocation9 [shape = 'u8[16384]{0}', space=vmem, size = 0x4000, scoped, tag = 'input window, operand 3, single buffered']
    #allocation10 [shape = 's32[1]{0}', space=sflag, size = 0x4, scoped, tag = 'scoped memory for tpu_custom_call.1']
    #allocation11 [shape = 'u8[16384]{0}', space=vmem, size = 0x4000, scoped, tag = 'input window, operand 4, single buffered']
    #allocation12 [shape = 'u8[512]{0}', space=vmem, size = 0x400, scoped, tag = 'input window, operand 5, single buffered']
    #allocation13 [shape = 's32[1]{0}', space=sflag, size = 0x4, scoped, tag = 'scoped memory for tpu_custom_call.1']
    #allocation14 [shape = 'u8[512]{0}', space=vmem, size = 0x400, scoped, tag = 'output window, operand 0, single buffered']
    %11 = vsyncpa [#allocation4], 0
    %s12 = scalar_lea.sflag [#allocation4], 1
    %13 = vsyncpa %s12, 0
    %14 = vsyncpa [#allocation7], 0
    %15 = vsyncpa [#allocation10], 0
    %16 = vsyncpa [#allocation13], 0
    %17 = vsyncpa [#allocation5], 0
    loop: start=0, step=1, limit=6
    $region2: #{tpu_custom_call.1} parent=1 // loop_pre_header
      _
    $region3: #{tpu_custom_call.1} parent=1 // loop_header
      %s19 = sphi 0, %s23
      %p20 = scmp.ge.s32.totalorder %s19, 6
      %s26 = sphi 0, %s38
      %s27 = sphi 0, %s34
      %s28 = sphi 0, %s26
      %s29 = sphi 0, %s27
      %s30 = sphi 0, %s28
      %s31 = sphi 0, %s29
      %s43 = sphi 0, %s45
      %s46 = sphi 0, %s43
      %s47 = sphi 0, %s46
      %s63 = sphi 0, %s47
      %s67 = sphi 0, %s67
      %s69 = sphi 0, %s67
      %s70 = sphi 0, %s69
      %s84 = sphi 0, %s70
      %s88 = sphi 0, %s88
      %s90 = sphi 0, %s88
      %s91 = sphi 0, %s90
      %s105 = sphi 0, %s91
      %s111 = sphi 0, %s113
      %s114 = sphi 0, %s111
      %s115 = sphi 0, %s114
      %s131 = sphi 0, %s115
      %s137 = sphi 0, %s139
      %s140 = sphi 0, %s137
      %s141 = sphi 0, %s140
      %s157 = sphi 0, %s141
      %s163 = sphi 0, %s165
      %s166 = sphi 0, %s163
      %s167 = sphi 0, %s166
      %s183 = sphi 0, %s167
      %s189 = sphi 0, %s191
      %s192 = sphi 0, %s189
      %s193 = sphi 0, %s192
      %s209 = sphi 0, %s193
    $region4: #{tpu_custom_call.1} parent=1 // loop_header_branch
      %22 = sbr.rel (%p20) target = $region8
    $region5: #{tpu_custom_call.1} parent=1 // loop_body
      %s24 = ssub.s32 %s19, 1
      %s25 = ssub.s32 %s19, 2
      %s32 = sadd.s32 1, %s27
      %p33 = scmp.ge.s32.totalorder %s32, 4
      %s34 = scalar_select %p33, 0, %s32
      %s35 = sadd.s32 1, %s26
      %s36 = scalar_select %p33, %s35, %s26
      %p37 = scmp.ge.s32.totalorder %s36, 1
      %s38 = scalar_select %p37, 0, %s36
      %s39 = ssub.s32 %s26, %s38
      %s40 = ssub.s32 %s27, %s34
      %s41 = sor.u32 %s39, %s40
      %p42 = scmp.eq.s32.totalorder %s41, 0
      %s44 = sadd.s32 %s43, 1
      %s45 = scalar_select %p42, %s43, %s44
      %p48 = pneg %p42
      %p49 = scmp.eq.s32.totalorder %s19, 3
      %p50 = por %p48, %p49
      %p51 = scmp.ne.s32.totalorder %s43, %s46
      %p52 = scmp.eq.s32.totalorder %s19, 0
      %p53 = por %p51, %p52
      %p54 = scmp.ne.s32.totalorder %s43, %s46
      %p55 = scmp.eq.s32.totalorder %s24, 3
      %p56 = por %p54, %p55
      %p57 = scmp.ne.s32.totalorder %s46, %s47
      %p58 = scmp.eq.s32.totalorder %s24, 0
      %p59 = por %p57, %p58
      %p60 = scmp.ne.s32.totalorder %s46, %s47
      %p61 = scmp.eq.s32.totalorder %s25, 3
      %p62 = por %p60, %p61
      %p64 = scmp.ne.s32.totalorder %s47, %s63
      %p65 = scmp.eq.s32.totalorder %s25, 0
      %p66 = por %p64, %p65
      %s68 = sadd.s32 %s67, 1
      %p71 = scmp.eq.s32.totalorder %s19, 3
      %p72 = scmp.ne.s32.totalorder %s67, %s69
      %p73 = scmp.eq.s32.totalorder %s19, 0
      %p74 = por %p72, %p73
      %p75 = scmp.ne.s32.totalorder %s67, %s69
      %p76 = scmp.eq.s32.totalorder %s24, 3
      %p77 = por %p75, %p76
      %p78 = scmp.ne.s32.totalorder %s69, %s70
      %p79 = scmp.eq.s32.totalorder %s24, 0
      %p80 = por %p78, %p79
      %p81 = scmp.ne.s32.totalorder %s69, %s70
      %p82 = scmp.eq.s32.totalorder %s25, 3
      %p83 = por %p81, %p82
      %p85 = scmp.ne.s32.totalorder %s70, %s84
      %p86 = scmp.eq.s32.totalorder %s25, 0
      %p87 = por %p85, %p86
      %s89 = sadd.s32 %s88, 1
      %p92 = scmp.eq.s32.totalorder %s19, 3
      %p93 = scmp.ne.s32.totalorder %s88, %s90
      %p94 = scmp.eq.s32.totalorder %s19, 0
      %p95 = por %p93, %p94
      %p96 = scmp.ne.s32.totalorder %s88, %s90
      %p97 = scmp.eq.s32.totalorder %s24, 3
      %p98 = por %p96, %p97
      %p99 = scmp.ne.s32.totalorder %s90, %s91
      %p100 = scmp.eq.s32.totalorder %s24, 0
      %p101 = por %p99, %p100
      %p102 = scmp.ne.s32.totalorder %s90, %s91
      %p103 = scmp.eq.s32.totalorder %s25, 3
      %p104 = por %p102, %p103
      %p106 = scmp.ne.s32.totalorder %s91, %s105
      %p107 = scmp.eq.s32.totalorder %s25, 0
      %p108 = por %p106, %p107
      %s109 = ssub.s32 %s26, %s38
      %p110 = scmp.eq.s32.totalorder %s109, 0
      %s112 = sadd.s32 %s111, 1
      %s113 = scalar_select %p110, %s111, %s112
      %p116 = pneg %p110
      %p117 = scmp.eq.s32.totalorder %s19, 3
      %p118 = por %p116, %p117
      %p119 = scmp.ne.s32.totalorder %s111, %s114
      %p120 = scmp.eq.s32.totalorder %s19, 0
      %p121 = por %p119, %p120
      %p122 = scmp.ne.s32.totalorder %s111, %s114
      %p123 = scmp.eq.s32.totalorder %s24, 3
      %p124 = por %p122, %p123
      %p125 = scmp.ne.s32.totalorder %s114, %s115
      %p126 = scmp.eq.s32.totalorder %s24, 0
      %p127 = por %p125, %p126
      %p128 = scmp.ne.s32.totalorder %s114, %s115
      %p129 = scmp.eq.s32.totalorder %s25, 3
      %p130 = por %p128, %p129
      %p132 = scmp.ne.s32.totalorder %s115, %s131
      %p133 = scmp.eq.s32.totalorder %s25, 0
      %p134 = por %p132, %p133
      %s135 = ssub.s32 %s26, %s38
      %p136 = scmp.eq.s32.totalorder %s135, 0
      %s138 = sadd.s32 %s137, 1
      %s139 = scalar_select %p136, %s137, %s138
      %p142 = pneg %p136
      %p143 = scmp.eq.s32.totalorder %s19, 3
      %p144 = por %p142, %p143
      %p145 = scmp.ne.s32.totalorder %s137, %s140
      %p146 = scmp.eq.s32.totalorder %s19, 0
      %p147 = por %p145, %p146
      %p148 = scmp.ne.s32.totalorder %s137, %s140
      %p149 = scmp.eq.s32.totalorder %s24, 3
      %p150 = por %p148, %p149
      %p151 = scmp.ne.s32.totalorder %s140, %s141
      %p152 = scmp.eq.s32.totalorder %s24, 0
      %p153 = por %p151, %p152
      %p154 = scmp.ne.s32.totalorder %s140, %s141
      %p155 = scmp.eq.s32.totalorder %s25, 3
      %p156 = por %p154, %p155
      %p158 = scmp.ne.s32.totalorder %s141, %s157
      %p159 = scmp.eq.s32.totalorder %s25, 0
      %p160 = por %p158, %p159
      %s161 = ssub.s32 %s26, %s38
      %p162 = scmp.eq.s32.totalorder %s161, 0
      %s164 = sadd.s32 %s163, 1
      %s165 = scalar_select %p162, %s163, %s164
      %p168 = pneg %p162
      %p169 = scmp.eq.s32.totalorder %s19, 3
      %p170 = por %p168, %p169
      %p171 = scmp.ne.s32.totalorder %s163, %s166
      %p172 = scmp.eq.s32.totalorder %s19, 0
      %p173 = por %p171, %p172
      %p174 = scmp.ne.s32.totalorder %s163, %s166
      %p175 = scmp.eq.s32.totalorder %s24, 3
      %p176 = por %p174, %p175
      %p177 = scmp.ne.s32.totalorder %s166, %s167
      %p178 = scmp.eq.s32.totalorder %s24, 0
      %p179 = por %p177, %p178
      %p180 = scmp.ne.s32.totalorder %s166, %s167
      %p181 = scmp.eq.s32.totalorder %s25, 3
      %p182 = por %p180, %p181
      %p184 = scmp.ne.s32.totalorder %s167, %s183
      %p185 = scmp.eq.s32.totalorder %s25, 0
      %p186 = por %p184, %p185
      %s187 = ssub.s32 %s26, %s38
      %p188 = scmp.eq.s32.totalorder %s187, 0
      %s190 = sadd.s32 %s189, 1
      %s191 = scalar_select %p188, %s189, %s190
      %p194 = pneg %p188
      %p195 = scmp.eq.s32.totalorder %s19, 3
      %p196 = por %p194, %p195
      %p197 = scmp.ne.s32.totalorder %s189, %s192
      %p198 = scmp.eq.s32.totalorder %s19, 0
      %p199 = por %p197, %p198
      %p200 = scmp.ne.s32.totalorder %s189, %s192
      %p201 = scmp.eq.s32.totalorder %s24, 3
      %p202 = por %p200, %p201
      %p203 = scmp.ne.s32.totalorder %s192, %s193
      %p204 = scmp.eq.s32.totalorder %s24, 0
      %p205 = por %p203, %p204
      %p206 = scmp.ne.s32.totalorder %s192, %s193
      %p207 = scmp.eq.s32.totalorder %s25, 3
      %p208 = por %p206, %p207
      %p210 = scmp.ne.s32.totalorder %s193, %s209
      %p211 = scmp.eq.s32.totalorder %s25, 0
      %p212 = por %p210, %p211
      %p213 = scmp.le.s32.totalorder 1, %s19
      %p214 = scmp.lt.s32.totalorder %s19, 5
      %p215 = pnand %p213, %p214
      %p216 = pneg %p215
      // Predicated region
      $region9: #{tpu_custom_call.1} parent=5 // pred_check
        _
      $region10: #{tpu_custom_call.1} parent=5 // pred_check_branch
        %218 = sbr.rel (%p215) target = $region12
      $region11: #{tpu_custom_call.1} parent=5 // pred_region
        %s219 = ssub.s32 %s19, 1
        // Predicated region
        $region13: #{tpu_custom_call.1} parent=11 // pred_check
          %p220 = pneg %p80
        $region14: #{tpu_custom_call.1} parent=11 // pred_check_branch
          %222 = sbr.rel (%p220) target = $region16
        $region15: #{tpu_custom_call.1} parent=11 // pred_region
          %s224 = ssub.s32 128, 128
          %225 = vsyncadd [#allocation7], %s224
          %s227 = sshll.u32 [#allocation6], 4
          %s228 = int_to_ptr.vmem [resolvable:$true] %s227
          %230 = dma.hbm_to_vmem [thread:$0]  %s1, 128, %s228, [#allocation7]
        $region16: #{tpu_custom_call.1} parent=11 // pred_fallthru
          _
        // Predicated region
        $region17: #{tpu_custom_call.1} parent=11 // pred_check
          %p231 = pneg %p101
        $region18: #{tpu_custom_call.1} parent=11 // pred_check_branch
          %233 = sbr.rel (%p231) target = $region20
        $region19: #{tpu_custom_call.1} parent=11 // pred_region
          %s235 = ssub.s32 128, 128
          %236 = vsyncadd [#allocation7], %s235
          %s238 = sshll.u32 [#allocation8], 4
          %s239 = int_to_ptr.vmem [resolvable:$true] %s238
          %241 = dma.hbm_to_vmem [thread:$0]  %s2, 128, %s239, [#allocation7]
        $region20: #{tpu_custom_call.1} parent=11 // pred_fallthru
          _
        // Predicated region
        $region21: #{tpu_custom_call.1} parent=11 // pred_check
          %p242 = pneg %p127
        $region22: #{tpu_custom_call.1} parent=11 // pred_check_branch
          %244 = sbr.rel (%p242) target = $region24
        $region23: #{tpu_custom_call.1} parent=11 // pred_region
          %s246 = ssub.s32 512, 512
          %247 = vsyncadd [#allocation10], %s246
          %s248 = smul.addr %s28, 16
          %s249 = scalar_lea.hbm %s3, %s248
          %s250 = sshll.u32 [#allocation9], 4
          %s251 = int_to_ptr.vmem [resolvable:$true] %s250
          %256 = dma.hbm_to_vmem [thread:$0]  %s249, 512, %s251, [#allocation10], 16, 16, 1
        $region24: #{tpu_custom_call.1} parent=11 // pred_fallthru
          _
        // Predicated region
        $region25: #{tpu_custom_call.1} parent=11 // pred_check
          %p257 = pneg %p153
        $region26: #{tpu_custom_call.1} parent=11 // pred_check_branch
          %259 = sbr.rel (%p257) target = $region28
        $region27: #{tpu_custom_call.1} parent=11 // pred_region
          %s261 = ssub.s32 512, 512
          %262 = vsyncadd [#allocation10], %s261
          %s263 = smul.addr %s28, 16
          %s264 = scalar_lea.hbm %s4, %s263
          %s265 = sshll.u32 [#allocation11], 4
          %s266 = int_to_ptr.vmem [resolvable:$true] %s265
          %271 = dma.hbm_to_vmem [thread:$0]  %s264, 512, %s266, [#allocation10], 16, 16, 1
        $region28: #{tpu_custom_call.1} parent=11 // pred_fallthru
          _
        // Predicated region
        $region29: #{tpu_custom_call.1} parent=11 // pred_check
          %p272 = pneg %p179
        $region30: #{tpu_custom_call.1} parent=11 // pred_check_branch
          %274 = sbr.rel (%p272) target = $region32
        $region31: #{tpu_custom_call.1} parent=11 // pred_region
          %s276 = ssub.s32 16, 16
          %277 = vsyncadd [#allocation13], %s276
          %s278 = smul.addr %s28, 16
          %s279 = scalar_lea.hbm %s5, %s278
          %s281 = sshll.u32 [#allocation12], 4
          %s282 = int_to_ptr.vmem [resolvable:$true] %s281
          %284 = dma.hbm_to_vmem [thread:$0]  %s279, 16, %s282, [#allocation13]
        $region32: #{tpu_custom_call.1} parent=11 // pred_fallthru
          _
      $region12: #{tpu_custom_call.1} parent=5 // pred_fallthru
        _
      %p285 = scmp.lt.s32.totalorder %s19, 4
      // Predicated region
      $region33: #{tpu_custom_call.1} parent=5 // pred_check
        %p286 = pneg %p285
      $region34: #{tpu_custom_call.1} parent=5 // pred_check_branch
        %288 = sbr.rel (%p286) target = $region36
      $region35: #{tpu_custom_call.1} parent=5 // pred_region
        // Predicated region
        $region37: #{tpu_custom_call.1} parent=35 // pred_check
          %p289 = pneg %p53
        $region38: #{tpu_custom_call.1} parent=35 // pred_check_branch
          %291 = sbr.rel (%p289) target = $region40
        $region39: #{tpu_custom_call.1} parent=35 // pred_region
          %s292 = sand.u32 %s43, 1
          %s293 = scalar_lea.sflag [#allocation4], %s292
          %s294 = sand.u32 %s43, 1
          %s295 = smul.addr %s294, 1024
          %s296 = scalar_lea.vmem [#allocation3], %s295
          %s297 = smul.u32 128, %s26
          %s299 = ssub.s32 16384, 16384
          %300 = vsyncadd %s293, %s299
          %s301 = smul.addr %s297, 4
          %s302 = sadd.s32 %s27, %s301
          %s303 = smul.addr %s302, 128
          %s304 = scalar_lea.hbm %s0, %s303
          %s305 = sshll.u32 %s296, 4
          %s306 = int_to_ptr.vmem [resolvable:$true] %s305
          %311 = dma.hbm_to_vmem [thread:$0]  %s304, 16384, %s306, %s293, 512, 128, 8
        $region40: #{tpu_custom_call.1} parent=35 // pred_fallthru
          _
      $region36: #{tpu_custom_call.1} parent=5 // pred_fallthru
        _
      %p312 = scmp.le.s32.totalorder 1, %s19
      %p313 = scmp.lt.s32.totalorder %s19, 5
      %p314 = pnand %p312, %p313
      %p315 = pneg %p314
      // Predicated region
      $region41: #{tpu_custom_call.1} parent=5 // pred_check
        _
      $region42: #{tpu_custom_call.1} parent=5 // pred_check_branch
        %317 = sbr.rel (%p314) target = $region44
      $region43: #{tpu_custom_call.1} parent=5 // pred_region
        %s318 = ssub.s32 %s19, 1
        %s319 = sand.u32 %s46, 1
        %s320 = scalar_lea.sflag [#allocation4], %s319
        %s321 = sand.u32 %s46, 1
        %s322 = smul.addr %s321, 1024
        %s323 = scalar_lea.vmem [#allocation3], %s322
        // Predicated region
        $region45: #{tpu_custom_call.1} parent=43 // pred_check
          %p324 = pneg %p59
        $region46: #{tpu_custom_call.1} parent=43 // pred_check_branch
          %326 = sbr.rel (%p324) target = $region48
        $region47: #{tpu_custom_call.1} parent=43 // pred_region
          %327 = dma.done %s320, 16384
        $region48: #{tpu_custom_call.1} parent=43 // pred_fallthru
          _
        // Predicated region
        $region49: #{tpu_custom_call.1} parent=43 // pred_check
          %p328 = pneg %p80
        $region50: #{tpu_custom_call.1} parent=43 // pred_check_branch
          %330 = sbr.rel (%p328) target = $region52
        $region51: #{tpu_custom_call.1} parent=43 // pred_region
          %331 = dma.done [#allocation7], 128
        $region52: #{tpu_custom_call.1} parent=43 // pred_fallthru
          _
        // Predicated region
        $region53: #{tpu_custom_call.1} parent=43 // pred_check
          %p332 = pneg %p101
        $region54: #{tpu_custom_call.1} parent=43 // pred_check_branch
          %334 = sbr.rel (%p332) target = $region56
        $region55: #{tpu_custom_call.1} parent=43 // pred_region
          %335 = dma.done [#allocation7], 128
        $region56: #{tpu_custom_call.1} parent=43 // pred_fallthru
          _
        // Predicated region
        $region57: #{tpu_custom_call.1} parent=43 // pred_check
          %p336 = pneg %p127
        $region58: #{tpu_custom_call.1} parent=43 // pred_check_branch
          %338 = sbr.rel (%p336) target = $region60
        $region59: #{tpu_custom_call.1} parent=43 // pred_region
          %339 = dma.done [#allocation10], 512
        $region60: #{tpu_custom_call.1} parent=43 // pred_fallthru
          _
        // Predicated region
        $region61: #{tpu_custom_call.1} parent=43 // pred_check
          %p340 = pneg %p153
        $region62: #{tpu_custom_call.1} parent=43 // pred_check_branch
          %342 = sbr.rel (%p340) target = $region64
        $region63: #{tpu_custom_call.1} parent=43 // pred_region
          %343 = dma.done [#allocation10], 512
        $region64: #{tpu_custom_call.1} parent=43 // pred_fallthru
          _
        // Predicated region
        $region65: #{tpu_custom_call.1} parent=43 // pred_check
          %p344 = pneg %p179
        $region66: #{tpu_custom_call.1} parent=43 // pred_check_branch
          %346 = sbr.rel (%p344) target = $region68
        $region67: #{tpu_custom_call.1} parent=43 // pred_region
          %347 = dma.done [#allocation13], 16
        $region68: #{tpu_custom_call.1} parent=43 // pred_fallthru
          _
        %s348 = sand.u32 %s46, 1
        %s349 = scalar_lea.sflag [#allocation4], %s348
        %s350 = sand.u32 %s46, 1
        %s351 = smul.addr %s350, 1024
        %s352 = scalar_lea.vmem [#allocation3], %s351
        %p353 = pneg %p59
        %p354 = pneg %p56
        %p355 = pneg %p80
        %p356 = pneg %p77
        %p357 = pneg %p101
        %p358 = pneg %p98
        %p359 = pneg %p127
        %p360 = pneg %p124
        %p361 = pneg %p153
        %p362 = pneg %p150
        %p363 = pneg %p179
        %p364 = pneg %p176
        %p365 = pneg %p205
        %p366 = pneg %p202
        %s367 = smul.u32 128, %s28
        %v368 = vld [vmem:[#allocation6] sm:$0xff]
        %s369 = smul.u32 %s29, 8
        %v370 = vld [vmem:[%s323] sm:$0x1]
        %v371 = vld [vmem:[%s323 + $0x8] sm:$0x1]
        %v372 = vld [vmem:[%s323 + $0x10] sm:$0x1]
        %v373 = vld [vmem:[%s323 + $0x18] sm:$0x1]
        %v374 = vld [vmem:[%s323 + $0x20] sm:$0x1]
        %v375 = vld [vmem:[%s323 + $0x28] sm:$0x1]
        %v376 = vld [vmem:[%s323 + $0x30] sm:$0x1]
        %v377 = vld [vmem:[%s323 + $0x38] sm:$0x1]
        %v378 = vld [vmem:[%s323 + $0x40] sm:$0x1]
        %v379 = vld [vmem:[%s323 + $0x48] sm:$0x1]
        %v380 = vld [vmem:[%s323 + $0x50] sm:$0x1]
        %v381 = vld [vmem:[%s323 + $0x58] sm:$0x1]
        %v382 = vld [vmem:[%s323 + $0x60] sm:$0x1]
        %v383 = vld [vmem:[%s323 + $0x68] sm:$0x1]
        %v384 = vld [vmem:[%s323 + $0x70] sm:$0x1]
        %v385 = vld [vmem:[%s323 + $0x78] sm:$0x1]
        %v386 = vld [vmem:[%s323 + $0x80] sm:$0x1]
        %v387 = vld [vmem:[%s323 + $0x88] sm:$0x1]
        %v388 = vld [vmem:[%s323 + $0x90] sm:$0x1]
        %v389 = vld [vmem:[%s323 + $0x98] sm:$0x1]
        %v390 = vld [vmem:[%s323 + $0xa0] sm:$0x1]
        %v391 = vld [vmem:[%s323 + $0xa8] sm:$0x1]
        %v392 = vld [vmem:[%s323 + $0xb0] sm:$0x1]
        %v393 = vld [vmem:[%s323 + $0xb8] sm:$0x1]
        %v394 = vld [vmem:[%s323 + $0xc0] sm:$0x1]
        %v395 = vld [vmem:[%s323 + $0xc8] sm:$0x1]
        %v396 = vld [vmem:[%s323 + $0xd0] sm:$0x1]
        %v397 = vld [vmem:[%s323 + $0xd8] sm:$0x1]
        %v398 = vld [vmem:[%s323 + $0xe0] sm:$0x1]
        %v399 = vld [vmem:[%s323 + $0xe8] sm:$0x1]
        %v400 = vld [vmem:[%s323 + $0xf0] sm:$0x1]
        %v401 = vld [vmem:[%s323 + $0xf8] sm:$0x1]
        %v402 = vld [vmem:[%s323 + $0x100] sm:$0x1]
        %v403 = vld [vmem:[%s323 + $0x108] sm:$0x1]
        %v404 = vld [vmem:[%s323 + $0x110] sm:$0x1]
        %v405 = vld [vmem:[%s323 + $0x118] sm:$0x1]
        %v406 = vld [vmem:[%s323 + $0x120] sm:$0x1]
        %v407 = vld [vmem:[%s323 + $0x128] sm:$0x1]
        %v408 = vld [vmem:[%s323 + $0x130] sm:$0x1]
        %v409 = vld [vmem:[%s323 + $0x138] sm:$0x1]
        %v410 = vld [vmem:[%s323 + $0x140] sm:$0x1]
        %v411 = vld [vmem:[%s323 + $0x148] sm:$0x1]
        %v412 = vld [vmem:[%s323 + $0x150] sm:$0x1]
        %v413 = vld [vmem:[%s323 + $0x158] sm:$0x1]
        %v414 = vld [vmem:[%s323 + $0x160] sm:$0x1]
        %v415 = vld [vmem:[%s323 + $0x168] sm:$0x1]
        %v416 = vld [vmem:[%s323 + $0x170] sm:$0x1]
        %v417 = vld [vmem:[%s323 + $0x178] sm:$0x1]
        %v418 = vld [vmem:[%s323 + $0x180] sm:$0x1]
        %v419 = vld [vmem:[%s323 + $0x188] sm:$0x1]
        %v420 = vld [vmem:[%s323 + $0x190] sm:$0x1]
        %v421 = vld [vmem:[%s323 + $0x198] sm:$0x1]
        %v422 = vld [vmem:[%s323 + $0x1a0] sm:$0x1]
        %v423 = vld [vmem:[%s323 + $0x1a8] sm:$0x1]
        %v424 = vld [vmem:[%s323 + $0x1b0] sm:$0x1]
        %v425 = vld [vmem:[%s323 + $0x1b8] sm:$0x1]
        %v426 = vld [vmem:[%s323 + $0x1c0] sm:$0x1]
        %v427 = vld [vmem:[%s323 + $0x1c8] sm:$0x1]
        %v428 = vld [vmem:[%s323 + $0x1d0] sm:$0x1]
        %v429 = vld [vmem:[%s323 + $0x1d8] sm:$0x1]
        %v430 = vld [vmem:[%s323 + $0x1e0] sm:$0x1]
        %v431 = vld [vmem:[%s323 + $0x1e8] sm:$0x1]
        %v432 = vld [vmem:[%s323 + $0x1f0] sm:$0x1]
        %v433 = vld [vmem:[%s323 + $0x1f8] sm:$0x1]
        %v434 = vld [vmem:[%s323 + $0x200] sm:$0x1]
        %v435 = vld [vmem:[%s323 + $0x208] sm:$0x1]
        %v436 = vld [vmem:[%s323 + $0x210] sm:$0x1]
        %v437 = vld [vmem:[%s323 + $0x218] sm:$0x1]
        %v438 = vld [vmem:[%s323 + $0x220] sm:$0x1]
        %v439 = vld [vmem:[%s323 + $0x228] sm:$0x1]
        %v440 = vld [vmem:[%s323 + $0x230] sm:$0x1]
        %v441 = vld [vmem:[%s323 + $0x238] sm:$0x1]
        %v442 = vld [vmem:[%s323 + $0x240] sm:$0x1]
        %v443 = vld [vmem:[%s323 + $0x248] sm:$0x1]
        %v444 = vld [vmem:[%s323 + $0x250] sm:$0x1]
        %v445 = vld [vmem:[%s323 + $0x258] sm:$0x1]
        %v446 = vld [vmem:[%s323 + $0x260] sm:$0x1]
        %v447 = vld [vmem:[%s323 + $0x268] sm:$0x1]
        %v448 = vld [vmem:[%s323 + $0x270] sm:$0x1]
        %v449 = vld [vmem:[%s323 + $0x278] sm:$0x1]
        %v450 = vld [vmem:[%s323 + $0x280] sm:$0x1]
        %v451 = vld [vmem:[%s323 + $0x288] sm:$0x1]
        %v452 = vld [vmem:[%s323 + $0x290] sm:$0x1]
        %v453 = vld [vmem:[%s323 + $0x298] sm:$0x1]
        %v454 = vld [vmem:[%s323 + $0x2a0] sm:$0x1]
        %v455 = vld [vmem:[%s323 + $0x2a8] sm:$0x1]
        %v456 = vld [vmem:[%s323 + $0x2b0] sm:$0x1]
        %v457 = vld [vmem:[%s323 + $0x2b8] sm:$0x1]
        %v458 = vld [vmem:[%s323 + $0x2c0] sm:$0x1]
        %v459 = vld [vmem:[%s323 + $0x2c8] sm:$0x1]
        %v460 = vld [vmem:[%s323 + $0x2d0] sm:$0x1]
        %v461 = vld [vmem:[%s323 + $0x2d8] sm:$0x1]
        %v462 = vld [vmem:[%s323 + $0x2e0] sm:$0x1]
        %v463 = vld [vmem:[%s323 + $0x2e8] sm:$0x1]
        %v464 = vld [vmem:[%s323 + $0x2f0] sm:$0x1]
        %v465 = vld [vmem:[%s323 + $0x2f8] sm:$0x1]
        %v466 = vld [vmem:[%s323 + $0x300] sm:$0x1]
        %v467 = vld [vmem:[%s323 + $0x308] sm:$0x1]
        %v468 = vld [vmem:[%s323 + $0x310] sm:$0x1]
        %v469 = vld [vmem:[%s323 + $0x318] sm:$0x1]
        %v470 = vld [vmem:[%s323 + $0x320] sm:$0x1]
        %v471 = vld [vmem:[%s323 + $0x328] sm:$0x1]
        %v472 = vld [vmem:[%s323 + $0x330] sm:$0x1]
        %v473 = vld [vmem:[%s323 + $0x338] sm:$0x1]
        %v474 = vld [vmem:[%s323 + $0x340] sm:$0x1]
        %v475 = vld [vmem:[%s323 + $0x348] sm:$0x1]
        %v476 = vld [vmem:[%s323 + $0x350] sm:$0x1]
        %v477 = vld [vmem:[%s323 + $0x358] sm:$0x1]
        %v478 = vld [vmem:[%s323 + $0x360] sm:$0x1]
        %v479 = vld [vmem:[%s323 + $0x368] sm:$0x1]
        %v480 = vld [vmem:[%s323 + $0x370] sm:$0x1]
        %v481 = vld [vmem:[%s323 + $0x378] sm:$0x1]
        %v482 = vld [vmem:[%s323 + $0x380] sm:$0x1]
        %v483 = vld [vmem:[%s323 + $0x388] sm:$0x1]
        %v484 = vld [vmem:[%s323 + $0x390] sm:$0x1]
        %v485 = vld [vmem:[%s323 + $0x398] sm:$0x1]
        %v486 = vld [vmem:[%s323 + $0x3a0] sm:$0x1]
        %v487 = vld [vmem:[%s323 + $0x3a8] sm:$0x1]
        %v488 = vld [vmem:[%s323 + $0x3b0] sm:$0x1]
        %v489 = vld [vmem:[%s323 + $0x3b8] sm:$0x1]
        %v490 = vld [vmem:[%s323 + $0x3c0] sm:$0x1]
        %v491 = vld [vmem:[%s323 + $0x3c8] sm:$0x1]
        %v492 = vld [vmem:[%s323 + $0x3d0] sm:$0x1]
        %v493 = vld [vmem:[%s323 + $0x3d8] sm:$0x1]
        %v494 = vld [vmem:[%s323 + $0x3e0] sm:$0x1]
        %v495 = vld [vmem:[%s323 + $0x3e8] sm:$0x1]
        %v496 = vld [vmem:[%s323 + $0x3f0] sm:$0x1]
        %v497 = vld [vmem:[%s323 + $0x3f8] sm:$0x1]
        %v626 = vrot.slane %v371, 7
        %vm627 = vcmask 1041409
        %v628 = vsel %vm627, %v626, %v370
        %v629 = vrot.slane %v372, 6
        %vm630 = vcmask 1042434
        %v631 = vsel %vm630, %v629, %v628
        %v632 = vrot.slane %v373, 5
        %vm633 = vcmask 1043459
        %v634 = vsel %vm633, %v632, %v631
        %v635 = vrot.slane %v374, 4
        %vm636 = vcmask 1044484
        %v637 = vsel %vm636, %v635, %v634
        %v638 = vrot.slane %v375, 3
        %vm639 = vcmask 1045509
        %v640 = vsel %vm639, %v638, %v637
        %v641 = vrot.slane %v376, 2
        %vm642 = vcmask 1046534
        %v643 = vsel %vm642, %v641, %v640
        %v644 = vrot.slane %v377, 1
        %vm645 = vcmask 1047559
        %v646 = vsel %vm645, %v644, %v643
        %v647 = vrot.slane %v379, 7
        %v648 = vsel %vm627, %v647, %v378
        %v649 = vrot.slane %v380, 6
        %v650 = vsel %vm630, %v649, %v648
        %v651 = vrot.slane %v381, 5
        %v652 = vsel %vm633, %v651, %v650
        %v653 = vrot.slane %v382, 4
        %v654 = vsel %vm636, %v653, %v652
        %v655 = vrot.slane %v383, 3
        %v656 = vsel %vm639, %v655, %v654
        %v657 = vrot.slane %v384, 2
        %v658 = vsel %vm642, %v657, %v656
        %v659 = vrot.slane %v385, 1
        %v660 = vsel %vm645, %v659, %v658
        %v661 = vrot.slane %v387, 7
        %v662 = vsel %vm627, %v661, %v386
        %v663 = vrot.slane %v388, 6
        %v664 = vsel %vm630, %v663, %v662
        %v665 = vrot.slane %v389, 5
        %v666 = vsel %vm633, %v665, %v664
        %v667 = vrot.slane %v390, 4
        %v668 = vsel %vm636, %v667, %v666
        %v669 = vrot.slane %v391, 3
        %v670 = vsel %vm639, %v669, %v668
        %v671 = vrot.slane %v392, 2
        %v672 = vsel %vm642, %v671, %v670
        %v673 = vrot.slane %v393, 1
        %v674 = vsel %vm645, %v673, %v672
        %v675 = vrot.slane %v395, 7
        %v676 = vsel %vm627, %v675, %v394
        %v677 = vrot.slane %v396, 6
        %v678 = vsel %vm630, %v677, %v676
        %v679 = vrot.slane %v397, 5
        %v680 = vsel %vm633, %v679, %v678
        %v681 = vrot.slane %v398, 4
        %v682 = vsel %vm636, %v681, %v680
        %v683 = vrot.slane %v399, 3
        %v684 = vsel %vm639, %v683, %v682
        %v685 = vrot.slane %v400, 2
        %v686 = vsel %vm642, %v685, %v684
        %v687 = vrot.slane %v401, 1
        %v688 = vsel %vm645, %v687, %v686
        %v689 = vrot.slane %v403, 7
        %v690 = vsel %vm627, %v689, %v402
        %v691 = vrot.slane %v404, 6
        %v692 = vsel %vm630, %v691, %v690
        %v693 = vrot.slane %v405, 5
        %v694 = vsel %vm633, %v693, %v692
        %v695 = vrot.slane %v406, 4
        %v696 = vsel %vm636, %v695, %v694
        %v697 = vrot.slane %v407, 3
        %v698 = vsel %vm639, %v697, %v696
        %v699 = vrot.slane %v408, 2
        %v700 = vsel %vm642, %v699, %v698
        %v701 = vrot.slane %v409, 1
        %v702 = vsel %vm645, %v701, %v700
        %v703 = vrot.slane %v411, 7
        %v704 = vsel %vm627, %v703, %v410
        %v705 = vrot.slane %v412, 6
        %v706 = vsel %vm630, %v705, %v704
        %v707 = vrot.slane %v413, 5
        %v708 = vsel %vm633, %v707, %v706
        %v709 = vrot.slane %v414, 4
        %v710 = vsel %vm636, %v709, %v708
        %v711 = vrot.slane %v415, 3
        %v712 = vsel %vm639, %v711, %v710
        %v713 = vrot.slane %v416, 2
        %v714 = vsel %vm642, %v713, %v712
        %v715 = vrot.slane %v417, 1
        %v716 = vsel %vm645, %v715, %v714
        %v717 = vrot.slane %v419, 7
        %v718 = vsel %vm627, %v717, %v418
        %v719 = vrot.slane %v420, 6
        %v720 = vsel %vm630, %v719, %v718
        %v721 = vrot.slane %v421, 5
        %v722 = vsel %vm633, %v721, %v720
        %v723 = vrot.slane %v422, 4
        %v724 = vsel %vm636, %v723, %v722
        %v725 = vrot.slane %v423, 3
        %v726 = vsel %vm639, %v725, %v724
        %v727 = vrot.slane %v424, 2
        %v728 = vsel %vm642, %v727, %v726
        %v729 = vrot.slane %v425, 1
        %v730 = vsel %vm645, %v729, %v728
        %v731 = vrot.slane %v427, 7
        %v732 = vsel %vm627, %v731, %v426
        %v733 = vrot.slane %v428, 6
        %v734 = vsel %vm630, %v733, %v732
        %v735 = vrot.slane %v429, 5
        %v736 = vsel %vm633, %v735, %v734
        %v737 = vrot.slane %v430, 4
        %v738 = vsel %vm636, %v737, %v736
        %v739 = vrot.slane %v431, 3
        %v740 = vsel %vm639, %v739, %v738
        %v741 = vrot.slane %v432, 2
        %v742 = vsel %vm642, %v741, %v740
        %v743 = vrot.slane %v433, 1
        %v744 = vsel %vm645, %v743, %v742
        %v745 = vrot.slane %v435, 7
        %v746 = vsel %vm627, %v745, %v434
        %v747 = vrot.slane %v436, 6
        %v748 = vsel %vm630, %v747, %v746
        %v749 = vrot.slane %v437, 5
        %v750 = vsel %vm633, %v749, %v748
        %v751 = vrot.slane %v438, 4
        %v752 = vsel %vm636, %v751, %v750
        %v753 = vrot.slane %v439, 3
        %v754 = vsel %vm639, %v753, %v752
        %v755 = vrot.slane %v440, 2
        %v756 = vsel %vm642, %v755, %v754
        %v757 = vrot.slane %v441, 1
        %v758 = vsel %vm645, %v757, %v756
        %v759 = vrot.slane %v443, 7
        %v760 = vsel %vm627, %v759, %v442
        %v761 = vrot.slane %v444, 6
        %v762 = vsel %vm630, %v761, %v760
        %v763 = vrot.slane %v445, 5
        %v764 = vsel %vm633, %v763, %v762
        %v765 = vrot.slane %v446, 4
        %v766 = vsel %vm636, %v765, %v764
        %v767 = vrot.slane %v447, 3
        %v768 = vsel %vm639, %v767, %v766
        %v769 = vrot.slane %v448, 2
        %v770 = vsel %vm642, %v769, %v768
        %v771 = vrot.slane %v449, 1
        %v772 = vsel %vm645, %v771, %v770
        %v773 = vrot.slane %v451, 7
        %v774 = vsel %vm627, %v773, %v450
        %v775 = vrot.slane %v452, 6
        %v776 = vsel %vm630, %v775, %v774
        %v777 = vrot.slane %v453, 5
        %v778 = vsel %vm633, %v777, %v776
        %v779 = vrot.slane %v454, 4
        %v780 = vsel %vm636, %v779, %v778
        %v781 = vrot.slane %v455, 3
        %v782 = vsel %vm639, %v781, %v780
        %v783 = vrot.slane %v456, 2
        %v784 = vsel %vm642, %v783, %v782
        %v785 = vrot.slane %v457, 1
        %v786 = vsel %vm645, %v785, %v784
        %v787 = vrot.slane %v459, 7
        %v788 = vsel %vm627, %v787, %v458
        %v789 = vrot.slane %v460, 6
        %v790 = vsel %vm630, %v789, %v788
        %v791 = vrot.slane %v461, 5
        %v792 = vsel %vm633, %v791, %v790
        %v793 = vrot.slane %v462, 4
        %v794 = vsel %vm636, %v793, %v792
        %v795 = vrot.slane %v463, 3
        %v796 = vsel %vm639, %v795, %v794
        %v797 = vrot.slane %v464, 2
        %v798 = vsel %vm642, %v797, %v796
        %v799 = vrot.slane %v465, 1
        %v800 = vsel %vm645, %v799, %v798
        %v801 = vrot.slane %v467, 7
        %v802 = vsel %vm627, %v801, %v466
        %v803 = vrot.slane %v468, 6
        %v804 = vsel %vm630, %v803, %v802
        %v805 = vrot.slane %v469, 5
        %v806 = vsel %vm633, %v805, %v804
        %v807 = vrot.slane %v470, 4
        %v808 = vsel %vm636, %v807, %v806
        %v809 = vrot.slane %v471, 3
        %v810 = vsel %vm639, %v809, %v808
        %v811 = vrot.slane %v472, 2
        %v812 = vsel %vm642, %v811, %v810
        %v813 = vrot.slane %v473, 1
        %v814 = vsel %vm645, %v813, %v812
        %v815 = vrot.slane %v475, 7
        %v816 = vsel %vm627, %v815, %v474
        %v817 = vrot.slane %v476, 6
        %v818 = vsel %vm630, %v817, %v816
        %v819 = vrot.slane %v477, 5
        %v820 = vsel %vm633, %v819, %v818
        %v821 = vrot.slane %v478, 4
        %v822 = vsel %vm636, %v821, %v820
        %v823 = vrot.slane %v479, 3
        %v824 = vsel %vm639, %v823, %v822
        %v825 = vrot.slane %v480, 2
        %v826 = vsel %vm642, %v825, %v824
        %v827 = vrot.slane %v481, 1
        %v828 = vsel %vm645, %v827, %v826
        %v829 = vrot.slane %v483, 7
        %v830 = vsel %vm627, %v829, %v482
        %v831 = vrot.slane %v484, 6
        %v832 = vsel %vm630, %v831, %v830
        %v833 = vrot.slane %v485, 5
        %v834 = vsel %vm633, %v833, %v832
        %v835 = vrot.slane %v486, 4
        %v836 = vsel %vm636, %v835, %v834
        %v837 = vrot.slane %v487, 3
        %v838 = vsel %vm639, %v837, %v836
        %v839 = vrot.slane %v488, 2
        %v840 = vsel %vm642, %v839, %v838
        %v841 = vrot.slane %v489, 1
        %v842 = vsel %vm645, %v841, %v840
        %v843 = vrot.slane %v491, 7
        %v844 = vsel %vm627, %v843, %v490
        %v845 = vrot.slane %v492, 6
        %v846 = vsel %vm630, %v845, %v844
        %v847 = vrot.slane %v493, 5
        %v848 = vsel %vm633, %v847, %v846
        %v849 = vrot.slane %v494, 4
        %v850 = vsel %vm636, %v849, %v848
        %v851 = vrot.slane %v495, 3
        %v852 = vsel %vm639, %v851, %v850
        %v853 = vrot.slane %v496, 2
        %v854 = vsel %vm642, %v853, %v852
        %v855 = vrot.slane %v497, 1
        %v856 = vsel %vm645, %v855, %v854
        %873 = vmatprep.subr.mxu0 0.0
        %874 = vmatpush1.xpose.msra.mxu0 %v856
        %875 = vmatprep.subr.mxu0 0.0
        %876 = vmatpush1.xpose.msra.mxu0 %v842
        %877 = vmatprep.subr.mxu0 0.0
        %878 = vmatpush1.xpose.msra.mxu0 %v828
        %879 = vmatprep.subr.mxu0 0.0
        %880 = vmatpush1.xpose.msra.mxu0 %v814
        %881 = vmatprep.subr.mxu0 0.0
        %882 = vmatpush1.xpose.msra.mxu0 %v800
        %883 = vmatprep.subr.mxu0 0.0
        %884 = vmatpush1.xpose.msra.mxu0 %v786
        %885 = vmatprep.subr.mxu0 0.0
        %886 = vmatpush1.xpose.msra.mxu0 %v772
        %887 = vmatprep.subr.mxu0 0.0
        %888 = vmatpush1.xpose.msra.mxu0 %v758
        %889 = vmatprep.subr.mxu0 0.0
        %890 = vmatpush1.xpose.msra.mxu0 %v744
        %891 = vmatprep.subr.mxu0 0.0
        %892 = vmatpush1.xpose.msra.mxu0 %v730
        %893 = vmatprep.subr.mxu0 0.0
        %894 = vmatpush1.xpose.msra.mxu0 %v716
        %895 = vmatprep.subr.mxu0 0.0
        %896 = vmatpush1.xpose.msra.mxu0 %v702
        %897 = vmatprep.subr.mxu0 0.0
        %898 = vmatpush1.xpose.msra.mxu0 %v688
        %899 = vmatprep.subr.mxu0 0.0
        %900 = vmatpush1.xpose.msra.mxu0 %v674
        %901 = vmatprep.subr.mxu0 0.0
        %902 = vmatpush1.xpose.msra.mxu0 %v660
        %903 = vmatprep.subr.mxu0 0.0
        %904 = vmatpush1.xpose.msra.mxu0 %v646
        %905 = vmatprep.subr.mxu0 0.0
        %906 = vmatpush2.xpose.msra.mxu0 0.0
        %907 = vmatprep.subr.mxu0 0.0
        %908 = vmatpush2.xpose.msra.mxu0 0.0
        %909 = vmatprep.subr.mxu0 0.0
        %910 = vmatpush2.xpose.msra.mxu0 0.0
        %911 = vmatprep.subr.mxu0 0.0
        %912 = vmatpush2.xpose.msra.mxu0 0.0
        %913 = vmatprep.subr.mxu0 0.0
        %914 = vmatpush2.xpose.msra.mxu0 0.0
        %915 = vmatprep.subr.mxu0 0.0
        %916 = vmatpush2.xpose.msra.mxu0 0.0
        %917 = vmatprep.subr.mxu0 0.0
        %918 = vmatpush2.xpose.msra.mxu0 0.0
        %919 = vmatprep.subr.mxu0 0.0
        %920 = vmatpush2.xpose.msra.mxu0 0.0
        %921 = vmatprep.subr.mxu0 0.0
        %922 = vmatpush2.xpose.msra.mxu0 0.0
        %923 = vmatprep.subr.mxu0 0.0
        %924 = vmatpush2.xpose.msra.mxu0 0.0
        %925 = vmatprep.subr.mxu0 0.0
        %926 = vmatpush2.xpose.msra.mxu0 0.0
        %927 = vmatprep.subr.mxu0 0.0
        %928 = vmatpush2.xpose.msra.mxu0 0.0
        %929 = vmatprep.subr.mxu0 0.0
        %930 = vmatpush2.xpose.msra.mxu0 0.0
        %931 = vmatprep.subr.mxu0 0.0
        %932 = vmatpush2.xpose.msra.mxu0 0.0
        %933 = vmatprep.subr.mxu0 0.0
        %934 = vmatpush2.xpose.msra.mxu0 0.0
        %935 = vmatprep.subr.mxu0 0.0
        %936 = vmatpush2.xpose.msra.mxu0 0.0
        %937 = vmatprep.mubr.f32.mxu0 0.0
        %938 = vmatmul.mubr.f32.gmra.mxu0 %v368
        %v939 = vpop.f32.mrf.mxu0
        %v940 = vadd.f32 0.0, %v939
        %v941 = vpop.f32.mrf.mxu0
        %942 = vdwg.mxu0
        %s943 = smul.u32 %s369, 8
        %s944 = scalar_lea.vmem [#allocation2], %s943
        %945 = vst [vmem:[%s944] sm:$0xff] %v940
        %v946 = vld [vmem:[%s323 + $0x1] sm:$0x1]
        %v947 = vld [vmem:[%s323 + $0x9] sm:$0x1]
        %v948 = vld [vmem:[%s323 + $0x11] sm:$0x1]
        %v949 = vld [vmem:[%s323 + $0x19] sm:$0x1]
        %v950 = vld [vmem:[%s323 + $0x21] sm:$0x1]
        %v951 = vld [vmem:[%s323 + $0x29] sm:$0x1]
        %v952 = vld [vmem:[%s323 + $0x31] sm:$0x1]
        %v953 = vld [vmem:[%s323 + $0x39] sm:$0x1]
        %v954 = vld [vmem:[%s323 + $0x41] sm:$0x1]
        %v955 = vld [vmem:[%s323 + $0x49] sm:$0x1]
        %v956 = vld [vmem:[%s323 + $0x51] sm:$0x1]
        %v957 = vld [vmem:[%s323 + $0x59] sm:$0x1]
        %v958 = vld [vmem:[%s323 + $0x61] sm:$0x1]
        %v959 = vld [vmem:[%s323 + $0x69] sm:$0x1]
        %v960 = vld [vmem:[%s323 + $0x71] sm:$0x1]
        %v961 = vld [vmem:[%s323 + $0x79] sm:$0x1]
        %v962 = vld [vmem:[%s323 + $0x81] sm:$0x1]
        %v963 = vld [vmem:[%s323 + $0x89] sm:$0x1]
        %v964 = vld [vmem:[%s323 + $0x91] sm:$0x1]
        %v965 = vld [vmem:[%s323 + $0x99] sm:$0x1]
        %v966 = vld [vmem:[%s323 + $0xa1] sm:$0x1]
        %v967 = vld [vmem:[%s323 + $0xa9] sm:$0x1]
        %v968 = vld [vmem:[%s323 + $0xb1] sm:$0x1]
        %v969 = vld [vmem:[%s323 + $0xb9] sm:$0x1]
        %v970 = vld [vmem:[%s323 + $0xc1] sm:$0x1]
        %v971 = vld [vmem:[%s323 + $0xc9] sm:$0x1]
        %v972 = vld [vmem:[%s323 + $0xd1] sm:$0x1]
        %v973 = vld [vmem:[%s323 + $0xd9] sm:$0x1]
        %v974 = vld [vmem:[%s323 + $0xe1] sm:$0x1]
        %v975 = vld [vmem:[%s323 + $0xe9] sm:$0x1]
        %v976 = vld [vmem:[%s323 + $0xf1] sm:$0x1]
        %v977 = vld [vmem:[%s323 + $0xf9] sm:$0x1]
        %v978 = vld [vmem:[%s323 + $0x101] sm:$0x1]
        %v979 = vld [vmem:[%s323 + $0x109] sm:$0x1]
        %v980 = vld [vmem:[%s323 + $0x111] sm:$0x1]
        %v981 = vld [vmem:[%s323 + $0x119] sm:$0x1]
        %v982 = vld [vmem:[%s323 + $0x121] sm:$0x1]
        %v983 = vld [vmem:[%s323 + $0x129] sm:$0x1]
        %v984 = vld [vmem:[%s323 + $0x131] sm:$0x1]
        %v985 = vld [vmem:[%s323 + $0x139] sm:$0x1]
        %v986 = vld [vmem:[%s323 + $0x141] sm:$0x1]
        %v987 = vld [vmem:[%s323 + $0x149] sm:$0x1]
        %v988 = vld [vmem:[%s323 + $0x151] sm:$0x1]
        %v989 = vld [vmem:[%s323 + $0x159] sm:$0x1]
        %v990 = vld [vmem:[%s323 + $0x161] sm:$0x1]
        %v991 = vld [vmem:[%s323 + $0x169] sm:$0x1]
        %v992 = vld [vmem:[%s323 + $0x171] sm:$0x1]
        %v993 = vld [vmem:[%s323 + $0x179] sm:$0x1]
        %v994 = vld [vmem:[%s323 + $0x181] sm:$0x1]
        %v995 = vld [vmem:[%s323 + $0x189] sm:$0x1]
        %v996 = vld [vmem:[%s323 + $0x191] sm:$0x1]
        %v997 = vld [vmem:[%s323 + $0x199] sm:$0x1]
        %v998 = vld [vmem:[%s323 + $0x1a1] sm:$0x1]
        %v999 = vld [vmem:[%s323 + $0x1a9] sm:$0x1]
        %v1000 = vld [vmem:[%s323 + $0x1b1] sm:$0x1]
        %v1001 = vld [vmem:[%s323 + $0x1b9] sm:$0x1]
        %v1002 = vld [vmem:[%s323 + $0x1c1] sm:$0x1]
        %v1003 = vld [vmem:[%s323 + $0x1c9] sm:$0x1]
        %v1004 = vld [vmem:[%s323 + $0x1d1] sm:$0x1]
        %v1005 = vld [vmem:[%s323 + $0x1d9] sm:$0x1]
        %v1006 = vld [vmem:[%s323 + $0x1e1] sm:$0x1]
        %v1007 = vld [vmem:[%s323 + $0x1e9] sm:$0x1]
        %v1008 = vld [vmem:[%s323 + $0x1f1] sm:$0x1]
        %v1009 = vld [vmem:[%s323 + $0x1f9] sm:$0x1]
        %v1010 = vld [vmem:[%s323 + $0x201] sm:$0x1]
        %v1011 = vld [vmem:[%s323 + $0x209] sm:$0x1]
        %v1012 = vld [vmem:[%s323 + $0x211] sm:$0x1]
        %v1013 = vld [vmem:[%s323 + $0x219] sm:$0x1]
        %v1014 = vld [vmem:[%s323 + $0x221] sm:$0x1]
        %v1015 = vld [vmem:[%s323 + $0x229] sm:$0x1]
        %v1016 = vld [vmem:[%s323 + $0x231] sm:$0x1]
        %v1017 = vld [vmem:[%s323 + $0x239] sm:$0x1]
        %v1018 = vld [vmem:[%s323 + $0x241] sm:$0x1]
        %v1019 = vld [vmem:[%s323 + $0x249] sm:$0x1]
        %v1020 = vld [vmem:[%s323 + $0x251] sm:$0x1]
        %v1021 = vld [vmem:[%s323 + $0x259] sm:$0x1]
        %v1022 = vld [vmem:[%s323 + $0x261] sm:$0x1]
        %v1023 = vld [vmem:[%s323 + $0x269] sm:$0x1]
        %v1024 = vld [vmem:[%s323 + $0x271] sm:$0x1]
        %v1025 = vld [vmem:[%s323 + $0x279] sm:$0x1]
        %v1026 = vld [vmem:[%s323 + $0x281] sm:$0x1]
        %v1027 = vld [vmem:[%s323 + $0x289] sm:$0x1]
        %v1028 = vld [vmem:[%s323 + $0x291] sm:$0x1]
        %v1029 = vld [vmem:[%s323 + $0x299] sm:$0x1]
        %v1030 = vld [vmem:[%s323 + $0x2a1] sm:$0x1]
        %v1031 = vld [vmem:[%s323 + $0x2a9] sm:$0x1]
        %v1032 = vld [vmem:[%s323 + $0x2b1] sm:$0x1]
        %v1033 = vld [vmem:[%s323 + $0x2b9] sm:$0x1]
        %v1034 = vld [vmem:[%s323 + $0x2c1] sm:$0x1]
        %v1035 = vld [vmem:[%s323 + $0x2c9] sm:$0x1]
        %v1036 = vld [vmem:[%s323 + $0x2d1] sm:$0x1]
        %v1037 = vld [vmem:[%s323 + $0x2d9] sm:$0x1]
        %v1038 = vld [vmem:[%s323 + $0x2e1] sm:$0x1]
        %v1039 = vld [vmem:[%s323 + $0x2e9] sm:$0x1]
        %v1040 = vld [vmem:[%s323 + $0x2f1] sm:$0x1]
        %v1041 = vld [vmem:[%s323 + $0x2f9] sm:$0x1]
        %v1042 = vld [vmem:[%s323 + $0x301] sm:$0x1]
        %v1043 = vld [vmem:[%s323 + $0x309] sm:$0x1]
        %v1044 = vld [vmem:[%s323 + $0x311] sm:$0x1]
        %v1045 = vld [vmem:[%s323 + $0x319] sm:$0x1]
        %v1046 = vld [vmem:[%s323 + $0x321] sm:$0x1]
        %v1047 = vld [vmem:[%s323 + $0x329] sm:$0x1]
        %v1048 = vld [vmem:[%s323 + $0x331] sm:$0x1]
        %v1049 = vld [vmem:[%s323 + $0x339] sm:$0x1]
        %v1050 = vld [vmem:[%s323 + $0x341] sm:$0x1]
        %v1051 = vld [vmem:[%s323 + $0x349] sm:$0x1]
        %v1052 = vld [vmem:[%s323 + $0x351] sm:$0x1]
        %v1053 = vld [vmem:[%s323 + $0x359] sm:$0x1]
        %v1054 = vld [vmem:[%s323 + $0x361] sm:$0x1]
        %v1055 = vld [vmem:[%s323 + $0x369] sm:$0x1]
        %v1056 = vld [vmem:[%s323 + $0x371] sm:$0x1]
        %v1057 = vld [vmem:[%s323 + $0x379] sm:$0x1]
        %v1058 = vld [vmem:[%s323 + $0x381] sm:$0x1]
        %v1059 = vld [vmem:[%s323 + $0x389] sm:$0x1]
        %v1060 = vld [vmem:[%s323 + $0x391] sm:$0x1]
        %v1061 = vld [vmem:[%s323 + $0x399] sm:$0x1]
        %v1062 = vld [vmem:[%s323 + $0x3a1] sm:$0x1]
        %v1063 = vld [vmem:[%s323 + $0x3a9] sm:$0x1]
        %v1064 = vld [vmem:[%s323 + $0x3b1] sm:$0x1]
        %v1065 = vld [vmem:[%s323 + $0x3b9] sm:$0x1]
        %v1066 = vld [vmem:[%s323 + $0x3c1] sm:$0x1]
        %v1067 = vld [vmem:[%s323 + $0x3c9] sm:$0x1]
        %v1068 = vld [vmem:[%s323 + $0x3d1] sm:$0x1]
        %v1069 = vld [vmem:[%s323 + $0x3d9] sm:$0x1]
        %v1070 = vld [vmem:[%s323 + $0x3e1] sm:$0x1]
        %v1071 = vld [vmem:[%s323 + $0x3e9] sm:$0x1]
        %v1072 = vld [vmem:[%s323 + $0x3f1] sm:$0x1]
        %v1073 = vld [vmem:[%s323 + $0x3f9] sm:$0x1]
        %v1202 = vrot.slane %v947, 7
        %v1203 = vsel %vm627, %v1202, %v946
        %v1204 = vrot.slane %v948, 6
        %v1205 = vsel %vm630, %v1204, %v1203
        %v1206 = vrot.slane %v949, 5
        %v1207 = vsel %vm633, %v1206, %v1205
        %v1208 = vrot.slane %v950, 4
        %v1209 = vsel %vm636, %v1208, %v1207
        %v1210 = vrot.slane %v951, 3
        %v1211 = vsel %vm639, %v1210, %v1209
        %v1212 = vrot.slane %v952, 2
        %v1213 = vsel %vm642, %v1212, %v1211
        %v1214 = vrot.slane %v953, 1
        %v1215 = vsel %vm645, %v1214, %v1213
        %v1216 = vrot.slane %v955, 7
        %v1217 = vsel %vm627, %v1216, %v954
        %v1218 = vrot.slane %v956, 6
        %v1219 = vsel %vm630, %v1218, %v1217
        %v1220 = vrot.slane %v957, 5
        %v1221 = vsel %vm633, %v1220, %v1219
        %v1222 = vrot.slane %v958, 4
        %v1223 = vsel %vm636, %v1222, %v1221
        %v1224 = vrot.slane %v959, 3
        %v1225 = vsel %vm639, %v1224, %v1223
        %v1226 = vrot.slane %v960, 2
        %v1227 = vsel %vm642, %v1226, %v1225
        %v1228 = vrot.slane %v961, 1
        %v1229 = vsel %vm645, %v1228, %v1227
        %v1230 = vrot.slane %v963, 7
        %v1231 = vsel %vm627, %v1230, %v962
        %v1232 = vrot.slane %v964, 6
        %v1233 = vsel %vm630, %v1232, %v1231
        %v1234 = vrot.slane %v965, 5
        %v1235 = vsel %vm633, %v1234, %v1233
        %v1236 = vrot.slane %v966, 4
        %v1237 = vsel %vm636, %v1236, %v1235
        %v1238 = vrot.slane %v967, 3
        %v1239 = vsel %vm639, %v1238, %v1237
        %v1240 = vrot.slane %v968, 2
        %v1241 = vsel %vm642, %v1240, %v1239
        %v1242 = vrot.slane %v969, 1
        %v1243 = vsel %vm645, %v1242, %v1241
        %v1244 = vrot.slane %v971, 7
        %v1245 = vsel %vm627, %v1244, %v970
        %v1246 = vrot.slane %v972, 6
        %v1247 = vsel %vm630, %v1246, %v1245
        %v1248 = vrot.slane %v973, 5
        %v1249 = vsel %vm633, %v1248, %v1247
        %v1250 = vrot.slane %v974, 4
        %v1251 = vsel %vm636, %v1250, %v1249
        %v1252 = vrot.slane %v975, 3
        %v1253 = vsel %vm639, %v1252, %v1251
        %v1254 = vrot.slane %v976, 2
        %v1255 = vsel %vm642, %v1254, %v1253
        %v1256 = vrot.slane %v977, 1
        %v1257 = vsel %vm645, %v1256, %v1255
        %v1258 = vrot.slane %v979, 7
        %v1259 = vsel %vm627, %v1258, %v978
        %v1260 = vrot.slane %v980, 6
        %v1261 = vsel %vm630, %v1260, %v1259
        %v1262 = vrot.slane %v981, 5
        %v1263 = vsel %vm633, %v1262, %v1261
        %v1264 = vrot.slane %v982, 4
        %v1265 = vsel %vm636, %v1264, %v1263
        %v1266 = vrot.slane %v983, 3
        %v1267 = vsel %vm639, %v1266, %v1265
        %v1268 = vrot.slane %v984, 2
        %v1269 = vsel %vm642, %v1268, %v1267
        %v1270 = vrot.slane %v985, 1
        %v1271 = vsel %vm645, %v1270, %v1269
        %v1272 = vrot.slane %v987, 7
        %v1273 = vsel %vm627, %v1272, %v986
        %v1274 = vrot.slane %v988, 6
        %v1275 = vsel %vm630, %v1274, %v1273
        %v1276 = vrot.slane %v989, 5
        %v1277 = vsel %vm633, %v1276, %v1275
        %v1278 = vrot.slane %v990, 4
        %v1279 = vsel %vm636, %v1278, %v1277
        %v1280 = vrot.slane %v991, 3
        %v1281 = vsel %vm639, %v1280, %v1279
        %v1282 = vrot.slane %v992, 2
        %v1283 = vsel %vm642, %v1282, %v1281
        %v1284 = vrot.slane %v993, 1
        %v1285 = vsel %vm645, %v1284, %v1283
        %v1286 = vrot.slane %v995, 7
        %v1287 = vsel %vm627, %v1286, %v994
        %v1288 = vrot.slane %v996, 6
        %v1289 = vsel %vm630, %v1288, %v1287
        %v1290 = vrot.slane %v997, 5
        %v1291 = vsel %vm633, %v1290, %v1289
        %v1292 = vrot.slane %v998, 4
        %v1293 = vsel %vm636, %v1292, %v1291
        %v1294 = vrot.slane %v999, 3
        %v1295 = vsel %vm639, %v1294, %v1293
        %v1296 = vrot.slane %v1000, 2
        %v1297 = vsel %vm642, %v1296, %v1295
        %v1298 = vrot.slane %v1001, 1
        %v1299 = vsel %vm645, %v1298, %v1297
        %v1300 = vrot.slane %v1003, 7
        %v1301 = vsel %vm627, %v1300, %v1002
        %v1302 = vrot.slane %v1004, 6
        %v1303 = vsel %vm630, %v1302, %v1301
        %v1304 = vrot.slane %v1005, 5
        %v1305 = vsel %vm633, %v1304, %v1303
        %v1306 = vrot.slane %v1006, 4
        %v1307 = vsel %vm636, %v1306, %v1305
        %v1308 = vrot.slane %v1007, 3
        %v1309 = vsel %vm639, %v1308, %v1307
        %v1310 = vrot.slane %v1008, 2
        %v1311 = vsel %vm642, %v1310, %v1309
        %v1312 = vrot.slane %v1009, 1
        %v1313 = vsel %vm645, %v1312, %v1311
        %v1314 = vrot.slane %v1011, 7
        %v1315 = vsel %vm627, %v1314, %v1010
        %v1316 = vrot.slane %v1012, 6
        %v1317 = vsel %vm630, %v1316, %v1315
        %v1318 = vrot.slane %v1013, 5
        %v1319 = vsel %vm633, %v1318, %v1317
        %v1320 = vrot.slane %v1014, 4
        %v1321 = vsel %vm636, %v1320, %v1319
        %v1322 = vrot.slane %v1015, 3
        %v1323 = vsel %vm639, %v1322, %v1321
        %v1324 = vrot.slane %v1016, 2
        %v1325 = vsel %vm642, %v1324, %v1323
        %v1326 = vrot.slane %v1017, 1
        %v1327 = vsel %vm645, %v1326, %v1325
        %v1328 = vrot.slane %v1019, 7
        %v1329 = vsel %vm627, %v1328, %v1018
        %v1330 = vrot.slane %v1020, 6
        %v1331 = vsel %vm630, %v1330, %v1329
        %v1332 = vrot.slane %v1021, 5
        %v1333 = vsel %vm633, %v1332, %v1331
        %v1334 = vrot.slane %v1022, 4
        %v1335 = vsel %vm636, %v1334, %v1333
        %v1336 = vrot.slane %v1023, 3
        %v1337 = vsel %vm639, %v1336, %v1335
        %v1338 = vrot.slane %v1024, 2
        %v1339 = vsel %vm642, %v1338, %v1337
        %v1340 = vrot.slane %v1025, 1
        %v1341 = vsel %vm645, %v1340, %v1339
        %v1342 = vrot.slane %v1027, 7
        %v1343 = vsel %vm627, %v1342, %v1026
        %v1344 = vrot.slane %v1028, 6
        %v1345 = vsel %vm630, %v1344, %v1343
        %v1346 = vrot.slane %v1029, 5
        %v1347 = vsel %vm633, %v1346, %v1345
        %v1348 = vrot.slane %v1030, 4
        %v1349 = vsel %vm636, %v1348, %v1347
        %v1350 = vrot.slane %v1031, 3
        %v1351 = vsel %vm639, %v1350, %v1349
        %v1352 = vrot.slane %v1032, 2
        %v1353 = vsel %vm642, %v1352, %v1351
        %v1354 = vrot.slane %v1033, 1
        %v1355 = vsel %vm645, %v1354, %v1353
        %v1356 = vrot.slane %v1035, 7
        %v1357 = vsel %vm627, %v1356, %v1034
        %v1358 = vrot.slane %v1036, 6
        %v1359 = vsel %vm630, %v1358, %v1357
        %v1360 = vrot.slane %v1037, 5
        %v1361 = vsel %vm633, %v1360, %v1359
        %v1362 = vrot.slane %v1038, 4
        %v1363 = vsel %vm636, %v1362, %v1361
        %v1364 = vrot.slane %v1039, 3
        %v1365 = vsel %vm639, %v1364, %v1363
        %v1366 = vrot.slane %v1040, 2
        %v1367 = vsel %vm642, %v1366, %v1365
        %v1368 = vrot.slane %v1041, 1
        %v1369 = vsel %vm645, %v1368, %v1367
        %v1370 = vrot.slane %v1043, 7
        %v1371 = vsel %vm627, %v1370, %v1042
        %v1372 = vrot.slane %v1044, 6
        %v1373 = vsel %vm630, %v1372, %v1371
        %v1374 = vrot.slane %v1045, 5
        %v1375 = vsel %vm633, %v1374, %v1373
        %v1376 = vrot.slane %v1046, 4
        %v1377 = vsel %vm636, %v1376, %v1375
        %v1378 = vrot.slane %v1047, 3
        %v1379 = vsel %vm639, %v1378, %v1377
        %v1380 = vrot.slane %v1048, 2
        %v1381 = vsel %vm642, %v1380, %v1379
        %v1382 = vrot.slane %v1049, 1
        %v1383 = vsel %vm645, %v1382, %v1381
        %v1384 = vrot.slane %v1051, 7
        %v1385 = vsel %vm627, %v1384, %v1050
        %v1386 = vrot.slane %v1052, 6
        %v1387 = vsel %vm630, %v1386, %v1385
        %v1388 = vrot.slane %v1053, 5
        %v1389 = vsel %vm633, %v1388, %v1387
        %v1390 = vrot.slane %v1054, 4
        %v1391 = vsel %vm636, %v1390, %v1389
        %v1392 = vrot.slane %v1055, 3
        %v1393 = vsel %vm639, %v1392, %v1391
        %v1394 = vrot.slane %v1056, 2
        %v1395 = vsel %vm642, %v1394, %v1393
        %v1396 = vrot.slane %v1057, 1
        %v1397 = vsel %vm645, %v1396, %v1395
        %v1398 = vrot.slane %v1059, 7
        %v1399 = vsel %vm627, %v1398, %v1058
        %v1400 = vrot.slane %v1060, 6
        %v1401 = vsel %vm630, %v1400, %v1399
        %v1402 = vrot.slane %v1061, 5
        %v1403 = vsel %vm633, %v1402, %v1401
        %v1404 = vrot.slane %v1062, 4
        %v1405 = vsel %vm636, %v1404, %v1403
        %v1406 = vrot.slane %v1063, 3
        %v1407 = vsel %vm639, %v1406, %v1405
        %v1408 = vrot.slane %v1064, 2
        %v1409 = vsel %vm642, %v1408, %v1407
        %v1410 = vrot.slane %v1065, 1
        %v1411 = vsel %vm645, %v1410, %v1409
        %v1412 = vrot.slane %v1067, 7
        %v1413 = vsel %vm627, %v1412, %v1066
        %v1414 = vrot.slane %v1068, 6
        %v1415 = vsel %vm630, %v1414, %v1413
        %v1416 = vrot.slane %v1069, 5
        %v1417 = vsel %vm633, %v1416, %v1415
        %v1418 = vrot.slane %v1070, 4
        %v1419 = vsel %vm636, %v1418, %v1417
        %v1420 = vrot.slane %v1071, 3
        %v1421 = vsel %vm639, %v1420, %v1419
        %v1422 = vrot.slane %v1072, 2
        %v1423 = vsel %vm642, %v1422, %v1421
        %v1424 = vrot.slane %v1073, 1
        %v1425 = vsel %vm645, %v1424, %v1423
        %1442 = vmatprep.subr.mxu0 0.0
        %1443 = vmatpush1.xpose.msra.mxu0 %v1425
        %1444 = vmatprep.subr.mxu0 0.0
        %1445 = vmatpush1.xpose.msra.mxu0 %v1411
        %1446 = vmatprep.subr.mxu0 0.0
        %1447 = vmatpush1.xpose.msra.mxu0 %v1397
        %1448 = vmatprep.subr.mxu0 0.0
        %1449 = vmatpush1.xpose.msra.mxu0 %v1383
        %1450 = vmatprep.subr.mxu0 0.0
        %1451 = vmatpush1.xpose.msra.mxu0 %v1369
        %1452 = vmatprep.subr.mxu0 0.0
        %1453 = vmatpush1.xpose.msra.mxu0 %v1355
        %1454 = vmatprep.subr.mxu0 0.0
        %1455 = vmatpush1.xpose.msra.mxu0 %v1341
        %1456 = vmatprep.subr.mxu0 0.0
        %1457 = vmatpush1.xpose.msra.mxu0 %v1327
        %1458 = vmatprep.subr.mxu0 0.0
        %1459 = vmatpush1.xpose.msra.mxu0 %v1313
        %1460 = vmatprep.subr.mxu0 0.0
        %1461 = vmatpush1.xpose.msra.mxu0 %v1299
        %1462 = vmatprep.subr.mxu0 0.0
        %1463 = vmatpush1.xpose.msra.mxu0 %v1285
        %1464 = vmatprep.subr.mxu0 0.0
        %1465 = vmatpush1.xpose.msra.mxu0 %v1271
        %1466 = vmatprep.subr.mxu0 0.0
        %1467 = vmatpush1.xpose.msra.mxu0 %v1257
        %1468 = vmatprep.subr.mxu0 0.0
        %1469 = vmatpush1.xpose.msra.mxu0 %v1243
        %1470 = vmatprep.subr.mxu0 0.0
        %1471 = vmatpush1.xpose.msra.mxu0 %v1229
        %1472 = vmatprep.subr.mxu0 0.0
        %1473 = vmatpush1.xpose.msra.mxu0 %v1215
        %1474 = vmatprep.subr.mxu0 0.0
        %1475 = vmatpush2.xpose.msra.mxu0 0.0
        %1476 = vmatprep.subr.mxu0 0.0
        %1477 = vmatpush2.xpose.msra.mxu0 0.0
        %1478 = vmatprep.subr.mxu0 0.0
        %1479 = vmatpush2.xpose.msra.mxu0 0.0
        %1480 = vmatprep.subr.mxu0 0.0
        %1481 = vmatpush2.xpose.msra.mxu0 0.0
        %1482 = vmatprep.subr.mxu0 0.0
        %1483 = vmatpush2.xpose.msra.mxu0 0.0
        %1484 = vmatprep.subr.mxu0 0.0
        %1485 = vmatpush2.xpose.msra.mxu0 0.0
        %1486 = vmatprep.subr.mxu0 0.0
        %1487 = vmatpush2.xpose.msra.mxu0 0.0
        %1488 = vmatprep.subr.mxu0 0.0
        %1489 = vmatpush2.xpose.msra.mxu0 0.0
        %1490 = vmatprep.subr.mxu0 0.0
        %1491 = vmatpush2.xpose.msra.mxu0 0.0
        %1492 = vmatprep.subr.mxu0 0.0
        %1493 = vmatpush2.xpose.msra.mxu0 0.0
        %1494 = vmatprep.subr.mxu0 0.0
        %1495 = vmatpush2.xpose.msra.mxu0 0.0
        %1496 = vmatprep.subr.mxu0 0.0
        %1497 = vmatpush2.xpose.msra.mxu0 0.0
        %1498 = vmatprep.subr.mxu0 0.0
        %1499 = vmatpush2.xpose.msra.mxu0 0.0
        %1500 = vmatprep.subr.mxu0 0.0
        %1501 = vmatpush2.xpose.msra.mxu0 0.0
        %1502 = vmatprep.subr.mxu0 0.0
        %1503 = vmatpush2.xpose.msra.mxu0 0.0
        %1504 = vmatprep.subr.mxu0 0.0
        %1505 = vmatpush2.xpose.msra.mxu0 0.0
        %1506 = vmatprep.mubr.f32.mxu0 0.0
        %1507 = vmatmul.mubr.f32.gmra.mxu0 %v368
        %v1508 = vpop.f32.mrf.mxu0
        %v1509 = vadd.f32 0.0, %v1508
        %v1510 = vpop.f32.mrf.mxu0
        %1511 = vdwg.mxu0
        %s1512 = sadd.s32 %s369, 1
        %s1513 = smul.u32 %s1512, 8
        %s1514 = scalar_lea.vmem [#allocation2], %s1513
        %1515 = vst [vmem:[%s1514] sm:$0xff] %v1509
        %v1516 = vld [vmem:[%s323 + $0x2] sm:$0x1]
        %v1517 = vld [vmem:[%s323 + $0xa] sm:$0x1]
        %v1518 = vld [vmem:[%s323 + $0x12] sm:$0x1]
        %v1519 = vld [vmem:[%s323 + $0x1a] sm:$0x1]
        %v1520 = vld [vmem:[%s323 + $0x22] sm:$0x1]
        %v1521 = vld [vmem:[%s323 + $0x2a] sm:$0x1]
        %v1522 = vld [vmem:[%s323 + $0x32] sm:$0x1]
        %v1523 = vld [vmem:[%s323 + $0x3a] sm:$0x1]
        %v1524 = vld [vmem:[%s323 + $0x42] sm:$0x1]
        %v1525 = vld [vmem:[%s323 + $0x4a] sm:$0x1]
        %v1526 = vld [vmem:[%s323 + $0x52] sm:$0x1]
        %v1527 = vld [vmem:[%s323 + $0x5a] sm:$0x1]
        %v1528 = vld [vmem:[%s323 + $0x62] sm:$0x1]
        %v1529 = vld [vmem:[%s323 + $0x6a] sm:$0x1]
        %v1530 = vld [vmem:[%s323 + $0x72] sm:$0x1]
        %v1531 = vld [vmem:[%s323 + $0x7a] sm:$0x1]
        %v1532 = vld [vmem:[%s323 + $0x82] sm:$0x1]
        %v1533 = vld [vmem:[%s323 + $0x8a] sm:$0x1]
        %v1534 = vld [vmem:[%s323 + $0x92] sm:$0x1]
        %v1535 = vld [vmem:[%s323 + $0x9a] sm:$0x1]
        %v1536 = vld [vmem:[%s323 + $0xa2] sm:$0x1]
        %v1537 = vld [vmem:[%s323 + $0xaa] sm:$0x1]
        %v1538 = vld [vmem:[%s323 + $0xb2] sm:$0x1]
        %v1539 = vld [vmem:[%s323 + $0xba] sm:$0x1]
        %v1540 = vld [vmem:[%s323 + $0xc2] sm:$0x1]
        %v1541 = vld [vmem:[%s323 + $0xca] sm:$0x1]
        %v1542 = vld [vmem:[%s323 + $0xd2] sm:$0x1]
        %v1543 = vld [vmem:[%s323 + $0xda] sm:$0x1]
        %v1544 = vld [vmem:[%s323 + $0xe2] sm:$0x1]
        %v1545 = vld [vmem:[%s323 + $0xea] sm:$0x1]
        %v1546 = vld [vmem:[%s323 + $0xf2] sm:$0x1]
        %v1547 = vld [vmem:[%s323 + $0xfa] sm:$0x1]
        %v1548 = vld [vmem:[%s323 + $0x102] sm:$0x1]
        %v1549 = vld [vmem:[%s323 + $0x10a] sm:$0x1]
        %v1550 = vld [vmem:[%s323 + $0x112] sm:$0x1]
        %v1551 = vld [vmem:[%s323 + $0x11a] sm:$0x1]
        %v1552 = vld [vmem:[%s323 + $0x122] sm:$0x1]
        %v1553 = vld [vmem:[%s323 + $0x12a] sm:$0x1]
        %v1554 = vld [vmem:[%s323 + $0x132] sm:$0x1]
        %v1555 = vld [vmem:[%s323 + $0x13a] sm:$0x1]
        %v1556 = vld [vmem:[%s323 + $0x142] sm:$0x1]
        %v1557 = vld [vmem:[%s323 + $0x14a] sm:$0x1]
        %v1558 = vld [vmem:[%s323 + $0x152] sm:$0x1]
        %v1559 = vld [vmem:[%s323 + $0x15a] sm:$0x1]
        %v1560 = vld [vmem:[%s323 + $0x162] sm:$0x1]
        %v1561 = vld [vmem:[%s323 + $0x16a] sm:$0x1]
        %v1562 = vld [vmem:[%s323 + $0x172] sm:$0x1]
        %v1563 = vld [vmem:[%s323 + $0x17a] sm:$0x1]
        %v1564 = vld [vmem:[%s323 + $0x182] sm:$0x1]
        %v1565 = vld [vmem:[%s323 + $0x18a] sm:$0x1]
        %v1566 = vld [vmem:[%s323 + $0x192] sm:$0x1]
        %v1567 = vld [vmem:[%s323 + $0x19a] sm:$0x1]
        %v1568 = vld [vmem:[%s323 + $0x1a2] sm:$0x1]
        %v1569 = vld [vmem:[%s323 + $0x1aa] sm:$0x1]
        %v1570 = vld [vmem:[%s323 + $0x1b2] sm:$0x1]
        %v1571 = vld [vmem:[%s323 + $0x1ba] sm:$0x1]
        %v1572 = vld [vmem:[%s323 + $0x1c2] sm:$0x1]
        %v1573 = vld [vmem:[%s323 + $0x1ca] sm:$0x1]
        %v1574 = vld [vmem:[%s323 + $0x1d2] sm:$0x1]
        %v1575 = vld [vmem:[%s323 + $0x1da] sm:$0x1]
        %v1576 = vld [vmem:[%s323 + $0x1e2] sm:$0x1]
        %v1577 = vld [vmem:[%s323 + $0x1ea] sm:$0x1]
        %v1578 = vld [vmem:[%s323 + $0x1f2] sm:$0x1]
        %v1579 = vld [vmem:[%s323 + $0x1fa] sm:$0x1]
        %v1580 = vld [vmem:[%s323 + $0x202] sm:$0x1]
        %v1581 = vld [vmem:[%s323 + $0x20a] sm:$0x1]
        %v1582 = vld [vmem:[%s323 + $0x212] sm:$0x1]
        %v1583 = vld [vmem:[%s323 + $0x21a] sm:$0x1]
        %v1584 = vld [vmem:[%s323 + $0x222] sm:$0x1]
        %v1585 = vld [vmem:[%s323 + $0x22a] sm:$0x1]
        %v1586 = vld [vmem:[%s323 + $0x232] sm:$0x1]
        %v1587 = vld [vmem:[%s323 + $0x23a] sm:$0x1]
        %v1588 = vld [vmem:[%s323 + $0x242] sm:$0x1]
        %v1589 = vld [vmem:[%s323 + $0x24a] sm:$0x1]
        %v1590 = vld [vmem:[%s323 + $0x252] sm:$0x1]
        %v1591 = vld [vmem:[%s323 + $0x25a] sm:$0x1]
        %v1592 = vld [vmem:[%s323 + $0x262] sm:$0x1]
        %v1593 = vld [vmem:[%s323 + $0x26a] sm:$0x1]
        %v1594 = vld [vmem:[%s323 + $0x272] sm:$0x1]
        %v1595 = vld [vmem:[%s323 + $0x27a] sm:$0x1]
        %v1596 = vld [vmem:[%s323 + $0x282] sm:$0x1]
        %v1597 = vld [vmem:[%s323 + $0x28a] sm:$0x1]
        %v1598 = vld [vmem:[%s323 + $0x292] sm:$0x1]
        %v1599 = vld [vmem:[%s323 + $0x29a] sm:$0x1]
        %v1600 = vld [vmem:[%s323 + $0x2a2] sm:$0x1]
        %v1601 = vld [vmem:[%s323 + $0x2aa] sm:$0x1]
        %v1602 = vld [vmem:[%s323 + $0x2b2] sm:$0x1]
        %v1603 = vld [vmem:[%s323 + $0x2ba] sm:$0x1]
        %v1604 = vld [vmem:[%s323 + $0x2c2] sm:$0x1]
        %v1605 = vld [vmem:[%s323 + $0x2ca] sm:$0x1]
        %v1606 = vld [vmem:[%s323 + $0x2d2] sm:$0x1]
        %v1607 = vld [vmem:[%s323 + $0x2da] sm:$0x1]
        %v1608 = vld [vmem:[%s323 + $0x2e2] sm:$0x1]
        %v1609 = vld [vmem:[%s323 + $0x2ea] sm:$0x1]
        %v1610 = vld [vmem:[%s323 + $0x2f2] sm:$0x1]
        %v1611 = vld [vmem:[%s323 + $0x2fa] sm:$0x1]
        %v1612 = vld [vmem:[%s323 + $0x302] sm:$0x1]
        %v1613 = vld [vmem:[%s323 + $0x30a] sm:$0x1]
        %v1614 = vld [vmem:[%s323 + $0x312] sm:$0x1]
        %v1615 = vld [vmem:[%s323 + $0x31a] sm:$0x1]
        %v1616 = vld [vmem:[%s323 + $0x322] sm:$0x1]
        %v1617 = vld [vmem:[%s323 + $0x32a] sm:$0x1]
        %v1618 = vld [vmem:[%s323 + $0x332] sm:$0x1]
        %v1619 = vld [vmem:[%s323 + $0x33a] sm:$0x1]
        %v1620 = vld [vmem:[%s323 + $0x342] sm:$0x1]
        %v1621 = vld [vmem:[%s323 + $0x34a] sm:$0x1]
        %v1622 = vld [vmem:[%s323 + $0x352] sm:$0x1]
        %v1623 = vld [vmem:[%s323 + $0x35a] sm:$0x1]
        %v1624 = vld [vmem:[%s323 + $0x362] sm:$0x1]
        %v1625 = vld [vmem:[%s323 + $0x36a] sm:$0x1]
        %v1626 = vld [vmem:[%s323 + $0x372] sm:$0x1]
        %v1627 = vld [vmem:[%s323 + $0x37a] sm:$0x1]
        %v1628 = vld [vmem:[%s323 + $0x382] sm:$0x1]
        %v1629 = vld [vmem:[%s323 + $0x38a] sm:$0x1]
        %v1630 = vld [vmem:[%s323 + $0x392] sm:$0x1]
        %v1631 = vld [vmem:[%s323 + $0x39a] sm:$0x1]
        %v1632 = vld [vmem:[%s323 + $0x3a2] sm:$0x1]
        %v1633 = vld [vmem:[%s323 + $0x3aa] sm:$0x1]
        %v1634 = vld [vmem:[%s323 + $0x3b2] sm:$0x1]
        %v1635 = vld [vmem:[%s323 + $0x3ba] sm:$0x1]
        %v1636 = vld [vmem:[%s323 + $0x3c2] sm:$0x1]
        %v1637 = vld [vmem:[%s323 + $0x3ca] sm:$0x1]
        %v1638 = vld [vmem:[%s323 + $0x3d2] sm:$0x1]
        %v1639 = vld [vmem:[%s323 + $0x3da] sm:$0x1]
        %v1640 = vld [vmem:[%s323 + $0x3e2] sm:$0x1]
        %v1641 = vld [vmem:[%s323 + $0x3ea] sm:$0x1]
        %v1642 = vld [vmem:[%s323 + $0x3f2] sm:$0x1]
        %v1643 = vld [vmem:[%s323 + $0x3fa] sm:$0x1]
        %v1772 = vrot.slane %v1517, 7
        %v1773 = vsel %vm627, %v1772, %v1516
        %v1774 = vrot.slane %v1518, 6
        %v1775 = vsel %vm630, %v1774, %v1773
        %v1776 = vrot.slane %v1519, 5
        %v1777 = vsel %vm633, %v1776, %v1775
        %v1778 = vrot.slane %v1520, 4
        %v1779 = vsel %vm636, %v1778, %v1777
        %v1780 = vrot.slane %v1521, 3
        %v1781 = vsel %vm639, %v1780, %v1779
        %v1782 = vrot.slane %v1522, 2
        %v1783 = vsel %vm642, %v1782, %v1781
        %v1784 = vrot.slane %v1523, 1
        %v1785 = vsel %vm645, %v1784, %v1783
        %v1786 = vrot.slane %v1525, 7
        %v1787 = vsel %vm627, %v1786, %v1524
        %v1788 = vrot.slane %v1526, 6
        %v1789 = vsel %vm630, %v1788, %v1787
        %v1790 = vrot.slane %v1527, 5
        %v1791 = vsel %vm633, %v1790, %v1789
        %v1792 = vrot.slane %v1528, 4
        %v1793 = vsel %vm636, %v1792, %v1791
        %v1794 = vrot.slane %v1529, 3
        %v1795 = vsel %vm639, %v1794, %v1793
        %v1796 = vrot.slane %v1530, 2
        %v1797 = vsel %vm642, %v1796, %v1795
        %v1798 = vrot.slane %v1531, 1
        %v1799 = vsel %vm645, %v1798, %v1797
        %v1800 = vrot.slane %v1533, 7
        %v1801 = vsel %vm627, %v1800, %v1532
        %v1802 = vrot.slane %v1534, 6
        %v1803 = vsel %vm630, %v1802, %v1801
        %v1804 = vrot.slane %v1535, 5
        %v1805 = vsel %vm633, %v1804, %v1803
        %v1806 = vrot.slane %v1536, 4
        %v1807 = vsel %vm636, %v1806, %v1805
        %v1808 = vrot.slane %v1537, 3
        %v1809 = vsel %vm639, %v1808, %v1807
        %v1810 = vrot.slane %v1538, 2
        %v1811 = vsel %vm642, %v1810, %v1809
        %v1812 = vrot.slane %v1539, 1
        %v1813 = vsel %vm645, %v1812, %v1811
        %v1814 = vrot.slane %v1541, 7
        %v1815 = vsel %vm627, %v1814, %v1540
        %v1816 = vrot.slane %v1542, 6
        %v1817 = vsel %vm630, %v1816, %v1815
        %v1818 = vrot.slane %v1543, 5
        %v1819 = vsel %vm633, %v1818, %v1817
        %v1820 = vrot.slane %v1544, 4
        %v1821 = vsel %vm636, %v1820, %v1819
        %v1822 = vrot.slane %v1545, 3
        %v1823 = vsel %vm639, %v1822, %v1821
        %v1824 = vrot.slane %v1546, 2
        %v1825 = vsel %vm642, %v1824, %v1823
        %v1826 = vrot.slane %v1547, 1
        %v1827 = vsel %vm645, %v1826, %v1825
        %v1828 = vrot.slane %v1549, 7
        %v1829 = vsel %vm627, %v1828, %v1548
        %v1830 = vrot.slane %v1550, 6
        %v1831 = vsel %vm630, %v1830, %v1829
        %v1832 = vrot.slane %v1551, 5
        %v1833 = vsel %vm633, %v1832, %v1831
        %v1834 = vrot.slane %v1552, 4
        %v1835 = vsel %vm636, %v1834, %v1833
        %v1836 = vrot.slane %v1553, 3
        %v1837 = vsel %vm639, %v1836, %v1835
        %v1838 = vrot.slane %v1554, 2
        %v1839 = vsel %vm642, %v1838, %v1837
        %v1840 = vrot.slane %v1555, 1
        %v1841 = vsel %vm645, %v1840, %v1839
        %v1842 = vrot.slane %v1557, 7
        %v1843 = vsel %vm627, %v1842, %v1556
        %v1844 = vrot.slane %v1558, 6
        %v1845 = vsel %vm630, %v1844, %v1843
        %v1846 = vrot.slane %v1559, 5
        %v1847 = vsel %vm633, %v1846, %v1845
        %v1848 = vrot.slane %v1560, 4
        %v1849 = vsel %vm636, %v1848, %v1847
        %v1850 = vrot.slane %v1561, 3
        %v1851 = vsel %vm639, %v1850, %v1849
        %v1852 = vrot.slane %v1562, 2
        %v1853 = vsel %vm642, %v1852, %v1851
        %v1854 = vrot.slane %v1563, 1
        %v1855 = vsel %vm645, %v1854, %v1853
        %v1856 = vrot.slane %v1565, 7
        %v1857 = vsel %vm627, %v1856, %v1564
        %v1858 = vrot.slane %v1566, 6
        %v1859 = vsel %vm630, %v1858, %v1857
        %v1860 = vrot.slane %v1567, 5
        %v1861 = vsel %vm633, %v1860, %v1859
        %v1862 = vrot.slane %v1568, 4
        %v1863 = vsel %vm636, %v1862, %v1861
        %v1864 = vrot.slane %v1569, 3
        %v1865 = vsel %vm639, %v1864, %v1863
        %v1866 = vrot.slane %v1570, 2
        %v1867 = vsel %vm642, %v1866, %v1865
        %v1868 = vrot.slane %v1571, 1
        %v1869 = vsel %vm645, %v1868, %v1867
        %v1870 = vrot.slane %v1573, 7
        %v1871 = vsel %vm627, %v1870, %v1572
        %v1872 = vrot.slane %v1574, 6
        %v1873 = vsel %vm630, %v1872, %v1871
        %v1874 = vrot.slane %v1575, 5
        %v1875 = vsel %vm633, %v1874, %v1873
        %v1876 = vrot.slane %v1576, 4
        %v1877 = vsel %vm636, %v1876, %v1875
        %v1878 = vrot.slane %v1577, 3
        %v1879 = vsel %vm639, %v1878, %v1877
        %v1880 = vrot.slane %v1578, 2
        %v1881 = vsel %vm642, %v1880, %v1879
        %v1882 = vrot.slane %v1579, 1
        %v1883 = vsel %vm645, %v1882, %v1881
        %v1884 = vrot.slane %v1581, 7
        %v1885 = vsel %vm627, %v1884, %v1580
        %v1886 = vrot.slane %v1582, 6
        %v1887 = vsel %vm630, %v1886, %v1885
        %v1888 = vrot.slane %v1583, 5
        %v1889 = vsel %vm633, %v1888, %v1887
        %v1890 = vrot.slane %v1584, 4
        %v1891 = vsel %vm636, %v1890, %v1889
        %v1892 = vrot.slane %v1585, 3
        %v1893 = vsel %vm639, %v1892, %v1891
        %v1894 = vrot.slane %v1586, 2
        %v1895 = vsel %vm642, %v1894, %v1893
        %v1896 = vrot.slane %v1587, 1
        %v1897 = vsel %vm645, %v1896, %v1895
        %v1898 = vrot.slane %v1589, 7
        %v1899 = vsel %vm627, %v1898, %v1588
        %v1900 = vrot.slane %v1590, 6
        %v1901 = vsel %vm630, %v1900, %v1899
        %v1902 = vrot.slane %v1591, 5
        %v1903 = vsel %vm633, %v1902, %v1901
        %v1904 = vrot.slane %v1592, 4
        %v1905 = vsel %vm636, %v1904, %v1903
        %v1906 = vrot.slane %v1593, 3
        %v1907 = vsel %vm639, %v1906, %v1905
        %v1908 = vrot.slane %v1594, 2
        %v1909 = vsel %vm642, %v1908, %v1907
        %v1910 = vrot.slane %v1595, 1
        %v1911 = vsel %vm645, %v1910, %v1909
        %v1912 = vrot.slane %v1597, 7
        %v1913 = vsel %vm627, %v1912, %v1596
        %v1914 = vrot.slane %v1598, 6
        %v1915 = vsel %vm630, %v1914, %v1913
        %v1916 = vrot.slane %v1599, 5
        %v1917 = vsel %vm633, %v1916, %v1915
        %v1918 = vrot.slane %v1600, 4
        %v1919 = vsel %vm636, %v1918, %v1917
        %v1920 = vrot.slane %v1601, 3
        %v1921 = vsel %vm639, %v1920, %v1919
        %v1922 = vrot.slane %v1602, 2
        %v1923 = vsel %vm642, %v1922, %v1921
        %v1924 = vrot.slane %v1603, 1
        %v1925 = vsel %vm645, %v1924, %v1923
        %v1926 = vrot.slane %v1605, 7
        %v1927 = vsel %vm627, %v1926, %v1604
        %v1928 = vrot.slane %v1606, 6
        %v1929 = vsel %vm630, %v1928, %v1927
        %v1930 = vrot.slane %v1607, 5
        %v1931 = vsel %vm633, %v1930, %v1929
        %v1932 = vrot.slane %v1608, 4
        %v1933 = vsel %vm636, %v1932, %v1931
        %v1934 = vrot.slane %v1609, 3
        %v1935 = vsel %vm639, %v1934, %v1933
        %v1936 = vrot.slane %v1610, 2
        %v1937 = vsel %vm642, %v1936, %v1935
        %v1938 = vrot.slane %v1611, 1
        %v1939 = vsel %vm645, %v1938, %v1937
        %v1940 = vrot.slane %v1613, 7
        %v1941 = vsel %vm627, %v1940, %v1612
        %v1942 = vrot.slane %v1614, 6
        %v1943 = vsel %vm630, %v1942, %v1941
        %v1944 = vrot.slane %v1615, 5
        %v1945 = vsel %vm633, %v1944, %v1943
        %v1946 = vrot.slane %v1616, 4
        %v1947 = vsel %vm636, %v1946, %v1945
        %v1948 = vrot.slane %v1617, 3
        %v1949 = vsel %vm639, %v1948, %v1947
        %v1950 = vrot.slane %v1618, 2
        %v1951 = vsel %vm642, %v1950, %v1949
        %v1952 = vrot.slane %v1619, 1
        %v1953 = vsel %vm645, %v1952, %v1951
        %v1954 = vrot.slane %v1621, 7
        %v1955 = vsel %vm627, %v1954, %v1620
        %v1956 = vrot.slane %v1622, 6
        %v1957 = vsel %vm630, %v1956, %v1955
        %v1958 = vrot.slane %v1623, 5
        %v1959 = vsel %vm633, %v1958, %v1957
        %v1960 = vrot.slane %v1624, 4
        %v1961 = vsel %vm636, %v1960, %v1959
        %v1962 = vrot.slane %v1625, 3
        %v1963 = vsel %vm639, %v1962, %v1961
        %v1964 = vrot.slane %v1626, 2
        %v1965 = vsel %vm642, %v1964, %v1963
        %v1966 = vrot.slane %v1627, 1
        %v1967 = vsel %vm645, %v1966, %v1965
        %v1968 = vrot.slane %v1629, 7
        %v1969 = vsel %vm627, %v1968, %v1628
        %v1970 = vrot.slane %v1630, 6
        %v1971 = vsel %vm630, %v1970, %v1969
        %v1972 = vrot.slane %v1631, 5
        %v1973 = vsel %vm633, %v1972, %v1971
        %v1974 = vrot.slane %v1632, 4
        %v1975 = vsel %vm636, %v1974, %v1973
        %v1976 = vrot.slane %v1633, 3
        %v1977 = vsel %vm639, %v1976, %v1975
        %v1978 = vrot.slane %v1634, 2
        %v1979 = vsel %vm642, %v1978, %v1977
        %v1980 = vrot.slane %v1635, 1
        %v1981 = vsel %vm645, %v1980, %v1979
        %v1982 = vrot.slane %v1637, 7
        %v1983 = vsel %vm627, %v1982, %v1636
        %v1984 = vrot.slane %v1638, 6
        %v1985 = vsel %vm630, %v1984, %v1983
        %v1986 = vrot.slane %v1639, 5
        %v1987 = vsel %vm633, %v1986, %v1985
        %v1988 = vrot.slane %v1640, 4
        %v1989 = vsel %vm636, %v1988, %v1987
        %v1990 = vrot.slane %v1641, 3
        %v1991 = vsel %vm639, %v1990, %v1989
        %v1992 = vrot.slane %v1642, 2
        %v1993 = vsel %vm642, %v1992, %v1991
        %v1994 = vrot.slane %v1643, 1
        %v1995 = vsel %vm645, %v1994, %v1993
        %2012 = vmatprep.subr.mxu0 0.0
        %2013 = vmatpush1.xpose.msra.mxu0 %v1995
        %2014 = vmatprep.subr.mxu0 0.0
        %2015 = vmatpush1.xpose.msra.mxu0 %v1981
        %2016 = vmatprep.subr.mxu0 0.0
        %2017 = vmatpush1.xpose.msra.mxu0 %v1967
        %2018 = vmatprep.subr.mxu0 0.0
        %2019 = vmatpush1.xpose.msra.mxu0 %v1953
        %2020 = vmatprep.subr.mxu0 0.0
        %2021 = vmatpush1.xpose.msra.mxu0 %v1939
        %2022 = vmatprep.subr.mxu0 0.0
        %2023 = vmatpush1.xpose.msra.mxu0 %v1925
        %2024 = vmatprep.subr.mxu0 0.0
        %2025 = vmatpush1.xpose.msra.mxu0 %v1911
        %2026 = vmatprep.subr.mxu0 0.0
        %2027 = vmatpush1.xpose.msra.mxu0 %v1897
        %2028 = vmatprep.subr.mxu0 0.0
        %2029 = vmatpush1.xpose.msra.mxu0 %v1883
        %2030 = vmatprep.subr.mxu0 0.0
        %2031 = vmatpush1.xpose.msra.mxu0 %v1869
        %2032 = vmatprep.subr.mxu0 0.0
        %2033 = vmatpush1.xpose.msra.mxu0 %v1855
        %2034 = vmatprep.subr.mxu0 0.0
        %2035 = vmatpush1.xpose.msra.mxu0 %v1841
        %2036 = vmatprep.subr.mxu0 0.0
        %2037 = vmatpush1.xpose.msra.mxu0 %v1827
        %2038 = vmatprep.subr.mxu0 0.0
        %2039 = vmatpush1.xpose.msra.mxu0 %v1813
        %2040 = vmatprep.subr.mxu0 0.0
        %2041 = vmatpush1.xpose.msra.mxu0 %v1799
        %2042 = vmatprep.subr.mxu0 0.0
        %2043 = vmatpush1.xpose.msra.mxu0 %v1785
        %2044 = vmatprep.subr.mxu0 0.0
        %2045 = vmatpush2.xpose.msra.mxu0 0.0
        %2046 = vmatprep.subr.mxu0 0.0
        %2047 = vmatpush2.xpose.msra.mxu0 0.0
        %2048 = vmatprep.subr.mxu0 0.0
        %2049 = vmatpush2.xpose.msra.mxu0 0.0
        %2050 = vmatprep.subr.mxu0 0.0
        %2051 = vmatpush2.xpose.msra.mxu0 0.0
        %2052 = vmatprep.subr.mxu0 0.0
        %2053 = vmatpush2.xpose.msra.mxu0 0.0
        %2054 = vmatprep.subr.mxu0 0.0
        %2055 = vmatpush2.xpose.msra.mxu0 0.0
        %2056 = vmatprep.subr.mxu0 0.0
        %2057 = vmatpush2.xpose.msra.mxu0 0.0
        %2058 = vmatprep.subr.mxu0 0.0
        %2059 = vmatpush2.xpose.msra.mxu0 0.0
        %2060 = vmatprep.subr.mxu0 0.0
        %2061 = vmatpush2.xpose.msra.mxu0 0.0
        %2062 = vmatprep.subr.mxu0 0.0
        %2063 = vmatpush2.xpose.msra.mxu0 0.0
        %2064 = vmatprep.subr.mxu0 0.0
        %2065 = vmatpush2.xpose.msra.mxu0 0.0
        %2066 = vmatprep.subr.mxu0 0.0
        %2067 = vmatpush2.xpose.msra.mxu0 0.0
        %2068 = vmatprep.subr.mxu0 0.0
        %2069 = vmatpush2.xpose.msra.mxu0 0.0
        %2070 = vmatprep.subr.mxu0 0.0
        %2071 = vmatpush2.xpose.msra.mxu0 0.0
        %2072 = vmatprep.subr.mxu0 0.0
        %2073 = vmatpush2.xpose.msra.mxu0 0.0
        %2074 = vmatprep.subr.mxu0 0.0
        %2075 = vmatpush2.xpose.msra.mxu0 0.0
        %2076 = vmatprep.mubr.f32.mxu0 0.0
        %2077 = vmatmul.mubr.f32.gmra.mxu0 %v368
        %v2078 = vpop.f32.mrf.mxu0
        %v2079 = vadd.f32 0.0, %v2078
        %v2080 = vpop.f32.mrf.mxu0
        %2081 = vdwg.mxu0
        %s2082 = sadd.s32 %s369, 2
        %s2083 = smul.u32 %s2082, 8
        %s2084 = scalar_lea.vmem [#allocation2], %s2083
        %2085 = vst [vmem:[%s2084] sm:$0xff] %v2079
        %v2086 = vld [vmem:[%s323 + $0x3] sm:$0x1]
        %v2087 = vld [vmem:[%s323 + $0xb] sm:$0x1]
        %v2088 = vld [vmem:[%s323 + $0x13] sm:$0x1]
        %v2089 = vld [vmem:[%s323 + $0x1b] sm:$0x1]
        %v2090 = vld [vmem:[%s323 + $0x23] sm:$0x1]
        %v2091 = vld [vmem:[%s323 + $0x2b] sm:$0x1]
        %v2092 = vld [vmem:[%s323 + $0x33] sm:$0x1]
        %v2093 = vld [vmem:[%s323 + $0x3b] sm:$0x1]
        %v2094 = vld [vmem:[%s323 + $0x43] sm:$0x1]
        %v2095 = vld [vmem:[%s323 + $0x4b] sm:$0x1]
        %v2096 = vld [vmem:[%s323 + $0x53] sm:$0x1]
        %v2097 = vld [vmem:[%s323 + $0x5b] sm:$0x1]
        %v2098 = vld [vmem:[%s323 + $0x63] sm:$0x1]
        %v2099 = vld [vmem:[%s323 + $0x6b] sm:$0x1]
        %v2100 = vld [vmem:[%s323 + $0x73] sm:$0x1]
        %v2101 = vld [vmem:[%s323 + $0x7b] sm:$0x1]
        %v2102 = vld [vmem:[%s323 + $0x83] sm:$0x1]
        %v2103 = vld [vmem:[%s323 + $0x8b] sm:$0x1]
        %v2104 = vld [vmem:[%s323 + $0x93] sm:$0x1]
        %v2105 = vld [vmem:[%s323 + $0x9b] sm:$0x1]
        %v2106 = vld [vmem:[%s323 + $0xa3] sm:$0x1]
        %v2107 = vld [vmem:[%s323 + $0xab] sm:$0x1]
        %v2108 = vld [vmem:[%s323 + $0xb3] sm:$0x1]
        %v2109 = vld [vmem:[%s323 + $0xbb] sm:$0x1]
        %v2110 = vld [vmem:[%s323 + $0xc3] sm:$0x1]
        %v2111 = vld [vmem:[%s323 + $0xcb] sm:$0x1]
        %v2112 = vld [vmem:[%s323 + $0xd3] sm:$0x1]
        %v2113 = vld [vmem:[%s323 + $0xdb] sm:$0x1]
        %v2114 = vld [vmem:[%s323 + $0xe3] sm:$0x1]
        %v2115 = vld [vmem:[%s323 + $0xeb] sm:$0x1]
        %v2116 = vld [vmem:[%s323 + $0xf3] sm:$0x1]
        %v2117 = vld [vmem:[%s323 + $0xfb] sm:$0x1]
        %v2118 = vld [vmem:[%s323 + $0x103] sm:$0x1]
        %v2119 = vld [vmem:[%s323 + $0x10b] sm:$0x1]
        %v2120 = vld [vmem:[%s323 + $0x113] sm:$0x1]
        %v2121 = vld [vmem:[%s323 + $0x11b] sm:$0x1]
        %v2122 = vld [vmem:[%s323 + $0x123] sm:$0x1]
        %v2123 = vld [vmem:[%s323 + $0x12b] sm:$0x1]
        %v2124 = vld [vmem:[%s323 + $0x133] sm:$0x1]
        %v2125 = vld [vmem:[%s323 + $0x13b] sm:$0x1]
        %v2126 = vld [vmem:[%s323 + $0x143] sm:$0x1]
        %v2127 = vld [vmem:[%s323 + $0x14b] sm:$0x1]
        %v2128 = vld [vmem:[%s323 + $0x153] sm:$0x1]
        %v2129 = vld [vmem:[%s323 + $0x15b] sm:$0x1]
        %v2130 = vld [vmem:[%s323 + $0x163] sm:$0x1]
        %v2131 = vld [vmem:[%s323 + $0x16b] sm:$0x1]
        %v2132 = vld [vmem:[%s323 + $0x173] sm:$0x1]
        %v2133 = vld [vmem:[%s323 + $0x17b] sm:$0x1]
        %v2134 = vld [vmem:[%s323 + $0x183] sm:$0x1]
        %v2135 = vld [vmem:[%s323 + $0x18b] sm:$0x1]
        %v2136 = vld [vmem:[%s323 + $0x193] sm:$0x1]
        %v2137 = vld [vmem:[%s323 + $0x19b] sm:$0x1]
        %v2138 = vld [vmem:[%s323 + $0x1a3] sm:$0x1]
        %v2139 = vld [vmem:[%s323 + $0x1ab] sm:$0x1]
        %v2140 = vld [vmem:[%s323 + $0x1b3] sm:$0x1]
        %v2141 = vld [vmem:[%s323 + $0x1bb] sm:$0x1]
        %v2142 = vld [vmem:[%s323 + $0x1c3] sm:$0x1]
        %v2143 = vld [vmem:[%s323 + $0x1cb] sm:$0x1]
        %v2144 = vld [vmem:[%s323 + $0x1d3] sm:$0x1]
        %v2145 = vld [vmem:[%s323 + $0x1db] sm:$0x1]
        %v2146 = vld [vmem:[%s323 + $0x1e3] sm:$0x1]
        %v2147 = vld [vmem:[%s323 + $0x1eb] sm:$0x1]
        %v2148 = vld [vmem:[%s323 + $0x1f3] sm:$0x1]
        %v2149 = vld [vmem:[%s323 + $0x1fb] sm:$0x1]
        %v2150 = vld [vmem:[%s323 + $0x203] sm:$0x1]
        %v2151 = vld [vmem:[%s323 + $0x20b] sm:$0x1]
        %v2152 = vld [vmem:[%s323 + $0x213] sm:$0x1]
        %v2153 = vld [vmem:[%s323 + $0x21b] sm:$0x1]
        %v2154 = vld [vmem:[%s323 + $0x223] sm:$0x1]
        %v2155 = vld [vmem:[%s323 + $0x22b] sm:$0x1]
        %v2156 = vld [vmem:[%s323 + $0x233] sm:$0x1]
        %v2157 = vld [vmem:[%s323 + $0x23b] sm:$0x1]
        %v2158 = vld [vmem:[%s323 + $0x243] sm:$0x1]
        %v2159 = vld [vmem:[%s323 + $0x24b] sm:$0x1]
        %v2160 = vld [vmem:[%s323 + $0x253] sm:$0x1]
        %v2161 = vld [vmem:[%s323 + $0x25b] sm:$0x1]
        %v2162 = vld [vmem:[%s323 + $0x263] sm:$0x1]
        %v2163 = vld [vmem:[%s323 + $0x26b] sm:$0x1]
        %v2164 = vld [vmem:[%s323 + $0x273] sm:$0x1]
        %v2165 = vld [vmem:[%s323 + $0x27b] sm:$0x1]
        %v2166 = vld [vmem:[%s323 + $0x283] sm:$0x1]
        %v2167 = vld [vmem:[%s323 + $0x28b] sm:$0x1]
        %v2168 = vld [vmem:[%s323 + $0x293] sm:$0x1]
        %v2169 = vld [vmem:[%s323 + $0x29b] sm:$0x1]
        %v2170 = vld [vmem:[%s323 + $0x2a3] sm:$0x1]
        %v2171 = vld [vmem:[%s323 + $0x2ab] sm:$0x1]
        %v2172 = vld [vmem:[%s323 + $0x2b3] sm:$0x1]
        %v2173 = vld [vmem:[%s323 + $0x2bb] sm:$0x1]
        %v2174 = vld [vmem:[%s323 + $0x2c3] sm:$0x1]
        %v2175 = vld [vmem:[%s323 + $0x2cb] sm:$0x1]
        %v2176 = vld [vmem:[%s323 + $0x2d3] sm:$0x1]
        %v2177 = vld [vmem:[%s323 + $0x2db] sm:$0x1]
        %v2178 = vld [vmem:[%s323 + $0x2e3] sm:$0x1]
        %v2179 = vld [vmem:[%s323 + $0x2eb] sm:$0x1]
        %v2180 = vld [vmem:[%s323 + $0x2f3] sm:$0x1]
        %v2181 = vld [vmem:[%s323 + $0x2fb] sm:$0x1]
        %v2182 = vld [vmem:[%s323 + $0x303] sm:$0x1]
        %v2183 = vld [vmem:[%s323 + $0x30b] sm:$0x1]
        %v2184 = vld [vmem:[%s323 + $0x313] sm:$0x1]
        %v2185 = vld [vmem:[%s323 + $0x31b] sm:$0x1]
        %v2186 = vld [vmem:[%s323 + $0x323] sm:$0x1]
        %v2187 = vld [vmem:[%s323 + $0x32b] sm:$0x1]
        %v2188 = vld [vmem:[%s323 + $0x333] sm:$0x1]
        %v2189 = vld [vmem:[%s323 + $0x33b] sm:$0x1]
        %v2190 = vld [vmem:[%s323 + $0x343] sm:$0x1]
        %v2191 = vld [vmem:[%s323 + $0x34b] sm:$0x1]
        %v2192 = vld [vmem:[%s323 + $0x353] sm:$0x1]
        %v2193 = vld [vmem:[%s323 + $0x35b] sm:$0x1]
        %v2194 = vld [vmem:[%s323 + $0x363] sm:$0x1]
        %v2195 = vld [vmem:[%s323 + $0x36b] sm:$0x1]
        %v2196 = vld [vmem:[%s323 + $0x373] sm:$0x1]
        %v2197 = vld [vmem:[%s323 + $0x37b] sm:$0x1]
        %v2198 = vld [vmem:[%s323 + $0x383] sm:$0x1]
        %v2199 = vld [vmem:[%s323 + $0x38b] sm:$0x1]
        %v2200 = vld [vmem:[%s323 + $0x393] sm:$0x1]
        %v2201 = vld [vmem:[%s323 + $0x39b] sm:$0x1]
        %v2202 = vld [vmem:[%s323 + $0x3a3] sm:$0x1]
        %v2203 = vld [vmem:[%s323 + $0x3ab] sm:$0x1]
        %v2204 = vld [vmem:[%s323 + $0x3b3] sm:$0x1]
        %v2205 = vld [vmem:[%s323 + $0x3bb] sm:$0x1]
        %v2206 = vld [vmem:[%s323 + $0x3c3] sm:$0x1]
        %v2207 = vld [vmem:[%s323 + $0x3cb] sm:$0x1]
        %v2208 = vld [vmem:[%s323 + $0x3d3] sm:$0x1]
        %v2209 = vld [vmem:[%s323 + $0x3db] sm:$0x1]
        %v2210 = vld [vmem:[%s323 + $0x3e3] sm:$0x1]
        %v2211 = vld [vmem:[%s323 + $0x3eb] sm:$0x1]
        %v2212 = vld [vmem:[%s323 + $0x3f3] sm:$0x1]
        %v2213 = vld [vmem:[%s323 + $0x3fb] sm:$0x1]
        %v2342 = vrot.slane %v2087, 7
        %v2343 = vsel %vm627, %v2342, %v2086
        %v2344 = vrot.slane %v2088, 6
        %v2345 = vsel %vm630, %v2344, %v2343
        %v2346 = vrot.slane %v2089, 5
        %v2347 = vsel %vm633, %v2346, %v2345
        %v2348 = vrot.slane %v2090, 4
        %v2349 = vsel %vm636, %v2348, %v2347
        %v2350 = vrot.slane %v2091, 3
        %v2351 = vsel %vm639, %v2350, %v2349
        %v2352 = vrot.slane %v2092, 2
        %v2353 = vsel %vm642, %v2352, %v2351
        %v2354 = vrot.slane %v2093, 1
        %v2355 = vsel %vm645, %v2354, %v2353
        %v2356 = vrot.slane %v2095, 7
        %v2357 = vsel %vm627, %v2356, %v2094
        %v2358 = vrot.slane %v2096, 6
        %v2359 = vsel %vm630, %v2358, %v2357
        %v2360 = vrot.slane %v2097, 5
        %v2361 = vsel %vm633, %v2360, %v2359
        %v2362 = vrot.slane %v2098, 4
        %v2363 = vsel %vm636, %v2362, %v2361
        %v2364 = vrot.slane %v2099, 3
        %v2365 = vsel %vm639, %v2364, %v2363
        %v2366 = vrot.slane %v2100, 2
        %v2367 = vsel %vm642, %v2366, %v2365
        %v2368 = vrot.slane %v2101, 1
        %v2369 = vsel %vm645, %v2368, %v2367
        %v2370 = vrot.slane %v2103, 7
        %v2371 = vsel %vm627, %v2370, %v2102
        %v2372 = vrot.slane %v2104, 6
        %v2373 = vsel %vm630, %v2372, %v2371
        %v2374 = vrot.slane %v2105, 5
        %v2375 = vsel %vm633, %v2374, %v2373
        %v2376 = vrot.slane %v2106, 4
        %v2377 = vsel %vm636, %v2376, %v2375
        %v2378 = vrot.slane %v2107, 3
        %v2379 = vsel %vm639, %v2378, %v2377
        %v2380 = vrot.slane %v2108, 2
        %v2381 = vsel %vm642, %v2380, %v2379
        %v2382 = vrot.slane %v2109, 1
        %v2383 = vsel %vm645, %v2382, %v2381
        %v2384 = vrot.slane %v2111, 7
        %v2385 = vsel %vm627, %v2384, %v2110
        %v2386 = vrot.slane %v2112, 6
        %v2387 = vsel %vm630, %v2386, %v2385
        %v2388 = vrot.slane %v2113, 5
        %v2389 = vsel %vm633, %v2388, %v2387
        %v2390 = vrot.slane %v2114, 4
        %v2391 = vsel %vm636, %v2390, %v2389
        %v2392 = vrot.slane %v2115, 3
        %v2393 = vsel %vm639, %v2392, %v2391
        %v2394 = vrot.slane %v2116, 2
        %v2395 = vsel %vm642, %v2394, %v2393
        %v2396 = vrot.slane %v2117, 1
        %v2397 = vsel %vm645, %v2396, %v2395
        %v2398 = vrot.slane %v2119, 7
        %v2399 = vsel %vm627, %v2398, %v2118
        %v2400 = vrot.slane %v2120, 6
        %v2401 = vsel %vm630, %v2400, %v2399
        %v2402 = vrot.slane %v2121, 5
        %v2403 = vsel %vm633, %v2402, %v2401
        %v2404 = vrot.slane %v2122, 4
        %v2405 = vsel %vm636, %v2404, %v2403
        %v2406 = vrot.slane %v2123, 3
        %v2407 = vsel %vm639, %v2406, %v2405
        %v2408 = vrot.slane %v2124, 2
        %v2409 = vsel %vm642, %v2408, %v2407
        %v2410 = vrot.slane %v2125, 1
        %v2411 = vsel %vm645, %v2410, %v2409
        %v2412 = vrot.slane %v2127, 7
        %v2413 = vsel %vm627, %v2412, %v2126
        %v2414 = vrot.slane %v2128, 6
        %v2415 = vsel %vm630, %v2414, %v2413
        %v2416 = vrot.slane %v2129, 5
        %v2417 = vsel %vm633, %v2416, %v2415
        %v2418 = vrot.slane %v2130, 4
        %v2419 = vsel %vm636, %v2418, %v2417
        %v2420 = vrot.slane %v2131, 3
        %v2421 = vsel %vm639, %v2420, %v2419
        %v2422 = vrot.slane %v2132, 2
        %v2423 = vsel %vm642, %v2422, %v2421
        %v2424 = vrot.slane %v2133, 1
        %v2425 = vsel %vm645, %v2424, %v2423
        %v2426 = vrot.slane %v2135, 7
        %v2427 = vsel %vm627, %v2426, %v2134
        %v2428 = vrot.slane %v2136, 6
        %v2429 = vsel %vm630, %v2428, %v2427
        %v2430 = vrot.slane %v2137, 5
        %v2431 = vsel %vm633, %v2430, %v2429
        %v2432 = vrot.slane %v2138, 4
        %v2433 = vsel %vm636, %v2432, %v2431
        %v2434 = vrot.slane %v2139, 3
        %v2435 = vsel %vm639, %v2434, %v2433
        %v2436 = vrot.slane %v2140, 2
        %v2437 = vsel %vm642, %v2436, %v2435
        %v2438 = vrot.slane %v2141, 1
        %v2439 = vsel %vm645, %v2438, %v2437
        %v2440 = vrot.slane %v2143, 7
        %v2441 = vsel %vm627, %v2440, %v2142
        %v2442 = vrot.slane %v2144, 6
        %v2443 = vsel %vm630, %v2442, %v2441
        %v2444 = vrot.slane %v2145, 5
        %v2445 = vsel %vm633, %v2444, %v2443
        %v2446 = vrot.slane %v2146, 4
        %v2447 = vsel %vm636, %v2446, %v2445
        %v2448 = vrot.slane %v2147, 3
        %v2449 = vsel %vm639, %v2448, %v2447
        %v2450 = vrot.slane %v2148, 2
        %v2451 = vsel %vm642, %v2450, %v2449
        %v2452 = vrot.slane %v2149, 1
        %v2453 = vsel %vm645, %v2452, %v2451
        %v2454 = vrot.slane %v2151, 7
        %v2455 = vsel %vm627, %v2454, %v2150
        %v2456 = vrot.slane %v2152, 6
        %v2457 = vsel %vm630, %v2456, %v2455
        %v2458 = vrot.slane %v2153, 5
        %v2459 = vsel %vm633, %v2458, %v2457
        %v2460 = vrot.slane %v2154, 4
        %v2461 = vsel %vm636, %v2460, %v2459
        %v2462 = vrot.slane %v2155, 3
        %v2463 = vsel %vm639, %v2462, %v2461
        %v2464 = vrot.slane %v2156, 2
        %v2465 = vsel %vm642, %v2464, %v2463
        %v2466 = vrot.slane %v2157, 1
        %v2467 = vsel %vm645, %v2466, %v2465
        %v2468 = vrot.slane %v2159, 7
        %v2469 = vsel %vm627, %v2468, %v2158
        %v2470 = vrot.slane %v2160, 6
        %v2471 = vsel %vm630, %v2470, %v2469
        %v2472 = vrot.slane %v2161, 5
        %v2473 = vsel %vm633, %v2472, %v2471
        %v2474 = vrot.slane %v2162, 4
        %v2475 = vsel %vm636, %v2474, %v2473
        %v2476 = vrot.slane %v2163, 3
        %v2477 = vsel %vm639, %v2476, %v2475
        %v2478 = vrot.slane %v2164, 2
        %v2479 = vsel %vm642, %v2478, %v2477
        %v2480 = vrot.slane %v2165, 1
        %v2481 = vsel %vm645, %v2480, %v2479
        %v2482 = vrot.slane %v2167, 7
        %v2483 = vsel %vm627, %v2482, %v2166
        %v2484 = vrot.slane %v2168, 6
        %v2485 = vsel %vm630, %v2484, %v2483
        %v2486 = vrot.slane %v2169, 5
        %v2487 = vsel %vm633, %v2486, %v2485
        %v2488 = vrot.slane %v2170, 4
        %v2489 = vsel %vm636, %v2488, %v2487
        %v2490 = vrot.slane %v2171, 3
        %v2491 = vsel %vm639, %v2490, %v2489
        %v2492 = vrot.slane %v2172, 2
        %v2493 = vsel %vm642, %v2492, %v2491
        %v2494 = vrot.slane %v2173, 1
        %v2495 = vsel %vm645, %v2494, %v2493
        %v2496 = vrot.slane %v2175, 7
        %v2497 = vsel %vm627, %v2496, %v2174
        %v2498 = vrot.slane %v2176, 6
        %v2499 = vsel %vm630, %v2498, %v2497
        %v2500 = vrot.slane %v2177, 5
        %v2501 = vsel %vm633, %v2500, %v2499
        %v2502 = vrot.slane %v2178, 4
        %v2503 = vsel %vm636, %v2502, %v2501
        %v2504 = vrot.slane %v2179, 3
        %v2505 = vsel %vm639, %v2504, %v2503
        %v2506 = vrot.slane %v2180, 2
        %v2507 = vsel %vm642, %v2506, %v2505
        %v2508 = vrot.slane %v2181, 1
        %v2509 = vsel %vm645, %v2508, %v2507
        %v2510 = vrot.slane %v2183, 7
        %v2511 = vsel %vm627, %v2510, %v2182
        %v2512 = vrot.slane %v2184, 6
        %v2513 = vsel %vm630, %v2512, %v2511
        %v2514 = vrot.slane %v2185, 5
        %v2515 = vsel %vm633, %v2514, %v2513
        %v2516 = vrot.slane %v2186, 4
        %v2517 = vsel %vm636, %v2516, %v2515
        %v2518 = vrot.slane %v2187, 3
        %v2519 = vsel %vm639, %v2518, %v2517
        %v2520 = vrot.slane %v2188, 2
        %v2521 = vsel %vm642, %v2520, %v2519
        %v2522 = vrot.slane %v2189, 1
        %v2523 = vsel %vm645, %v2522, %v2521
        %v2524 = vrot.slane %v2191, 7
        %v2525 = vsel %vm627, %v2524, %v2190
        %v2526 = vrot.slane %v2192, 6
        %v2527 = vsel %vm630, %v2526, %v2525
        %v2528 = vrot.slane %v2193, 5
        %v2529 = vsel %vm633, %v2528, %v2527
        %v2530 = vrot.slane %v2194, 4
        %v2531 = vsel %vm636, %v2530, %v2529
        %v2532 = vrot.slane %v2195, 3
        %v2533 = vsel %vm639, %v2532, %v2531
        %v2534 = vrot.slane %v2196, 2
        %v2535 = vsel %vm642, %v2534, %v2533
        %v2536 = vrot.slane %v2197, 1
        %v2537 = vsel %vm645, %v2536, %v2535
        %v2538 = vrot.slane %v2199, 7
        %v2539 = vsel %vm627, %v2538, %v2198
        %v2540 = vrot.slane %v2200, 6
        %v2541 = vsel %vm630, %v2540, %v2539
        %v2542 = vrot.slane %v2201, 5
        %v2543 = vsel %vm633, %v2542, %v2541
        %v2544 = vrot.slane %v2202, 4
        %v2545 = vsel %vm636, %v2544, %v2543
        %v2546 = vrot.slane %v2203, 3
        %v2547 = vsel %vm639, %v2546, %v2545
        %v2548 = vrot.slane %v2204, 2
        %v2549 = vsel %vm642, %v2548, %v2547
        %v2550 = vrot.slane %v2205, 1
        %v2551 = vsel %vm645, %v2550, %v2549
        %v2552 = vrot.slane %v2207, 7
        %v2553 = vsel %vm627, %v2552, %v2206
        %v2554 = vrot.slane %v2208, 6
        %v2555 = vsel %vm630, %v2554, %v2553
        %v2556 = vrot.slane %v2209, 5
        %v2557 = vsel %vm633, %v2556, %v2555
        %v2558 = vrot.slane %v2210, 4
        %v2559 = vsel %vm636, %v2558, %v2557
        %v2560 = vrot.slane %v2211, 3
        %v2561 = vsel %vm639, %v2560, %v2559
        %v2562 = vrot.slane %v2212, 2
        %v2563 = vsel %vm642, %v2562, %v2561
        %v2564 = vrot.slane %v2213, 1
        %v2565 = vsel %vm645, %v2564, %v2563
        %2582 = vmatprep.subr.mxu0 0.0
        %2583 = vmatpush1.xpose.msra.mxu0 %v2565
        %2584 = vmatprep.subr.mxu0 0.0
        %2585 = vmatpush1.xpose.msra.mxu0 %v2551
        %2586 = vmatprep.subr.mxu0 0.0
        %2587 = vmatpush1.xpose.msra.mxu0 %v2537
        %2588 = vmatprep.subr.mxu0 0.0
        %2589 = vmatpush1.xpose.msra.mxu0 %v2523
        %2590 = vmatprep.subr.mxu0 0.0
        %2591 = vmatpush1.xpose.msra.mxu0 %v2509
        %2592 = vmatprep.subr.mxu0 0.0
        %2593 = vmatpush1.xpose.msra.mxu0 %v2495
        %2594 = vmatprep.subr.mxu0 0.0
        %2595 = vmatpush1.xpose.msra.mxu0 %v2481
        %2596 = vmatprep.subr.mxu0 0.0
        %2597 = vmatpush1.xpose.msra.mxu0 %v2467
        %2598 = vmatprep.subr.mxu0 0.0
        %2599 = vmatpush1.xpose.msra.mxu0 %v2453
        %2600 = vmatprep.subr.mxu0 0.0
        %2601 = vmatpush1.xpose.msra.mxu0 %v2439
        %2602 = vmatprep.subr.mxu0 0.0
        %2603 = vmatpush1.xpose.msra.mxu0 %v2425
        %2604 = vmatprep.subr.mxu0 0.0
        %2605 = vmatpush1.xpose.msra.mxu0 %v2411
        %2606 = vmatprep.subr.mxu0 0.0
        %2607 = vmatpush1.xpose.msra.mxu0 %v2397
        %2608 = vmatprep.subr.mxu0 0.0
        %2609 = vmatpush1.xpose.msra.mxu0 %v2383
        %2610 = vmatprep.subr.mxu0 0.0
        %2611 = vmatpush1.xpose.msra.mxu0 %v2369
        %2612 = vmatprep.subr.mxu0 0.0
        %2613 = vmatpush1.xpose.msra.mxu0 %v2355
        %2614 = vmatprep.subr.mxu0 0.0
        %2615 = vmatpush2.xpose.msra.mxu0 0.0
        %2616 = vmatprep.subr.mxu0 0.0
        %2617 = vmatpush2.xpose.msra.mxu0 0.0
        %2618 = vmatprep.subr.mxu0 0.0
        %2619 = vmatpush2.xpose.msra.mxu0 0.0
        %2620 = vmatprep.subr.mxu0 0.0
        %2621 = vmatpush2.xpose.msra.mxu0 0.0
        %2622 = vmatprep.subr.mxu0 0.0
        %2623 = vmatpush2.xpose.msra.mxu0 0.0
        %2624 = vmatprep.subr.mxu0 0.0
        %2625 = vmatpush2.xpose.msra.mxu0 0.0
        %2626 = vmatprep.subr.mxu0 0.0
        %2627 = vmatpush2.xpose.msra.mxu0 0.0
        %2628 = vmatprep.subr.mxu0 0.0
        %2629 = vmatpush2.xpose.msra.mxu0 0.0
        %2630 = vmatprep.subr.mxu0 0.0
        %2631 = vmatpush2.xpose.msra.mxu0 0.0
        %2632 = vmatprep.subr.mxu0 0.0
        %2633 = vmatpush2.xpose.msra.mxu0 0.0
        %2634 = vmatprep.subr.mxu0 0.0
        %2635 = vmatpush2.xpose.msra.mxu0 0.0
        %2636 = vmatprep.subr.mxu0 0.0
        %2637 = vmatpush2.xpose.msra.mxu0 0.0
        %2638 = vmatprep.subr.mxu0 0.0
        %2639 = vmatpush2.xpose.msra.mxu0 0.0
        %2640 = vmatprep.subr.mxu0 0.0
        %2641 = vmatpush2.xpose.msra.mxu0 0.0
        %2642 = vmatprep.subr.mxu0 0.0
        %2643 = vmatpush2.xpose.msra.mxu0 0.0
        %2644 = vmatprep.subr.mxu0 0.0
        %2645 = vmatpush2.xpose.msra.mxu0 0.0
        %2646 = vmatprep.mubr.f32.mxu0 0.0
        %2647 = vmatmul.mubr.f32.gmra.mxu0 %v368
        %v2648 = vpop.f32.mrf.mxu0
        %v2649 = vadd.f32 0.0, %v2648
        %v2650 = vpop.f32.mrf.mxu0
        %2651 = vdwg.mxu0
        %s2652 = sadd.s32 %s369, 3
        %s2653 = smul.u32 %s2652, 8
        %s2654 = scalar_lea.vmem [#allocation2], %s2653
        %2655 = vst [vmem:[%s2654] sm:$0xff] %v2649
        %v2656 = vld [vmem:[%s323 + $0x4] sm:$0x1]
        %v2657 = vld [vmem:[%s323 + $0xc] sm:$0x1]
        %v2658 = vld [vmem:[%s323 + $0x14] sm:$0x1]
        %v2659 = vld [vmem:[%s323 + $0x1c] sm:$0x1]
        %v2660 = vld [vmem:[%s323 + $0x24] sm:$0x1]
        %v2661 = vld [vmem:[%s323 + $0x2c] sm:$0x1]
        %v2662 = vld [vmem:[%s323 + $0x34] sm:$0x1]
        %v2663 = vld [vmem:[%s323 + $0x3c] sm:$0x1]
        %v2664 = vld [vmem:[%s323 + $0x44] sm:$0x1]
        %v2665 = vld [vmem:[%s323 + $0x4c] sm:$0x1]
        %v2666 = vld [vmem:[%s323 + $0x54] sm:$0x1]
        %v2667 = vld [vmem:[%s323 + $0x5c] sm:$0x1]
        %v2668 = vld [vmem:[%s323 + $0x64] sm:$0x1]
        %v2669 = vld [vmem:[%s323 + $0x6c] sm:$0x1]
        %v2670 = vld [vmem:[%s323 + $0x74] sm:$0x1]
        %v2671 = vld [vmem:[%s323 + $0x7c] sm:$0x1]
        %v2672 = vld [vmem:[%s323 + $0x84] sm:$0x1]
        %v2673 = vld [vmem:[%s323 + $0x8c] sm:$0x1]
        %v2674 = vld [vmem:[%s323 + $0x94] sm:$0x1]
        %v2675 = vld [vmem:[%s323 + $0x9c] sm:$0x1]
        %v2676 = vld [vmem:[%s323 + $0xa4] sm:$0x1]
        %v2677 = vld [vmem:[%s323 + $0xac] sm:$0x1]
        %v2678 = vld [vmem:[%s323 + $0xb4] sm:$0x1]
        %v2679 = vld [vmem:[%s323 + $0xbc] sm:$0x1]
        %v2680 = vld [vmem:[%s323 + $0xc4] sm:$0x1]
        %v2681 = vld [vmem:[%s323 + $0xcc] sm:$0x1]
        %v2682 = vld [vmem:[%s323 + $0xd4] sm:$0x1]
        %v2683 = vld [vmem:[%s323 + $0xdc] sm:$0x1]
        %v2684 = vld [vmem:[%s323 + $0xe4] sm:$0x1]
        %v2685 = vld [vmem:[%s323 + $0xec] sm:$0x1]
        %v2686 = vld [vmem:[%s323 + $0xf4] sm:$0x1]
        %v2687 = vld [vmem:[%s323 + $0xfc] sm:$0x1]
        %v2688 = vld [vmem:[%s323 + $0x104] sm:$0x1]
        %v2689 = vld [vmem:[%s323 + $0x10c] sm:$0x1]
        %v2690 = vld [vmem:[%s323 + $0x114] sm:$0x1]
        %v2691 = vld [vmem:[%s323 + $0x11c] sm:$0x1]
        %v2692 = vld [vmem:[%s323 + $0x124] sm:$0x1]
        %v2693 = vld [vmem:[%s323 + $0x12c] sm:$0x1]
        %v2694 = vld [vmem:[%s323 + $0x134] sm:$0x1]
        %v2695 = vld [vmem:[%s323 + $0x13c] sm:$0x1]
        %v2696 = vld [vmem:[%s323 + $0x144] sm:$0x1]
        %v2697 = vld [vmem:[%s323 + $0x14c] sm:$0x1]
        %v2698 = vld [vmem:[%s323 + $0x154] sm:$0x1]
        %v2699 = vld [vmem:[%s323 + $0x15c] sm:$0x1]
        %v2700 = vld [vmem:[%s323 + $0x164] sm:$0x1]
        %v2701 = vld [vmem:[%s323 + $0x16c] sm:$0x1]
        %v2702 = vld [vmem:[%s323 + $0x174] sm:$0x1]
        %v2703 = vld [vmem:[%s323 + $0x17c] sm:$0x1]
        %v2704 = vld [vmem:[%s323 + $0x184] sm:$0x1]
        %v2705 = vld [vmem:[%s323 + $0x18c] sm:$0x1]
        %v2706 = vld [vmem:[%s323 + $0x194] sm:$0x1]
        %v2707 = vld [vmem:[%s323 + $0x19c] sm:$0x1]
        %v2708 = vld [vmem:[%s323 + $0x1a4] sm:$0x1]
        %v2709 = vld [vmem:[%s323 + $0x1ac] sm:$0x1]
        %v2710 = vld [vmem:[%s323 + $0x1b4] sm:$0x1]
        %v2711 = vld [vmem:[%s323 + $0x1bc] sm:$0x1]
        %v2712 = vld [vmem:[%s323 + $0x1c4] sm:$0x1]
        %v2713 = vld [vmem:[%s323 + $0x1cc] sm:$0x1]
        %v2714 = vld [vmem:[%s323 + $0x1d4] sm:$0x1]
        %v2715 = vld [vmem:[%s323 + $0x1dc] sm:$0x1]
        %v2716 = vld [vmem:[%s323 + $0x1e4] sm:$0x1]
        %v2717 = vld [vmem:[%s323 + $0x1ec] sm:$0x1]
        %v2718 = vld [vmem:[%s323 + $0x1f4] sm:$0x1]
        %v2719 = vld [vmem:[%s323 + $0x1fc] sm:$0x1]
        %v2720 = vld [vmem:[%s323 + $0x204] sm:$0x1]
        %v2721 = vld [vmem:[%s323 + $0x20c] sm:$0x1]
        %v2722 = vld [vmem:[%s323 + $0x214] sm:$0x1]
        %v2723 = vld [vmem:[%s323 + $0x21c] sm:$0x1]
        %v2724 = vld [vmem:[%s323 + $0x224] sm:$0x1]
        %v2725 = vld [vmem:[%s323 + $0x22c] sm:$0x1]
        %v2726 = vld [vmem:[%s323 + $0x234] sm:$0x1]
        %v2727 = vld [vmem:[%s323 + $0x23c] sm:$0x1]
        %v2728 = vld [vmem:[%s323 + $0x244] sm:$0x1]
        %v2729 = vld [vmem:[%s323 + $0x24c] sm:$0x1]
        %v2730 = vld [vmem:[%s323 + $0x254] sm:$0x1]
        %v2731 = vld [vmem:[%s323 + $0x25c] sm:$0x1]
        %v2732 = vld [vmem:[%s323 + $0x264] sm:$0x1]
        %v2733 = vld [vmem:[%s323 + $0x26c] sm:$0x1]
        %v2734 = vld [vmem:[%s323 + $0x274] sm:$0x1]
        %v2735 = vld [vmem:[%s323 + $0x27c] sm:$0x1]
        %v2736 = vld [vmem:[%s323 + $0x284] sm:$0x1]
        %v2737 = vld [vmem:[%s323 + $0x28c] sm:$0x1]
        %v2738 = vld [vmem:[%s323 + $0x294] sm:$0x1]
        %v2739 = vld [vmem:[%s323 + $0x29c] sm:$0x1]
        %v2740 = vld [vmem:[%s323 + $0x2a4] sm:$0x1]
        %v2741 = vld [vmem:[%s323 + $0x2ac] sm:$0x1]
        %v2742 = vld [vmem:[%s323 + $0x2b4] sm:$0x1]
        %v2743 = vld [vmem:[%s323 + $0x2bc] sm:$0x1]
        %v2744 = vld [vmem:[%s323 + $0x2c4] sm:$0x1]
        %v2745 = vld [vmem:[%s323 + $0x2cc] sm:$0x1]
        %v2746 = vld [vmem:[%s323 + $0x2d4] sm:$0x1]
        %v2747 = vld [vmem:[%s323 + $0x2dc] sm:$0x1]
        %v2748 = vld [vmem:[%s323 + $0x2e4] sm:$0x1]
        %v2749 = vld [vmem:[%s323 + $0x2ec] sm:$0x1]
        %v2750 = vld [vmem:[%s323 + $0x2f4] sm:$0x1]
        %v2751 = vld [vmem:[%s323 + $0x2fc] sm:$0x1]
        %v2752 = vld [vmem:[%s323 + $0x304] sm:$0x1]
        %v2753 = vld [vmem:[%s323 + $0x30c] sm:$0x1]
        %v2754 = vld [vmem:[%s323 + $0x314] sm:$0x1]
        %v2755 = vld [vmem:[%s323 + $0x31c] sm:$0x1]
        %v2756 = vld [vmem:[%s323 + $0x324] sm:$0x1]
        %v2757 = vld [vmem:[%s323 + $0x32c] sm:$0x1]
        %v2758 = vld [vmem:[%s323 + $0x334] sm:$0x1]
        %v2759 = vld [vmem:[%s323 + $0x33c] sm:$0x1]
        %v2760 = vld [vmem:[%s323 + $0x344] sm:$0x1]
        %v2761 = vld [vmem:[%s323 + $0x34c] sm:$0x1]
        %v2762 = vld [vmem:[%s323 + $0x354] sm:$0x1]
        %v2763 = vld [vmem:[%s323 + $0x35c] sm:$0x1]
        %v2764 = vld [vmem:[%s323 + $0x364] sm:$0x1]
        %v2765 = vld [vmem:[%s323 + $0x36c] sm:$0x1]
        %v2766 = vld [vmem:[%s323 + $0x374] sm:$0x1]
        %v2767 = vld [vmem:[%s323 + $0x37c] sm:$0x1]
        %v2768 = vld [vmem:[%s323 + $0x384] sm:$0x1]
        %v2769 = vld [vmem:[%s323 + $0x38c] sm:$0x1]
        %v2770 = vld [vmem:[%s323 + $0x394] sm:$0x1]
        %v2771 = vld [vmem:[%s323 + $0x39c] sm:$0x1]
        %v2772 = vld [vmem:[%s323 + $0x3a4] sm:$0x1]
        %v2773 = vld [vmem:[%s323 + $0x3ac] sm:$0x1]
        %v2774 = vld [vmem:[%s323 + $0x3b4] sm:$0x1]
        %v2775 = vld [vmem:[%s323 + $0x3bc] sm:$0x1]
        %v2776 = vld [vmem:[%s323 + $0x3c4] sm:$0x1]
        %v2777 = vld [vmem:[%s323 + $0x3cc] sm:$0x1]
        %v2778 = vld [vmem:[%s323 + $0x3d4] sm:$0x1]
        %v2779 = vld [vmem:[%s323 + $0x3dc] sm:$0x1]
        %v2780 = vld [vmem:[%s323 + $0x3e4] sm:$0x1]
        %v2781 = vld [vmem:[%s323 + $0x3ec] sm:$0x1]
        %v2782 = vld [vmem:[%s323 + $0x3f4] sm:$0x1]
        %v2783 = vld [vmem:[%s323 + $0x3fc] sm:$0x1]
        %v2912 = vrot.slane %v2657, 7
        %v2913 = vsel %vm627, %v2912, %v2656
        %v2914 = vrot.slane %v2658, 6
        %v2915 = vsel %vm630, %v2914, %v2913
        %v2916 = vrot.slane %v2659, 5
        %v2917 = vsel %vm633, %v2916, %v2915
        %v2918 = vrot.slane %v2660, 4
        %v2919 = vsel %vm636, %v2918, %v2917
        %v2920 = vrot.slane %v2661, 3
        %v2921 = vsel %vm639, %v2920, %v2919
        %v2922 = vrot.slane %v2662, 2
        %v2923 = vsel %vm642, %v2922, %v2921
        %v2924 = vrot.slane %v2663, 1
        %v2925 = vsel %vm645, %v2924, %v2923
        %v2926 = vrot.slane %v2665, 7
        %v2927 = vsel %vm627, %v2926, %v2664
        %v2928 = vrot.slane %v2666, 6
        %v2929 = vsel %vm630, %v2928, %v2927
        %v2930 = vrot.slane %v2667, 5
        %v2931 = vsel %vm633, %v2930, %v2929
        %v2932 = vrot.slane %v2668, 4
        %v2933 = vsel %vm636, %v2932, %v2931
        %v2934 = vrot.slane %v2669, 3
        %v2935 = vsel %vm639, %v2934, %v2933
        %v2936 = vrot.slane %v2670, 2
        %v2937 = vsel %vm642, %v2936, %v2935
        %v2938 = vrot.slane %v2671, 1
        %v2939 = vsel %vm645, %v2938, %v2937
        %v2940 = vrot.slane %v2673, 7
        %v2941 = vsel %vm627, %v2940, %v2672
        %v2942 = vrot.slane %v2674, 6
        %v2943 = vsel %vm630, %v2942, %v2941
        %v2944 = vrot.slane %v2675, 5
        %v2945 = vsel %vm633, %v2944, %v2943
        %v2946 = vrot.slane %v2676, 4
        %v2947 = vsel %vm636, %v2946, %v2945
        %v2948 = vrot.slane %v2677, 3
        %v2949 = vsel %vm639, %v2948, %v2947
        %v2950 = vrot.slane %v2678, 2
        %v2951 = vsel %vm642, %v2950, %v2949
        %v2952 = vrot.slane %v2679, 1
        %v2953 = vsel %vm645, %v2952, %v2951
        %v2954 = vrot.slane %v2681, 7
        %v2955 = vsel %vm627, %v2954, %v2680
        %v2956 = vrot.slane %v2682, 6
        %v2957 = vsel %vm630, %v2956, %v2955
        %v2958 = vrot.slane %v2683, 5
        %v2959 = vsel %vm633, %v2958, %v2957
        %v2960 = vrot.slane %v2684, 4
        %v2961 = vsel %vm636, %v2960, %v2959
        %v2962 = vrot.slane %v2685, 3
        %v2963 = vsel %vm639, %v2962, %v2961
        %v2964 = vrot.slane %v2686, 2
        %v2965 = vsel %vm642, %v2964, %v2963
        %v2966 = vrot.slane %v2687, 1
        %v2967 = vsel %vm645, %v2966, %v2965
        %v2968 = vrot.slane %v2689, 7
        %v2969 = vsel %vm627, %v2968, %v2688
        %v2970 = vrot.slane %v2690, 6
        %v2971 = vsel %vm630, %v2970, %v2969
        %v2972 = vrot.slane %v2691, 5
        %v2973 = vsel %vm633, %v2972, %v2971
        %v2974 = vrot.slane %v2692, 4
        %v2975 = vsel %vm636, %v2974, %v2973
        %v2976 = vrot.slane %v2693, 3
        %v2977 = vsel %vm639, %v2976, %v2975
        %v2978 = vrot.slane %v2694, 2
        %v2979 = vsel %vm642, %v2978, %v2977
        %v2980 = vrot.slane %v2695, 1
        %v2981 = vsel %vm645, %v2980, %v2979
        %v2982 = vrot.slane %v2697, 7
        %v2983 = vsel %vm627, %v2982, %v2696
        %v2984 = vrot.slane %v2698, 6
        %v2985 = vsel %vm630, %v2984, %v2983
        %v2986 = vrot.slane %v2699, 5
        %v2987 = vsel %vm633, %v2986, %v2985
        %v2988 = vrot.slane %v2700, 4
        %v2989 = vsel %vm636, %v2988, %v2987
        %v2990 = vrot.slane %v2701, 3
        %v2991 = vsel %vm639, %v2990, %v2989
        %v2992 = vrot.slane %v2702, 2
        %v2993 = vsel %vm642, %v2992, %v2991
        %v2994 = vrot.slane %v2703, 1
        %v2995 = vsel %vm645, %v2994, %v2993
        %v2996 = vrot.slane %v2705, 7
        %v2997 = vsel %vm627, %v2996, %v2704
        %v2998 = vrot.slane %v2706, 6
        %v2999 = vsel %vm630, %v2998, %v2997
        %v3000 = vrot.slane %v2707, 5
        %v3001 = vsel %vm633, %v3000, %v2999
        %v3002 = vrot.slane %v2708, 4
        %v3003 = vsel %vm636, %v3002, %v3001
        %v3004 = vrot.slane %v2709, 3
        %v3005 = vsel %vm639, %v3004, %v3003
        %v3006 = vrot.slane %v2710, 2
        %v3007 = vsel %vm642, %v3006, %v3005
        %v3008 = vrot.slane %v2711, 1
        %v3009 = vsel %vm645, %v3008, %v3007
        %v3010 = vrot.slane %v2713, 7
        %v3011 = vsel %vm627, %v3010, %v2712
        %v3012 = vrot.slane %v2714, 6
        %v3013 = vsel %vm630, %v3012, %v3011
        %v3014 = vrot.slane %v2715, 5
        %v3015 = vsel %vm633, %v3014, %v3013
        %v3016 = vrot.slane %v2716, 4
        %v3017 = vsel %vm636, %v3016, %v3015
        %v3018 = vrot.slane %v2717, 3
        %v3019 = vsel %vm639, %v3018, %v3017
        %v3020 = vrot.slane %v2718, 2
        %v3021 = vsel %vm642, %v3020, %v3019
        %v3022 = vrot.slane %v2719, 1
        %v3023 = vsel %vm645, %v3022, %v3021
        %v3024 = vrot.slane %v2721, 7
        %v3025 = vsel %vm627, %v3024, %v2720
        %v3026 = vrot.slane %v2722, 6
        %v3027 = vsel %vm630, %v3026, %v3025
        %v3028 = vrot.slane %v2723, 5
        %v3029 = vsel %vm633, %v3028, %v3027
        %v3030 = vrot.slane %v2724, 4
        %v3031 = vsel %vm636, %v3030, %v3029
        %v3032 = vrot.slane %v2725, 3
        %v3033 = vsel %vm639, %v3032, %v3031
        %v3034 = vrot.slane %v2726, 2
        %v3035 = vsel %vm642, %v3034, %v3033
        %v3036 = vrot.slane %v2727, 1
        %v3037 = vsel %vm645, %v3036, %v3035
        %v3038 = vrot.slane %v2729, 7
        %v3039 = vsel %vm627, %v3038, %v2728
        %v3040 = vrot.slane %v2730, 6
        %v3041 = vsel %vm630, %v3040, %v3039
        %v3042 = vrot.slane %v2731, 5
        %v3043 = vsel %vm633, %v3042, %v3041
        %v3044 = vrot.slane %v2732, 4
        %v3045 = vsel %vm636, %v3044, %v3043
        %v3046 = vrot.slane %v2733, 3
        %v3047 = vsel %vm639, %v3046, %v3045
        %v3048 = vrot.slane %v2734, 2
        %v3049 = vsel %vm642, %v3048, %v3047
        %v3050 = vrot.slane %v2735, 1
        %v3051 = vsel %vm645, %v3050, %v3049
        %v3052 = vrot.slane %v2737, 7
        %v3053 = vsel %vm627, %v3052, %v2736
        %v3054 = vrot.slane %v2738, 6
        %v3055 = vsel %vm630, %v3054, %v3053
        %v3056 = vrot.slane %v2739, 5
        %v3057 = vsel %vm633, %v3056, %v3055
        %v3058 = vrot.slane %v2740, 4
        %v3059 = vsel %vm636, %v3058, %v3057
        %v3060 = vrot.slane %v2741, 3
        %v3061 = vsel %vm639, %v3060, %v3059
        %v3062 = vrot.slane %v2742, 2
        %v3063 = vsel %vm642, %v3062, %v3061
        %v3064 = vrot.slane %v2743, 1
        %v3065 = vsel %vm645, %v3064, %v3063
        %v3066 = vrot.slane %v2745, 7
        %v3067 = vsel %vm627, %v3066, %v2744
        %v3068 = vrot.slane %v2746, 6
        %v3069 = vsel %vm630, %v3068, %v3067
        %v3070 = vrot.slane %v2747, 5
        %v3071 = vsel %vm633, %v3070, %v3069
        %v3072 = vrot.slane %v2748, 4
        %v3073 = vsel %vm636, %v3072, %v3071
        %v3074 = vrot.slane %v2749, 3
        %v3075 = vsel %vm639, %v3074, %v3073
        %v3076 = vrot.slane %v2750, 2
        %v3077 = vsel %vm642, %v3076, %v3075
        %v3078 = vrot.slane %v2751, 1
        %v3079 = vsel %vm645, %v3078, %v3077
        %v3080 = vrot.slane %v2753, 7
        %v3081 = vsel %vm627, %v3080, %v2752
        %v3082 = vrot.slane %v2754, 6
        %v3083 = vsel %vm630, %v3082, %v3081
        %v3084 = vrot.slane %v2755, 5
        %v3085 = vsel %vm633, %v3084, %v3083
        %v3086 = vrot.slane %v2756, 4
        %v3087 = vsel %vm636, %v3086, %v3085
        %v3088 = vrot.slane %v2757, 3
        %v3089 = vsel %vm639, %v3088, %v3087
        %v3090 = vrot.slane %v2758, 2
        %v3091 = vsel %vm642, %v3090, %v3089
        %v3092 = vrot.slane %v2759, 1
        %v3093 = vsel %vm645, %v3092, %v3091
        %v3094 = vrot.slane %v2761, 7
        %v3095 = vsel %vm627, %v3094, %v2760
        %v3096 = vrot.slane %v2762, 6
        %v3097 = vsel %vm630, %v3096, %v3095
        %v3098 = vrot.slane %v2763, 5
        %v3099 = vsel %vm633, %v3098, %v3097
        %v3100 = vrot.slane %v2764, 4
        %v3101 = vsel %vm636, %v3100, %v3099
        %v3102 = vrot.slane %v2765, 3
        %v3103 = vsel %vm639, %v3102, %v3101
        %v3104 = vrot.slane %v2766, 2
        %v3105 = vsel %vm642, %v3104, %v3103
        %v3106 = vrot.slane %v2767, 1
        %v3107 = vsel %vm645, %v3106, %v3105
        %v3108 = vrot.slane %v2769, 7
        %v3109 = vsel %vm627, %v3108, %v2768
        %v3110 = vrot.slane %v2770, 6
        %v3111 = vsel %vm630, %v3110, %v3109
        %v3112 = vrot.slane %v2771, 5
        %v3113 = vsel %vm633, %v3112, %v3111
        %v3114 = vrot.slane %v2772, 4
        %v3115 = vsel %vm636, %v3114, %v3113
        %v3116 = vrot.slane %v2773, 3
        %v3117 = vsel %vm639, %v3116, %v3115
        %v3118 = vrot.slane %v2774, 2
        %v3119 = vsel %vm642, %v3118, %v3117
        %v3120 = vrot.slane %v2775, 1
        %v3121 = vsel %vm645, %v3120, %v3119
        %v3122 = vrot.slane %v2777, 7
        %v3123 = vsel %vm627, %v3122, %v2776
        %v3124 = vrot.slane %v2778, 6
        %v3125 = vsel %vm630, %v3124, %v3123
        %v3126 = vrot.slane %v2779, 5
        %v3127 = vsel %vm633, %v3126, %v3125
        %v3128 = vrot.slane %v2780, 4
        %v3129 = vsel %vm636, %v3128, %v3127
        %v3130 = vrot.slane %v2781, 3
        %v3131 = vsel %vm639, %v3130, %v3129
        %v3132 = vrot.slane %v2782, 2
        %v3133 = vsel %vm642, %v3132, %v3131
        %v3134 = vrot.slane %v2783, 1
        %v3135 = vsel %vm645, %v3134, %v3133
        %3152 = vmatprep.subr.mxu0 0.0
        %3153 = vmatpush1.xpose.msra.mxu0 %v3135
        %3154 = vmatprep.subr.mxu0 0.0
        %3155 = vmatpush1.xpose.msra.mxu0 %v3121
        %3156 = vmatprep.subr.mxu0 0.0
        %3157 = vmatpush1.xpose.msra.mxu0 %v3107
        %3158 = vmatprep.subr.mxu0 0.0
        %3159 = vmatpush1.xpose.msra.mxu0 %v3093
        %3160 = vmatprep.subr.mxu0 0.0
        %3161 = vmatpush1.xpose.msra.mxu0 %v3079
        %3162 = vmatprep.subr.mxu0 0.0
        %3163 = vmatpush1.xpose.msra.mxu0 %v3065
        %3164 = vmatprep.subr.mxu0 0.0
        %3165 = vmatpush1.xpose.msra.mxu0 %v3051
        %3166 = vmatprep.subr.mxu0 0.0
        %3167 = vmatpush1.xpose.msra.mxu0 %v3037
        %3168 = vmatprep.subr.mxu0 0.0
        %3169 = vmatpush1.xpose.msra.mxu0 %v3023
        %3170 = vmatprep.subr.mxu0 0.0
        %3171 = vmatpush1.xpose.msra.mxu0 %v3009
        %3172 = vmatprep.subr.mxu0 0.0
        %3173 = vmatpush1.xpose.msra.mxu0 %v2995
        %3174 = vmatprep.subr.mxu0 0.0
        %3175 = vmatpush1.xpose.msra.mxu0 %v2981
        %3176 = vmatprep.subr.mxu0 0.0
        %3177 = vmatpush1.xpose.msra.mxu0 %v2967
        %3178 = vmatprep.subr.mxu0 0.0
        %3179 = vmatpush1.xpose.msra.mxu0 %v2953
        %3180 = vmatprep.subr.mxu0 0.0
        %3181 = vmatpush1.xpose.msra.mxu0 %v2939
        %3182 = vmatprep.subr.mxu0 0.0
        %3183 = vmatpush1.xpose.msra.mxu0 %v2925
        %3184 = vmatprep.subr.mxu0 0.0
        %3185 = vmatpush2.xpose.msra.mxu0 0.0
        %3186 = vmatprep.subr.mxu0 0.0
        %3187 = vmatpush2.xpose.msra.mxu0 0.0
        %3188 = vmatprep.subr.mxu0 0.0
        %3189 = vmatpush2.xpose.msra.mxu0 0.0
        %3190 = vmatprep.subr.mxu0 0.0
        %3191 = vmatpush2.xpose.msra.mxu0 0.0
        %3192 = vmatprep.subr.mxu0 0.0
        %3193 = vmatpush2.xpose.msra.mxu0 0.0
        %3194 = vmatprep.subr.mxu0 0.0
        %3195 = vmatpush2.xpose.msra.mxu0 0.0
        %3196 = vmatprep.subr.mxu0 0.0
        %3197 = vmatpush2.xpose.msra.mxu0 0.0
        %3198 = vmatprep.subr.mxu0 0.0
        %3199 = vmatpush2.xpose.msra.mxu0 0.0
        %3200 = vmatprep.subr.mxu0 0.0
        %3201 = vmatpush2.xpose.msra.mxu0 0.0
        %3202 = vmatprep.subr.mxu0 0.0
        %3203 = vmatpush2.xpose.msra.mxu0 0.0
        %3204 = vmatprep.subr.mxu0 0.0
        %3205 = vmatpush2.xpose.msra.mxu0 0.0
        %3206 = vmatprep.subr.mxu0 0.0
        %3207 = vmatpush2.xpose.msra.mxu0 0.0
        %3208 = vmatprep.subr.mxu0 0.0
        %3209 = vmatpush2.xpose.msra.mxu0 0.0
        %3210 = vmatprep.subr.mxu0 0.0
        %3211 = vmatpush2.xpose.msra.mxu0 0.0
        %3212 = vmatprep.subr.mxu0 0.0
        %3213 = vmatpush2.xpose.msra.mxu0 0.0
        %3214 = vmatprep.subr.mxu0 0.0
        %3215 = vmatpush2.xpose.msra.mxu0 0.0
        %3216 = vmatprep.mubr.f32.mxu0 0.0
        %3217 = vmatmul.mubr.f32.gmra.mxu0 %v368
        %v3218 = vpop.f32.mrf.mxu0
        %v3219 = vadd.f32 0.0, %v3218
        %v3220 = vpop.f32.mrf.mxu0
        %3221 = vdwg.mxu0
        %s3222 = sadd.s32 %s369, 4
        %s3223 = smul.u32 %s3222, 8
        %s3224 = scalar_lea.vmem [#allocation2], %s3223
        %3225 = vst [vmem:[%s3224] sm:$0xff] %v3219
        %v3226 = vld [vmem:[%s323 + $0x5] sm:$0x1]
        %v3227 = vld [vmem:[%s323 + $0xd] sm:$0x1]
        %v3228 = vld [vmem:[%s323 + $0x15] sm:$0x1]
        %v3229 = vld [vmem:[%s323 + $0x1d] sm:$0x1]
        %v3230 = vld [vmem:[%s323 + $0x25] sm:$0x1]
        %v3231 = vld [vmem:[%s323 + $0x2d] sm:$0x1]
        %v3232 = vld [vmem:[%s323 + $0x35] sm:$0x1]
        %v3233 = vld [vmem:[%s323 + $0x3d] sm:$0x1]
        %v3234 = vld [vmem:[%s323 + $0x45] sm:$0x1]
        %v3235 = vld [vmem:[%s323 + $0x4d] sm:$0x1]
        %v3236 = vld [vmem:[%s323 + $0x55] sm:$0x1]
        %v3237 = vld [vmem:[%s323 + $0x5d] sm:$0x1]
        %v3238 = vld [vmem:[%s323 + $0x65] sm:$0x1]
        %v3239 = vld [vmem:[%s323 + $0x6d] sm:$0x1]
        %v3240 = vld [vmem:[%s323 + $0x75] sm:$0x1]
        %v3241 = vld [vmem:[%s323 + $0x7d] sm:$0x1]
        %v3242 = vld [vmem:[%s323 + $0x85] sm:$0x1]
        %v3243 = vld [vmem:[%s323 + $0x8d] sm:$0x1]
        %v3244 = vld [vmem:[%s323 + $0x95] sm:$0x1]
        %v3245 = vld [vmem:[%s323 + $0x9d] sm:$0x1]
        %v3246 = vld [vmem:[%s323 + $0xa5] sm:$0x1]
        %v3247 = vld [vmem:[%s323 + $0xad] sm:$0x1]
        %v3248 = vld [vmem:[%s323 + $0xb5] sm:$0x1]
        %v3249 = vld [vmem:[%s323 + $0xbd] sm:$0x1]
        %v3250 = vld [vmem:[%s323 + $0xc5] sm:$0x1]
        %v3251 = vld [vmem:[%s323 + $0xcd] sm:$0x1]
        %v3252 = vld [vmem:[%s323 + $0xd5] sm:$0x1]
        %v3253 = vld [vmem:[%s323 + $0xdd] sm:$0x1]
        %v3254 = vld [vmem:[%s323 + $0xe5] sm:$0x1]
        %v3255 = vld [vmem:[%s323 + $0xed] sm:$0x1]
        %v3256 = vld [vmem:[%s323 + $0xf5] sm:$0x1]
        %v3257 = vld [vmem:[%s323 + $0xfd] sm:$0x1]
        %v3258 = vld [vmem:[%s323 + $0x105] sm:$0x1]
        %v3259 = vld [vmem:[%s323 + $0x10d] sm:$0x1]
        %v3260 = vld [vmem:[%s323 + $0x115] sm:$0x1]
        %v3261 = vld [vmem:[%s323 + $0x11d] sm:$0x1]
        %v3262 = vld [vmem:[%s323 + $0x125] sm:$0x1]
        %v3263 = vld [vmem:[%s323 + $0x12d] sm:$0x1]
        %v3264 = vld [vmem:[%s323 + $0x135] sm:$0x1]
        %v3265 = vld [vmem:[%s323 + $0x13d] sm:$0x1]
        %v3266 = vld [vmem:[%s323 + $0x145] sm:$0x1]
        %v3267 = vld [vmem:[%s323 + $0x14d] sm:$0x1]
        %v3268 = vld [vmem:[%s323 + $0x155] sm:$0x1]
        %v3269 = vld [vmem:[%s323 + $0x15d] sm:$0x1]
        %v3270 = vld [vmem:[%s323 + $0x165] sm:$0x1]
        %v3271 = vld [vmem:[%s323 + $0x16d] sm:$0x1]
        %v3272 = vld [vmem:[%s323 + $0x175] sm:$0x1]
        %v3273 = vld [vmem:[%s323 + $0x17d] sm:$0x1]
        %v3274 = vld [vmem:[%s323 + $0x185] sm:$0x1]
        %v3275 = vld [vmem:[%s323 + $0x18d] sm:$0x1]
        %v3276 = vld [vmem:[%s323 + $0x195] sm:$0x1]
        %v3277 = vld [vmem:[%s323 + $0x19d] sm:$0x1]
        %v3278 = vld [vmem:[%s323 + $0x1a5] sm:$0x1]
        %v3279 = vld [vmem:[%s323 + $0x1ad] sm:$0x1]
        %v3280 = vld [vmem:[%s323 + $0x1b5] sm:$0x1]
        %v3281 = vld [vmem:[%s323 + $0x1bd] sm:$0x1]
        %v3282 = vld [vmem:[%s323 + $0x1c5] sm:$0x1]
        %v3283 = vld [vmem:[%s323 + $0x1cd] sm:$0x1]
        %v3284 = vld [vmem:[%s323 + $0x1d5] sm:$0x1]
        %v3285 = vld [vmem:[%s323 + $0x1dd] sm:$0x1]
        %v3286 = vld [vmem:[%s323 + $0x1e5] sm:$0x1]
        %v3287 = vld [vmem:[%s323 + $0x1ed] sm:$0x1]
        %v3288 = vld [vmem:[%s323 + $0x1f5] sm:$0x1]
        %v3289 = vld [vmem:[%s323 + $0x1fd] sm:$0x1]
        %v3290 = vld [vmem:[%s323 + $0x205] sm:$0x1]
        %v3291 = vld [vmem:[%s323 + $0x20d] sm:$0x1]
        %v3292 = vld [vmem:[%s323 + $0x215] sm:$0x1]
        %v3293 = vld [vmem:[%s323 + $0x21d] sm:$0x1]
        %v3294 = vld [vmem:[%s323 + $0x225] sm:$0x1]
        %v3295 = vld [vmem:[%s323 + $0x22d] sm:$0x1]
        %v3296 = vld [vmem:[%s323 + $0x235] sm:$0x1]
        %v3297 = vld [vmem:[%s323 + $0x23d] sm:$0x1]
        %v3298 = vld [vmem:[%s323 + $0x245] sm:$0x1]
        %v3299 = vld [vmem:[%s323 + $0x24d] sm:$0x1]
        %v3300 = vld [vmem:[%s323 + $0x255] sm:$0x1]
        %v3301 = vld [vmem:[%s323 + $0x25d] sm:$0x1]
        %v3302 = vld [vmem:[%s323 + $0x265] sm:$0x1]
        %v3303 = vld [vmem:[%s323 + $0x26d] sm:$0x1]
        %v3304 = vld [vmem:[%s323 + $0x275] sm:$0x1]
        %v3305 = vld [vmem:[%s323 + $0x27d] sm:$0x1]
        %v3306 = vld [vmem:[%s323 + $0x285] sm:$0x1]
        %v3307 = vld [vmem:[%s323 + $0x28d] sm:$0x1]
        %v3308 = vld [vmem:[%s323 + $0x295] sm:$0x1]
        %v3309 = vld [vmem:[%s323 + $0x29d] sm:$0x1]
        %v3310 = vld [vmem:[%s323 + $0x2a5] sm:$0x1]
        %v3311 = vld [vmem:[%s323 + $0x2ad] sm:$0x1]
        %v3312 = vld [vmem:[%s323 + $0x2b5] sm:$0x1]
        %v3313 = vld [vmem:[%s323 + $0x2bd] sm:$0x1]
        %v3314 = vld [vmem:[%s323 + $0x2c5] sm:$0x1]
        %v3315 = vld [vmem:[%s323 + $0x2cd] sm:$0x1]
        %v3316 = vld [vmem:[%s323 + $0x2d5] sm:$0x1]
        %v3317 = vld [vmem:[%s323 + $0x2dd] sm:$0x1]
        %v3318 = vld [vmem:[%s323 + $0x2e5] sm:$0x1]
        %v3319 = vld [vmem:[%s323 + $0x2ed] sm:$0x1]
        %v3320 = vld [vmem:[%s323 + $0x2f5] sm:$0x1]
        %v3321 = vld [vmem:[%s323 + $0x2fd] sm:$0x1]
        %v3322 = vld [vmem:[%s323 + $0x305] sm:$0x1]
        %v3323 = vld [vmem:[%s323 + $0x30d] sm:$0x1]
        %v3324 = vld [vmem:[%s323 + $0x315] sm:$0x1]
        %v3325 = vld [vmem:[%s323 + $0x31d] sm:$0x1]
        %v3326 = vld [vmem:[%s323 + $0x325] sm:$0x1]
        %v3327 = vld [vmem:[%s323 + $0x32d] sm:$0x1]
        %v3328 = vld [vmem:[%s323 + $0x335] sm:$0x1]
        %v3329 = vld [vmem:[%s323 + $0x33d] sm:$0x1]
        %v3330 = vld [vmem:[%s323 + $0x345] sm:$0x1]
        %v3331 = vld [vmem:[%s323 + $0x34d] sm:$0x1]
        %v3332 = vld [vmem:[%s323 + $0x355] sm:$0x1]
        %v3333 = vld [vmem:[%s323 + $0x35d] sm:$0x1]
        %v3334 = vld [vmem:[%s323 + $0x365] sm:$0x1]
        %v3335 = vld [vmem:[%s323 + $0x36d] sm:$0x1]
        %v3336 = vld [vmem:[%s323 + $0x375] sm:$0x1]
        %v3337 = vld [vmem:[%s323 + $0x37d] sm:$0x1]
        %v3338 = vld [vmem:[%s323 + $0x385] sm:$0x1]
        %v3339 = vld [vmem:[%s323 + $0x38d] sm:$0x1]
        %v3340 = vld [vmem:[%s323 + $0x395] sm:$0x1]
        %v3341 = vld [vmem:[%s323 + $0x39d] sm:$0x1]
        %v3342 = vld [vmem:[%s323 + $0x3a5] sm:$0x1]
        %v3343 = vld [vmem:[%s323 + $0x3ad] sm:$0x1]
        %v3344 = vld [vmem:[%s323 + $0x3b5] sm:$0x1]
        %v3345 = vld [vmem:[%s323 + $0x3bd] sm:$0x1]
        %v3346 = vld [vmem:[%s323 + $0x3c5] sm:$0x1]
        %v3347 = vld [vmem:[%s323 + $0x3cd] sm:$0x1]
        %v3348 = vld [vmem:[%s323 + $0x3d5] sm:$0x1]
        %v3349 = vld [vmem:[%s323 + $0x3dd] sm:$0x1]
        %v3350 = vld [vmem:[%s323 + $0x3e5] sm:$0x1]
        %v3351 = vld [vmem:[%s323 + $0x3ed] sm:$0x1]
        %v3352 = vld [vmem:[%s323 + $0x3f5] sm:$0x1]
        %v3353 = vld [vmem:[%s323 + $0x3fd] sm:$0x1]
        %v3482 = vrot.slane %v3227, 7
        %v3483 = vsel %vm627, %v3482, %v3226
        %v3484 = vrot.slane %v3228, 6
        %v3485 = vsel %vm630, %v3484, %v3483
        %v3486 = vrot.slane %v3229, 5
        %v3487 = vsel %vm633, %v3486, %v3485
        %v3488 = vrot.slane %v3230, 4
        %v3489 = vsel %vm636, %v3488, %v3487
        %v3490 = vrot.slane %v3231, 3
        %v3491 = vsel %vm639, %v3490, %v3489
        %v3492 = vrot.slane %v3232, 2
        %v3493 = vsel %vm642, %v3492, %v3491
        %v3494 = vrot.slane %v3233, 1
        %v3495 = vsel %vm645, %v3494, %v3493
        %v3496 = vrot.slane %v3235, 7
        %v3497 = vsel %vm627, %v3496, %v3234
        %v3498 = vrot.slane %v3236, 6
        %v3499 = vsel %vm630, %v3498, %v3497
        %v3500 = vrot.slane %v3237, 5
        %v3501 = vsel %vm633, %v3500, %v3499
        %v3502 = vrot.slane %v3238, 4
        %v3503 = vsel %vm636, %v3502, %v3501
        %v3504 = vrot.slane %v3239, 3
        %v3505 = vsel %vm639, %v3504, %v3503
        %v3506 = vrot.slane %v3240, 2
        %v3507 = vsel %vm642, %v3506, %v3505
        %v3508 = vrot.slane %v3241, 1
        %v3509 = vsel %vm645, %v3508, %v3507
        %v3510 = vrot.slane %v3243, 7
        %v3511 = vsel %vm627, %v3510, %v3242
        %v3512 = vrot.slane %v3244, 6
        %v3513 = vsel %vm630, %v3512, %v3511
        %v3514 = vrot.slane %v3245, 5
        %v3515 = vsel %vm633, %v3514, %v3513
        %v3516 = vrot.slane %v3246, 4
        %v3517 = vsel %vm636, %v3516, %v3515
        %v3518 = vrot.slane %v3247, 3
        %v3519 = vsel %vm639, %v3518, %v3517
        %v3520 = vrot.slane %v3248, 2
        %v3521 = vsel %vm642, %v3520, %v3519
        %v3522 = vrot.slane %v3249, 1
        %v3523 = vsel %vm645, %v3522, %v3521
        %v3524 = vrot.slane %v3251, 7
        %v3525 = vsel %vm627, %v3524, %v3250
        %v3526 = vrot.slane %v3252, 6
        %v3527 = vsel %vm630, %v3526, %v3525
        %v3528 = vrot.slane %v3253, 5
        %v3529 = vsel %vm633, %v3528, %v3527
        %v3530 = vrot.slane %v3254, 4
        %v3531 = vsel %vm636, %v3530, %v3529
        %v3532 = vrot.slane %v3255, 3
        %v3533 = vsel %vm639, %v3532, %v3531
        %v3534 = vrot.slane %v3256, 2
        %v3535 = vsel %vm642, %v3534, %v3533
        %v3536 = vrot.slane %v3257, 1
        %v3537 = vsel %vm645, %v3536, %v3535
        %v3538 = vrot.slane %v3259, 7
        %v3539 = vsel %vm627, %v3538, %v3258
        %v3540 = vrot.slane %v3260, 6
        %v3541 = vsel %vm630, %v3540, %v3539
        %v3542 = vrot.slane %v3261, 5
        %v3543 = vsel %vm633, %v3542, %v3541
        %v3544 = vrot.slane %v3262, 4
        %v3545 = vsel %vm636, %v3544, %v3543
        %v3546 = vrot.slane %v3263, 3
        %v3547 = vsel %vm639, %v3546, %v3545
        %v3548 = vrot.slane %v3264, 2
        %v3549 = vsel %vm642, %v3548, %v3547
        %v3550 = vrot.slane %v3265, 1
        %v3551 = vsel %vm645, %v3550, %v3549
        %v3552 = vrot.slane %v3267, 7
        %v3553 = vsel %vm627, %v3552, %v3266
        %v3554 = vrot.slane %v3268, 6
        %v3555 = vsel %vm630, %v3554, %v3553
        %v3556 = vrot.slane %v3269, 5
        %v3557 = vsel %vm633, %v3556, %v3555
        %v3558 = vrot.slane %v3270, 4
        %v3559 = vsel %vm636, %v3558, %v3557
        %v3560 = vrot.slane %v3271, 3
        %v3561 = vsel %vm639, %v3560, %v3559
        %v3562 = vrot.slane %v3272, 2
        %v3563 = vsel %vm642, %v3562, %v3561
        %v3564 = vrot.slane %v3273, 1
        %v3565 = vsel %vm645, %v3564, %v3563
        %v3566 = vrot.slane %v3275, 7
        %v3567 = vsel %vm627, %v3566, %v3274
        %v3568 = vrot.slane %v3276, 6
        %v3569 = vsel %vm630, %v3568, %v3567
        %v3570 = vrot.slane %v3277, 5
        %v3571 = vsel %vm633, %v3570, %v3569
        %v3572 = vrot.slane %v3278, 4
        %v3573 = vsel %vm636, %v3572, %v3571
        %v3574 = vrot.slane %v3279, 3
        %v3575 = vsel %vm639, %v3574, %v3573
        %v3576 = vrot.slane %v3280, 2
        %v3577 = vsel %vm642, %v3576, %v3575
        %v3578 = vrot.slane %v3281, 1
        %v3579 = vsel %vm645, %v3578, %v3577
        %v3580 = vrot.slane %v3283, 7
        %v3581 = vsel %vm627, %v3580, %v3282
        %v3582 = vrot.slane %v3284, 6
        %v3583 = vsel %vm630, %v3582, %v3581
        %v3584 = vrot.slane %v3285, 5
        %v3585 = vsel %vm633, %v3584, %v3583
        %v3586 = vrot.slane %v3286, 4
        %v3587 = vsel %vm636, %v3586, %v3585
        %v3588 = vrot.slane %v3287, 3
        %v3589 = vsel %vm639, %v3588, %v3587
        %v3590 = vrot.slane %v3288, 2
        %v3591 = vsel %vm642, %v3590, %v3589
        %v3592 = vrot.slane %v3289, 1
        %v3593 = vsel %vm645, %v3592, %v3591
        %v3594 = vrot.slane %v3291, 7
        %v3595 = vsel %vm627, %v3594, %v3290
        %v3596 = vrot.slane %v3292, 6
        %v3597 = vsel %vm630, %v3596, %v3595
        %v3598 = vrot.slane %v3293, 5
        %v3599 = vsel %vm633, %v3598, %v3597
        %v3600 = vrot.slane %v3294, 4
        %v3601 = vsel %vm636, %v3600, %v3599
        %v3602 = vrot.slane %v3295, 3
        %v3603 = vsel %vm639, %v3602, %v3601
        %v3604 = vrot.slane %v3296, 2
        %v3605 = vsel %vm642, %v3604, %v3603
        %v3606 = vrot.slane %v3297, 1
        %v3607 = vsel %vm645, %v3606, %v3605
        %v3608 = vrot.slane %v3299, 7
        %v3609 = vsel %vm627, %v3608, %v3298
        %v3610 = vrot.slane %v3300, 6
        %v3611 = vsel %vm630, %v3610, %v3609
        %v3612 = vrot.slane %v3301, 5
        %v3613 = vsel %vm633, %v3612, %v3611
        %v3614 = vrot.slane %v3302, 4
        %v3615 = vsel %vm636, %v3614, %v3613
        %v3616 = vrot.slane %v3303, 3
        %v3617 = vsel %vm639, %v3616, %v3615
        %v3618 = vrot.slane %v3304, 2
        %v3619 = vsel %vm642, %v3618, %v3617
        %v3620 = vrot.slane %v3305, 1
        %v3621 = vsel %vm645, %v3620, %v3619
        %v3622 = vrot.slane %v3307, 7
        %v3623 = vsel %vm627, %v3622, %v3306
        %v3624 = vrot.slane %v3308, 6
        %v3625 = vsel %vm630, %v3624, %v3623
        %v3626 = vrot.slane %v3309, 5
        %v3627 = vsel %vm633, %v3626, %v3625
        %v3628 = vrot.slane %v3310, 4
        %v3629 = vsel %vm636, %v3628, %v3627
        %v3630 = vrot.slane %v3311, 3
        %v3631 = vsel %vm639, %v3630, %v3629
        %v3632 = vrot.slane %v3312, 2
        %v3633 = vsel %vm642, %v3632, %v3631
        %v3634 = vrot.slane %v3313, 1
        %v3635 = vsel %vm645, %v3634, %v3633
        %v3636 = vrot.slane %v3315, 7
        %v3637 = vsel %vm627, %v3636, %v3314
        %v3638 = vrot.slane %v3316, 6
        %v3639 = vsel %vm630, %v3638, %v3637
        %v3640 = vrot.slane %v3317, 5
        %v3641 = vsel %vm633, %v3640, %v3639
        %v3642 = vrot.slane %v3318, 4
        %v3643 = vsel %vm636, %v3642, %v3641
        %v3644 = vrot.slane %v3319, 3
        %v3645 = vsel %vm639, %v3644, %v3643
        %v3646 = vrot.slane %v3320, 2
        %v3647 = vsel %vm642, %v3646, %v3645
        %v3648 = vrot.slane %v3321, 1
        %v3649 = vsel %vm645, %v3648, %v3647
        %v3650 = vrot.slane %v3323, 7
        %v3651 = vsel %vm627, %v3650, %v3322
        %v3652 = vrot.slane %v3324, 6
        %v3653 = vsel %vm630, %v3652, %v3651
        %v3654 = vrot.slane %v3325, 5
        %v3655 = vsel %vm633, %v3654, %v3653
        %v3656 = vrot.slane %v3326, 4
        %v3657 = vsel %vm636, %v3656, %v3655
        %v3658 = vrot.slane %v3327, 3
        %v3659 = vsel %vm639, %v3658, %v3657
        %v3660 = vrot.slane %v3328, 2
        %v3661 = vsel %vm642, %v3660, %v3659
        %v3662 = vrot.slane %v3329, 1
        %v3663 = vsel %vm645, %v3662, %v3661
        %v3664 = vrot.slane %v3331, 7
        %v3665 = vsel %vm627, %v3664, %v3330
        %v3666 = vrot.slane %v3332, 6
        %v3667 = vsel %vm630, %v3666, %v3665
        %v3668 = vrot.slane %v3333, 5
        %v3669 = vsel %vm633, %v3668, %v3667
        %v3670 = vrot.slane %v3334, 4
        %v3671 = vsel %vm636, %v3670, %v3669
        %v3672 = vrot.slane %v3335, 3
        %v3673 = vsel %vm639, %v3672, %v3671
        %v3674 = vrot.slane %v3336, 2
        %v3675 = vsel %vm642, %v3674, %v3673
        %v3676 = vrot.slane %v3337, 1
        %v3677 = vsel %vm645, %v3676, %v3675
        %v3678 = vrot.slane %v3339, 7
        %v3679 = vsel %vm627, %v3678, %v3338
        %v3680 = vrot.slane %v3340, 6
        %v3681 = vsel %vm630, %v3680, %v3679
        %v3682 = vrot.slane %v3341, 5
        %v3683 = vsel %vm633, %v3682, %v3681
        %v3684 = vrot.slane %v3342, 4
        %v3685 = vsel %vm636, %v3684, %v3683
        %v3686 = vrot.slane %v3343, 3
        %v3687 = vsel %vm639, %v3686, %v3685
        %v3688 = vrot.slane %v3344, 2
        %v3689 = vsel %vm642, %v3688, %v3687
        %v3690 = vrot.slane %v3345, 1
        %v3691 = vsel %vm645, %v3690, %v3689
        %v3692 = vrot.slane %v3347, 7
        %v3693 = vsel %vm627, %v3692, %v3346
        %v3694 = vrot.slane %v3348, 6
        %v3695 = vsel %vm630, %v3694, %v3693
        %v3696 = vrot.slane %v3349, 5
        %v3697 = vsel %vm633, %v3696, %v3695
        %v3698 = vrot.slane %v3350, 4
        %v3699 = vsel %vm636, %v3698, %v3697
        %v3700 = vrot.slane %v3351, 3
        %v3701 = vsel %vm639, %v3700, %v3699
        %v3702 = vrot.slane %v3352, 2
        %v3703 = vsel %vm642, %v3702, %v3701
        %v3704 = vrot.slane %v3353, 1
        %v3705 = vsel %vm645, %v3704, %v3703
        %3722 = vmatprep.subr.mxu0 0.0
        %3723 = vmatpush1.xpose.msra.mxu0 %v3705
        %3724 = vmatprep.subr.mxu0 0.0
        %3725 = vmatpush1.xpose.msra.mxu0 %v3691
        %3726 = vmatprep.subr.mxu0 0.0
        %3727 = vmatpush1.xpose.msra.mxu0 %v3677
        %3728 = vmatprep.subr.mxu0 0.0
        %3729 = vmatpush1.xpose.msra.mxu0 %v3663
        %3730 = vmatprep.subr.mxu0 0.0
        %3731 = vmatpush1.xpose.msra.mxu0 %v3649
        %3732 = vmatprep.subr.mxu0 0.0
        %3733 = vmatpush1.xpose.msra.mxu0 %v3635
        %3734 = vmatprep.subr.mxu0 0.0
        %3735 = vmatpush1.xpose.msra.mxu0 %v3621
        %3736 = vmatprep.subr.mxu0 0.0
        %3737 = vmatpush1.xpose.msra.mxu0 %v3607
        %3738 = vmatprep.subr.mxu0 0.0
        %3739 = vmatpush1.xpose.msra.mxu0 %v3593
        %3740 = vmatprep.subr.mxu0 0.0
        %3741 = vmatpush1.xpose.msra.mxu0 %v3579
        %3742 = vmatprep.subr.mxu0 0.0
        %3743 = vmatpush1.xpose.msra.mxu0 %v3565
        %3744 = vmatprep.subr.mxu0 0.0
        %3745 = vmatpush1.xpose.msra.mxu0 %v3551
        %3746 = vmatprep.subr.mxu0 0.0
        %3747 = vmatpush1.xpose.msra.mxu0 %v3537
        %3748 = vmatprep.subr.mxu0 0.0
        %3749 = vmatpush1.xpose.msra.mxu0 %v3523
        %3750 = vmatprep.subr.mxu0 0.0
        %3751 = vmatpush1.xpose.msra.mxu0 %v3509
        %3752 = vmatprep.subr.mxu0 0.0
        %3753 = vmatpush1.xpose.msra.mxu0 %v3495
        %3754 = vmatprep.subr.mxu0 0.0
        %3755 = vmatpush2.xpose.msra.mxu0 0.0
        %3756 = vmatprep.subr.mxu0 0.0
        %3757 = vmatpush2.xpose.msra.mxu0 0.0
        %3758 = vmatprep.subr.mxu0 0.0
        %3759 = vmatpush2.xpose.msra.mxu0 0.0
        %3760 = vmatprep.subr.mxu0 0.0
        %3761 = vmatpush2.xpose.msra.mxu0 0.0
        %3762 = vmatprep.subr.mxu0 0.0
        %3763 = vmatpush2.xpose.msra.mxu0 0.0
        %3764 = vmatprep.subr.mxu0 0.0
        %3765 = vmatpush2.xpose.msra.mxu0 0.0
        %3766 = vmatprep.subr.mxu0 0.0
        %3767 = vmatpush2.xpose.msra.mxu0 0.0
        %3768 = vmatprep.subr.mxu0 0.0
        %3769 = vmatpush2.xpose.msra.mxu0 0.0
        %3770 = vmatprep.subr.mxu0 0.0
        %3771 = vmatpush2.xpose.msra.mxu0 0.0
        %3772 = vmatprep.subr.mxu0 0.0
        %3773 = vmatpush2.xpose.msra.mxu0 0.0
        %3774 = vmatprep.subr.mxu0 0.0
        %3775 = vmatpush2.xpose.msra.mxu0 0.0
        %3776 = vmatprep.subr.mxu0 0.0
        %3777 = vmatpush2.xpose.msra.mxu0 0.0
        %3778 = vmatprep.subr.mxu0 0.0
        %3779 = vmatpush2.xpose.msra.mxu0 0.0
        %3780 = vmatprep.subr.mxu0 0.0
        %3781 = vmatpush2.xpose.msra.mxu0 0.0
        %3782 = vmatprep.subr.mxu0 0.0
        %3783 = vmatpush2.xpose.msra.mxu0 0.0
        %3784 = vmatprep.subr.mxu0 0.0
        %3785 = vmatpush2.xpose.msra.mxu0 0.0
        %3786 = vmatprep.mubr.f32.mxu0 0.0
        %3787 = vmatmul.mubr.f32.gmra.mxu0 %v368
        %v3788 = vpop.f32.mrf.mxu0
        %v3789 = vadd.f32 0.0, %v3788
        %v3790 = vpop.f32.mrf.mxu0
        %3791 = vdwg.mxu0
        %s3792 = sadd.s32 %s369, 5
        %s3793 = smul.u32 %s3792, 8
        %s3794 = scalar_lea.vmem [#allocation2], %s3793
        %3795 = vst [vmem:[%s3794] sm:$0xff] %v3789
        %v3796 = vld [vmem:[%s323 + $0x6] sm:$0x1]
        %v3797 = vld [vmem:[%s323 + $0xe] sm:$0x1]
        %v3798 = vld [vmem:[%s323 + $0x16] sm:$0x1]
        %v3799 = vld [vmem:[%s323 + $0x1e] sm:$0x1]
        %v3800 = vld [vmem:[%s323 + $0x26] sm:$0x1]
        %v3801 = vld [vmem:[%s323 + $0x2e] sm:$0x1]
        %v3802 = vld [vmem:[%s323 + $0x36] sm:$0x1]
        %v3803 = vld [vmem:[%s323 + $0x3e] sm:$0x1]
        %v3804 = vld [vmem:[%s323 + $0x46] sm:$0x1]
        %v3805 = vld [vmem:[%s323 + $0x4e] sm:$0x1]
        %v3806 = vld [vmem:[%s323 + $0x56] sm:$0x1]
        %v3807 = vld [vmem:[%s323 + $0x5e] sm:$0x1]
        %v3808 = vld [vmem:[%s323 + $0x66] sm:$0x1]
        %v3809 = vld [vmem:[%s323 + $0x6e] sm:$0x1]
        %v3810 = vld [vmem:[%s323 + $0x76] sm:$0x1]
        %v3811 = vld [vmem:[%s323 + $0x7e] sm:$0x1]
        %v3812 = vld [vmem:[%s323 + $0x86] sm:$0x1]
        %v3813 = vld [vmem:[%s323 + $0x8e] sm:$0x1]
        %v3814 = vld [vmem:[%s323 + $0x96] sm:$0x1]
        %v3815 = vld [vmem:[%s323 + $0x9e] sm:$0x1]
        %v3816 = vld [vmem:[%s323 + $0xa6] sm:$0x1]
        %v3817 = vld [vmem:[%s323 + $0xae] sm:$0x1]
        %v3818 = vld [vmem:[%s323 + $0xb6] sm:$0x1]
        %v3819 = vld [vmem:[%s323 + $0xbe] sm:$0x1]
        %v3820 = vld [vmem:[%s323 + $0xc6] sm:$0x1]
        %v3821 = vld [vmem:[%s323 + $0xce] sm:$0x1]
        %v3822 = vld [vmem:[%s323 + $0xd6] sm:$0x1]
        %v3823 = vld [vmem:[%s323 + $0xde] sm:$0x1]
        %v3824 = vld [vmem:[%s323 + $0xe6] sm:$0x1]
        %v3825 = vld [vmem:[%s323 + $0xee] sm:$0x1]
        %v3826 = vld [vmem:[%s323 + $0xf6] sm:$0x1]
        %v3827 = vld [vmem:[%s323 + $0xfe] sm:$0x1]
        %v3828 = vld [vmem:[%s323 + $0x106] sm:$0x1]
        %v3829 = vld [vmem:[%s323 + $0x10e] sm:$0x1]
        %v3830 = vld [vmem:[%s323 + $0x116] sm:$0x1]
        %v3831 = vld [vmem:[%s323 + $0x11e] sm:$0x1]
        %v3832 = vld [vmem:[%s323 + $0x126] sm:$0x1]
        %v3833 = vld [vmem:[%s323 + $0x12e] sm:$0x1]
        %v3834 = vld [vmem:[%s323 + $0x136] sm:$0x1]
        %v3835 = vld [vmem:[%s323 + $0x13e] sm:$0x1]
        %v3836 = vld [vmem:[%s323 + $0x146] sm:$0x1]
        %v3837 = vld [vmem:[%s323 + $0x14e] sm:$0x1]
        %v3838 = vld [vmem:[%s323 + $0x156] sm:$0x1]
        %v3839 = vld [vmem:[%s323 + $0x15e] sm:$0x1]
        %v3840 = vld [vmem:[%s323 + $0x166] sm:$0x1]
        %v3841 = vld [vmem:[%s323 + $0x16e] sm:$0x1]
        %v3842 = vld [vmem:[%s323 + $0x176] sm:$0x1]
        %v3843 = vld [vmem:[%s323 + $0x17e] sm:$0x1]
        %v3844 = vld [vmem:[%s323 + $0x186] sm:$0x1]
        %v3845 = vld [vmem:[%s323 + $0x18e] sm:$0x1]
        %v3846 = vld [vmem:[%s323 + $0x196] sm:$0x1]
        %v3847 = vld [vmem:[%s323 + $0x19e] sm:$0x1]
        %v3848 = vld [vmem:[%s323 + $0x1a6] sm:$0x1]
        %v3849 = vld [vmem:[%s323 + $0x1ae] sm:$0x1]
        %v3850 = vld [vmem:[%s323 + $0x1b6] sm:$0x1]
        %v3851 = vld [vmem:[%s323 + $0x1be] sm:$0x1]
        %v3852 = vld [vmem:[%s323 + $0x1c6] sm:$0x1]
        %v3853 = vld [vmem:[%s323 + $0x1ce] sm:$0x1]
        %v3854 = vld [vmem:[%s323 + $0x1d6] sm:$0x1]
        %v3855 = vld [vmem:[%s323 + $0x1de] sm:$0x1]
        %v3856 = vld [vmem:[%s323 + $0x1e6] sm:$0x1]
        %v3857 = vld [vmem:[%s323 + $0x1ee] sm:$0x1]
        %v3858 = vld [vmem:[%s323 + $0x1f6] sm:$0x1]
        %v3859 = vld [vmem:[%s323 + $0x1fe] sm:$0x1]
        %v3860 = vld [vmem:[%s323 + $0x206] sm:$0x1]
        %v3861 = vld [vmem:[%s323 + $0x20e] sm:$0x1]
        %v3862 = vld [vmem:[%s323 + $0x216] sm:$0x1]
        %v3863 = vld [vmem:[%s323 + $0x21e] sm:$0x1]
        %v3864 = vld [vmem:[%s323 + $0x226] sm:$0x1]
        %v3865 = vld [vmem:[%s323 + $0x22e] sm:$0x1]
        %v3866 = vld [vmem:[%s323 + $0x236] sm:$0x1]
        %v3867 = vld [vmem:[%s323 + $0x23e] sm:$0x1]
        %v3868 = vld [vmem:[%s323 + $0x246] sm:$0x1]
        %v3869 = vld [vmem:[%s323 + $0x24e] sm:$0x1]
        %v3870 = vld [vmem:[%s323 + $0x256] sm:$0x1]
        %v3871 = vld [vmem:[%s323 + $0x25e] sm:$0x1]
        %v3872 = vld [vmem:[%s323 + $0x266] sm:$0x1]
        %v3873 = vld [vmem:[%s323 + $0x26e] sm:$0x1]
        %v3874 = vld [vmem:[%s323 + $0x276] sm:$0x1]
        %v3875 = vld [vmem:[%s323 + $0x27e] sm:$0x1]
        %v3876 = vld [vmem:[%s323 + $0x286] sm:$0x1]
        %v3877 = vld [vmem:[%s323 + $0x28e] sm:$0x1]
        %v3878 = vld [vmem:[%s323 + $0x296] sm:$0x1]
        %v3879 = vld [vmem:[%s323 + $0x29e] sm:$0x1]
        %v3880 = vld [vmem:[%s323 + $0x2a6] sm:$0x1]
        %v3881 = vld [vmem:[%s323 + $0x2ae] sm:$0x1]
        %v3882 = vld [vmem:[%s323 + $0x2b6] sm:$0x1]
        %v3883 = vld [vmem:[%s323 + $0x2be] sm:$0x1]
        %v3884 = vld [vmem:[%s323 + $0x2c6] sm:$0x1]
        %v3885 = vld [vmem:[%s323 + $0x2ce] sm:$0x1]
        %v3886 = vld [vmem:[%s323 + $0x2d6] sm:$0x1]
        %v3887 = vld [vmem:[%s323 + $0x2de] sm:$0x1]
        %v3888 = vld [vmem:[%s323 + $0x2e6] sm:$0x1]
        %v3889 = vld [vmem:[%s323 + $0x2ee] sm:$0x1]
        %v3890 = vld [vmem:[%s323 + $0x2f6] sm:$0x1]
        %v3891 = vld [vmem:[%s323 + $0x2fe] sm:$0x1]
        %v3892 = vld [vmem:[%s323 + $0x306] sm:$0x1]
        %v3893 = vld [vmem:[%s323 + $0x30e] sm:$0x1]
        %v3894 = vld [vmem:[%s323 + $0x316] sm:$0x1]
        %v3895 = vld [vmem:[%s323 + $0x31e] sm:$0x1]
        %v3896 = vld [vmem:[%s323 + $0x326] sm:$0x1]
        %v3897 = vld [vmem:[%s323 + $0x32e] sm:$0x1]
        %v3898 = vld [vmem:[%s323 + $0x336] sm:$0x1]
        %v3899 = vld [vmem:[%s323 + $0x33e] sm:$0x1]
        %v3900 = vld [vmem:[%s323 + $0x346] sm:$0x1]
        %v3901 = vld [vmem:[%s323 + $0x34e] sm:$0x1]
        %v3902 = vld [vmem:[%s323 + $0x356] sm:$0x1]
        %v3903 = vld [vmem:[%s323 + $0x35e] sm:$0x1]
        %v3904 = vld [vmem:[%s323 + $0x366] sm:$0x1]
        %v3905 = vld [vmem:[%s323 + $0x36e] sm:$0x1]
        %v3906 = vld [vmem:[%s323 + $0x376] sm:$0x1]
        %v3907 = vld [vmem:[%s323 + $0x37e] sm:$0x1]
        %v3908 = vld [vmem:[%s323 + $0x386] sm:$0x1]
        %v3909 = vld [vmem:[%s323 + $0x38e] sm:$0x1]
        %v3910 = vld [vmem:[%s323 + $0x396] sm:$0x1]
        %v3911 = vld [vmem:[%s323 + $0x39e] sm:$0x1]
        %v3912 = vld [vmem:[%s323 + $0x3a6] sm:$0x1]
        %v3913 = vld [vmem:[%s323 + $0x3ae] sm:$0x1]
        %v3914 = vld [vmem:[%s323 + $0x3b6] sm:$0x1]
        %v3915 = vld [vmem:[%s323 + $0x3be] sm:$0x1]
        %v3916 = vld [vmem:[%s323 + $0x3c6] sm:$0x1]
        %v3917 = vld [vmem:[%s323 + $0x3ce] sm:$0x1]
        %v3918 = vld [vmem:[%s323 + $0x3d6] sm:$0x1]
        %v3919 = vld [vmem:[%s323 + $0x3de] sm:$0x1]
        %v3920 = vld [vmem:[%s323 + $0x3e6] sm:$0x1]
        %v3921 = vld [vmem:[%s323 + $0x3ee] sm:$0x1]
        %v3922 = vld [vmem:[%s323 + $0x3f6] sm:$0x1]
        %v3923 = vld [vmem:[%s323 + $0x3fe] sm:$0x1]
        %v4052 = vrot.slane %v3797, 7
        %v4053 = vsel %vm627, %v4052, %v3796
        %v4054 = vrot.slane %v3798, 6
        %v4055 = vsel %vm630, %v4054, %v4053
        %v4056 = vrot.slane %v3799, 5
        %v4057 = vsel %vm633, %v4056, %v4055
        %v4058 = vrot.slane %v3800, 4
        %v4059 = vsel %vm636, %v4058, %v4057
        %v4060 = vrot.slane %v3801, 3
        %v4061 = vsel %vm639, %v4060, %v4059
        %v4062 = vrot.slane %v3802, 2
        %v4063 = vsel %vm642, %v4062, %v4061
        %v4064 = vrot.slane %v3803, 1
        %v4065 = vsel %vm645, %v4064, %v4063
        %v4066 = vrot.slane %v3805, 7
        %v4067 = vsel %vm627, %v4066, %v3804
        %v4068 = vrot.slane %v3806, 6
        %v4069 = vsel %vm630, %v4068, %v4067
        %v4070 = vrot.slane %v3807, 5
        %v4071 = vsel %vm633, %v4070, %v4069
        %v4072 = vrot.slane %v3808, 4
        %v4073 = vsel %vm636, %v4072, %v4071
        %v4074 = vrot.slane %v3809, 3
        %v4075 = vsel %vm639, %v4074, %v4073
        %v4076 = vrot.slane %v3810, 2
        %v4077 = vsel %vm642, %v4076, %v4075
        %v4078 = vrot.slane %v3811, 1
        %v4079 = vsel %vm645, %v4078, %v4077
        %v4080 = vrot.slane %v3813, 7
        %v4081 = vsel %vm627, %v4080, %v3812
        %v4082 = vrot.slane %v3814, 6
        %v4083 = vsel %vm630, %v4082, %v4081
        %v4084 = vrot.slane %v3815, 5
        %v4085 = vsel %vm633, %v4084, %v4083
        %v4086 = vrot.slane %v3816, 4
        %v4087 = vsel %vm636, %v4086, %v4085
        %v4088 = vrot.slane %v3817, 3
        %v4089 = vsel %vm639, %v4088, %v4087
        %v4090 = vrot.slane %v3818, 2
        %v4091 = vsel %vm642, %v4090, %v4089
        %v4092 = vrot.slane %v3819, 1
        %v4093 = vsel %vm645, %v4092, %v4091
        %v4094 = vrot.slane %v3821, 7
        %v4095 = vsel %vm627, %v4094, %v3820
        %v4096 = vrot.slane %v3822, 6
        %v4097 = vsel %vm630, %v4096, %v4095
        %v4098 = vrot.slane %v3823, 5
        %v4099 = vsel %vm633, %v4098, %v4097
        %v4100 = vrot.slane %v3824, 4
        %v4101 = vsel %vm636, %v4100, %v4099
        %v4102 = vrot.slane %v3825, 3
        %v4103 = vsel %vm639, %v4102, %v4101
        %v4104 = vrot.slane %v3826, 2
        %v4105 = vsel %vm642, %v4104, %v4103
        %v4106 = vrot.slane %v3827, 1
        %v4107 = vsel %vm645, %v4106, %v4105
        %v4108 = vrot.slane %v3829, 7
        %v4109 = vsel %vm627, %v4108, %v3828
        %v4110 = vrot.slane %v3830, 6
        %v4111 = vsel %vm630, %v4110, %v4109
        %v4112 = vrot.slane %v3831, 5
        %v4113 = vsel %vm633, %v4112, %v4111
        %v4114 = vrot.slane %v3832, 4
        %v4115 = vsel %vm636, %v4114, %v4113
        %v4116 = vrot.slane %v3833, 3
        %v4117 = vsel %vm639, %v4116, %v4115
        %v4118 = vrot.slane %v3834, 2
        %v4119 = vsel %vm642, %v4118, %v4117
        %v4120 = vrot.slane %v3835, 1
        %v4121 = vsel %vm645, %v4120, %v4119
        %v4122 = vrot.slane %v3837, 7
        %v4123 = vsel %vm627, %v4122, %v3836
        %v4124 = vrot.slane %v3838, 6
        %v4125 = vsel %vm630, %v4124, %v4123
        %v4126 = vrot.slane %v3839, 5
        %v4127 = vsel %vm633, %v4126, %v4125
        %v4128 = vrot.slane %v3840, 4
        %v4129 = vsel %vm636, %v4128, %v4127
        %v4130 = vrot.slane %v3841, 3
        %v4131 = vsel %vm639, %v4130, %v4129
        %v4132 = vrot.slane %v3842, 2
        %v4133 = vsel %vm642, %v4132, %v4131
        %v4134 = vrot.slane %v3843, 1
        %v4135 = vsel %vm645, %v4134, %v4133
        %v4136 = vrot.slane %v3845, 7
        %v4137 = vsel %vm627, %v4136, %v3844
        %v4138 = vrot.slane %v3846, 6
        %v4139 = vsel %vm630, %v4138, %v4137
        %v4140 = vrot.slane %v3847, 5
        %v4141 = vsel %vm633, %v4140, %v4139
        %v4142 = vrot.slane %v3848, 4
        %v4143 = vsel %vm636, %v4142, %v4141
        %v4144 = vrot.slane %v3849, 3
        %v4145 = vsel %vm639, %v4144, %v4143
        %v4146 = vrot.slane %v3850, 2
        %v4147 = vsel %vm642, %v4146, %v4145
        %v4148 = vrot.slane %v3851, 1
        %v4149 = vsel %vm645, %v4148, %v4147
        %v4150 = vrot.slane %v3853, 7
        %v4151 = vsel %vm627, %v4150, %v3852
        %v4152 = vrot.slane %v3854, 6
        %v4153 = vsel %vm630, %v4152, %v4151
        %v4154 = vrot.slane %v3855, 5
        %v4155 = vsel %vm633, %v4154, %v4153
        %v4156 = vrot.slane %v3856, 4
        %v4157 = vsel %vm636, %v4156, %v4155
        %v4158 = vrot.slane %v3857, 3
        %v4159 = vsel %vm639, %v4158, %v4157
        %v4160 = vrot.slane %v3858, 2
        %v4161 = vsel %vm642, %v4160, %v4159
        %v4162 = vrot.slane %v3859, 1
        %v4163 = vsel %vm645, %v4162, %v4161
        %v4164 = vrot.slane %v3861, 7
        %v4165 = vsel %vm627, %v4164, %v3860
        %v4166 = vrot.slane %v3862, 6
        %v4167 = vsel %vm630, %v4166, %v4165
        %v4168 = vrot.slane %v3863, 5
        %v4169 = vsel %vm633, %v4168, %v4167
        %v4170 = vrot.slane %v3864, 4
        %v4171 = vsel %vm636, %v4170, %v4169
        %v4172 = vrot.slane %v3865, 3
        %v4173 = vsel %vm639, %v4172, %v4171
        %v4174 = vrot.slane %v3866, 2
        %v4175 = vsel %vm642, %v4174, %v4173
        %v4176 = vrot.slane %v3867, 1
        %v4177 = vsel %vm645, %v4176, %v4175
        %v4178 = vrot.slane %v3869, 7
        %v4179 = vsel %vm627, %v4178, %v3868
        %v4180 = vrot.slane %v3870, 6
        %v4181 = vsel %vm630, %v4180, %v4179
        %v4182 = vrot.slane %v3871, 5
        %v4183 = vsel %vm633, %v4182, %v4181
        %v4184 = vrot.slane %v3872, 4
        %v4185 = vsel %vm636, %v4184, %v4183
        %v4186 = vrot.slane %v3873, 3
        %v4187 = vsel %vm639, %v4186, %v4185
        %v4188 = vrot.slane %v3874, 2
        %v4189 = vsel %vm642, %v4188, %v4187
        %v4190 = vrot.slane %v3875, 1
        %v4191 = vsel %vm645, %v4190, %v4189
        %v4192 = vrot.slane %v3877, 7
        %v4193 = vsel %vm627, %v4192, %v3876
        %v4194 = vrot.slane %v3878, 6
        %v4195 = vsel %vm630, %v4194, %v4193
        %v4196 = vrot.slane %v3879, 5
        %v4197 = vsel %vm633, %v4196, %v4195
        %v4198 = vrot.slane %v3880, 4
        %v4199 = vsel %vm636, %v4198, %v4197
        %v4200 = vrot.slane %v3881, 3
        %v4201 = vsel %vm639, %v4200, %v4199
        %v4202 = vrot.slane %v3882, 2
        %v4203 = vsel %vm642, %v4202, %v4201
        %v4204 = vrot.slane %v3883, 1
        %v4205 = vsel %vm645, %v4204, %v4203
        %v4206 = vrot.slane %v3885, 7
        %v4207 = vsel %vm627, %v4206, %v3884
        %v4208 = vrot.slane %v3886, 6
        %v4209 = vsel %vm630, %v4208, %v4207
        %v4210 = vrot.slane %v3887, 5
        %v4211 = vsel %vm633, %v4210, %v4209
        %v4212 = vrot.slane %v3888, 4
        %v4213 = vsel %vm636, %v4212, %v4211
        %v4214 = vrot.slane %v3889, 3
        %v4215 = vsel %vm639, %v4214, %v4213
        %v4216 = vrot.slane %v3890, 2
        %v4217 = vsel %vm642, %v4216, %v4215
        %v4218 = vrot.slane %v3891, 1
        %v4219 = vsel %vm645, %v4218, %v4217
        %v4220 = vrot.slane %v3893, 7
        %v4221 = vsel %vm627, %v4220, %v3892
        %v4222 = vrot.slane %v3894, 6
        %v4223 = vsel %vm630, %v4222, %v4221
        %v4224 = vrot.slane %v3895, 5
        %v4225 = vsel %vm633, %v4224, %v4223
        %v4226 = vrot.slane %v3896, 4
        %v4227 = vsel %vm636, %v4226, %v4225
        %v4228 = vrot.slane %v3897, 3
        %v4229 = vsel %vm639, %v4228, %v4227
        %v4230 = vrot.slane %v3898, 2
        %v4231 = vsel %vm642, %v4230, %v4229
        %v4232 = vrot.slane %v3899, 1
        %v4233 = vsel %vm645, %v4232, %v4231
        %v4234 = vrot.slane %v3901, 7
        %v4235 = vsel %vm627, %v4234, %v3900
        %v4236 = vrot.slane %v3902, 6
        %v4237 = vsel %vm630, %v4236, %v4235
        %v4238 = vrot.slane %v3903, 5
        %v4239 = vsel %vm633, %v4238, %v4237
        %v4240 = vrot.slane %v3904, 4
        %v4241 = vsel %vm636, %v4240, %v4239
        %v4242 = vrot.slane %v3905, 3
        %v4243 = vsel %vm639, %v4242, %v4241
        %v4244 = vrot.slane %v3906, 2
        %v4245 = vsel %vm642, %v4244, %v4243
        %v4246 = vrot.slane %v3907, 1
        %v4247 = vsel %vm645, %v4246, %v4245
        %v4248 = vrot.slane %v3909, 7
        %v4249 = vsel %vm627, %v4248, %v3908
        %v4250 = vrot.slane %v3910, 6
        %v4251 = vsel %vm630, %v4250, %v4249
        %v4252 = vrot.slane %v3911, 5
        %v4253 = vsel %vm633, %v4252, %v4251
        %v4254 = vrot.slane %v3912, 4
        %v4255 = vsel %vm636, %v4254, %v4253
        %v4256 = vrot.slane %v3913, 3
        %v4257 = vsel %vm639, %v4256, %v4255
        %v4258 = vrot.slane %v3914, 2
        %v4259 = vsel %vm642, %v4258, %v4257
        %v4260 = vrot.slane %v3915, 1
        %v4261 = vsel %vm645, %v4260, %v4259
        %v4262 = vrot.slane %v3917, 7
        %v4263 = vsel %vm627, %v4262, %v3916
        %v4264 = vrot.slane %v3918, 6
        %v4265 = vsel %vm630, %v4264, %v4263
        %v4266 = vrot.slane %v3919, 5
        %v4267 = vsel %vm633, %v4266, %v4265
        %v4268 = vrot.slane %v3920, 4
        %v4269 = vsel %vm636, %v4268, %v4267
        %v4270 = vrot.slane %v3921, 3
        %v4271 = vsel %vm639, %v4270, %v4269
        %v4272 = vrot.slane %v3922, 2
        %v4273 = vsel %vm642, %v4272, %v4271
        %v4274 = vrot.slane %v3923, 1
        %v4275 = vsel %vm645, %v4274, %v4273
        %4292 = vmatprep.subr.mxu0 0.0
        %4293 = vmatpush1.xpose.msra.mxu0 %v4275
        %4294 = vmatprep.subr.mxu0 0.0
        %4295 = vmatpush1.xpose.msra.mxu0 %v4261
        %4296 = vmatprep.subr.mxu0 0.0
        %4297 = vmatpush1.xpose.msra.mxu0 %v4247
        %4298 = vmatprep.subr.mxu0 0.0
        %4299 = vmatpush1.xpose.msra.mxu0 %v4233
        %4300 = vmatprep.subr.mxu0 0.0
        %4301 = vmatpush1.xpose.msra.mxu0 %v4219
        %4302 = vmatprep.subr.mxu0 0.0
        %4303 = vmatpush1.xpose.msra.mxu0 %v4205
        %4304 = vmatprep.subr.mxu0 0.0
        %4305 = vmatpush1.xpose.msra.mxu0 %v4191
        %4306 = vmatprep.subr.mxu0 0.0
        %4307 = vmatpush1.xpose.msra.mxu0 %v4177
        %4308 = vmatprep.subr.mxu0 0.0
        %4309 = vmatpush1.xpose.msra.mxu0 %v4163
        %4310 = vmatprep.subr.mxu0 0.0
        %4311 = vmatpush1.xpose.msra.mxu0 %v4149
        %4312 = vmatprep.subr.mxu0 0.0
        %4313 = vmatpush1.xpose.msra.mxu0 %v4135
        %4314 = vmatprep.subr.mxu0 0.0
        %4315 = vmatpush1.xpose.msra.mxu0 %v4121
        %4316 = vmatprep.subr.mxu0 0.0
        %4317 = vmatpush1.xpose.msra.mxu0 %v4107
        %4318 = vmatprep.subr.mxu0 0.0
        %4319 = vmatpush1.xpose.msra.mxu0 %v4093
        %4320 = vmatprep.subr.mxu0 0.0
        %4321 = vmatpush1.xpose.msra.mxu0 %v4079
        %4322 = vmatprep.subr.mxu0 0.0
        %4323 = vmatpush1.xpose.msra.mxu0 %v4065
        %4324 = vmatprep.subr.mxu0 0.0
        %4325 = vmatpush2.xpose.msra.mxu0 0.0
        %4326 = vmatprep.subr.mxu0 0.0
        %4327 = vmatpush2.xpose.msra.mxu0 0.0
        %4328 = vmatprep.subr.mxu0 0.0
        %4329 = vmatpush2.xpose.msra.mxu0 0.0
        %4330 = vmatprep.subr.mxu0 0.0
        %4331 = vmatpush2.xpose.msra.mxu0 0.0
        %4332 = vmatprep.subr.mxu0 0.0
        %4333 = vmatpush2.xpose.msra.mxu0 0.0
        %4334 = vmatprep.subr.mxu0 0.0
        %4335 = vmatpush2.xpose.msra.mxu0 0.0
        %4336 = vmatprep.subr.mxu0 0.0
        %4337 = vmatpush2.xpose.msra.mxu0 0.0
        %4338 = vmatprep.subr.mxu0 0.0
        %4339 = vmatpush2.xpose.msra.mxu0 0.0
        %4340 = vmatprep.subr.mxu0 0.0
        %4341 = vmatpush2.xpose.msra.mxu0 0.0
        %4342 = vmatprep.subr.mxu0 0.0
        %4343 = vmatpush2.xpose.msra.mxu0 0.0
        %4344 = vmatprep.subr.mxu0 0.0
        %4345 = vmatpush2.xpose.msra.mxu0 0.0
        %4346 = vmatprep.subr.mxu0 0.0
        %4347 = vmatpush2.xpose.msra.mxu0 0.0
        %4348 = vmatprep.subr.mxu0 0.0
        %4349 = vmatpush2.xpose.msra.mxu0 0.0
        %4350 = vmatprep.subr.mxu0 0.0
        %4351 = vmatpush2.xpose.msra.mxu0 0.0
        %4352 = vmatprep.subr.mxu0 0.0
        %4353 = vmatpush2.xpose.msra.mxu0 0.0
        %4354 = vmatprep.subr.mxu0 0.0
        %4355 = vmatpush2.xpose.msra.mxu0 0.0
        %4356 = vmatprep.mubr.f32.mxu0 0.0
        %4357 = vmatmul.mubr.f32.gmra.mxu0 %v368
        %v4358 = vpop.f32.mrf.mxu0
        %v4359 = vadd.f32 0.0, %v4358
        %v4360 = vpop.f32.mrf.mxu0
        %4361 = vdwg.mxu0
        %s4362 = sadd.s32 %s369, 6
        %s4363 = smul.u32 %s4362, 8
        %s4364 = scalar_lea.vmem [#allocation2], %s4363
        %4365 = vst [vmem:[%s4364] sm:$0xff] %v4359
        %v4366 = vld [vmem:[%s323 + $0x7] sm:$0x1]
        %v4367 = vld [vmem:[%s323 + $0xf] sm:$0x1]
        %v4368 = vld [vmem:[%s323 + $0x17] sm:$0x1]
        %v4369 = vld [vmem:[%s323 + $0x1f] sm:$0x1]
        %v4370 = vld [vmem:[%s323 + $0x27] sm:$0x1]
        %v4371 = vld [vmem:[%s323 + $0x2f] sm:$0x1]
        %v4372 = vld [vmem:[%s323 + $0x37] sm:$0x1]
        %v4373 = vld [vmem:[%s323 + $0x3f] sm:$0x1]
        %v4374 = vld [vmem:[%s323 + $0x47] sm:$0x1]
        %v4375 = vld [vmem:[%s323 + $0x4f] sm:$0x1]
        %v4376 = vld [vmem:[%s323 + $0x57] sm:$0x1]
        %v4377 = vld [vmem:[%s323 + $0x5f] sm:$0x1]
        %v4378 = vld [vmem:[%s323 + $0x67] sm:$0x1]
        %v4379 = vld [vmem:[%s323 + $0x6f] sm:$0x1]
        %v4380 = vld [vmem:[%s323 + $0x77] sm:$0x1]
        %v4381 = vld [vmem:[%s323 + $0x7f] sm:$0x1]
        %v4382 = vld [vmem:[%s323 + $0x87] sm:$0x1]
        %v4383 = vld [vmem:[%s323 + $0x8f] sm:$0x1]
        %v4384 = vld [vmem:[%s323 + $0x97] sm:$0x1]
        %v4385 = vld [vmem:[%s323 + $0x9f] sm:$0x1]
        %v4386 = vld [vmem:[%s323 + $0xa7] sm:$0x1]
        %v4387 = vld [vmem:[%s323 + $0xaf] sm:$0x1]
        %v4388 = vld [vmem:[%s323 + $0xb7] sm:$0x1]
        %v4389 = vld [vmem:[%s323 + $0xbf] sm:$0x1]
        %v4390 = vld [vmem:[%s323 + $0xc7] sm:$0x1]
        %v4391 = vld [vmem:[%s323 + $0xcf] sm:$0x1]
        %v4392 = vld [vmem:[%s323 + $0xd7] sm:$0x1]
        %v4393 = vld [vmem:[%s323 + $0xdf] sm:$0x1]
        %v4394 = vld [vmem:[%s323 + $0xe7] sm:$0x1]
        %v4395 = vld [vmem:[%s323 + $0xef] sm:$0x1]
        %v4396 = vld [vmem:[%s323 + $0xf7] sm:$0x1]
        %v4397 = vld [vmem:[%s323 + $0xff] sm:$0x1]
        %v4398 = vld [vmem:[%s323 + $0x107] sm:$0x1]
        %v4399 = vld [vmem:[%s323 + $0x10f] sm:$0x1]
        %v4400 = vld [vmem:[%s323 + $0x117] sm:$0x1]
        %v4401 = vld [vmem:[%s323 + $0x11f] sm:$0x1]
        %v4402 = vld [vmem:[%s323 + $0x127] sm:$0x1]
        %v4403 = vld [vmem:[%s323 + $0x12f] sm:$0x1]
        %v4404 = vld [vmem:[%s323 + $0x137] sm:$0x1]
        %v4405 = vld [vmem:[%s323 + $0x13f] sm:$0x1]
        %v4406 = vld [vmem:[%s323 + $0x147] sm:$0x1]
        %v4407 = vld [vmem:[%s323 + $0x14f] sm:$0x1]
        %v4408 = vld [vmem:[%s323 + $0x157] sm:$0x1]
        %v4409 = vld [vmem:[%s323 + $0x15f] sm:$0x1]
        %v4410 = vld [vmem:[%s323 + $0x167] sm:$0x1]
        %v4411 = vld [vmem:[%s323 + $0x16f] sm:$0x1]
        %v4412 = vld [vmem:[%s323 + $0x177] sm:$0x1]
        %v4413 = vld [vmem:[%s323 + $0x17f] sm:$0x1]
        %v4414 = vld [vmem:[%s323 + $0x187] sm:$0x1]
        %v4415 = vld [vmem:[%s323 + $0x18f] sm:$0x1]
        %v4416 = vld [vmem:[%s323 + $0x197] sm:$0x1]
        %v4417 = vld [vmem:[%s323 + $0x19f] sm:$0x1]
        %v4418 = vld [vmem:[%s323 + $0x1a7] sm:$0x1]
        %v4419 = vld [vmem:[%s323 + $0x1af] sm:$0x1]
        %v4420 = vld [vmem:[%s323 + $0x1b7] sm:$0x1]
        %v4421 = vld [vmem:[%s323 + $0x1bf] sm:$0x1]
        %v4422 = vld [vmem:[%s323 + $0x1c7] sm:$0x1]
        %v4423 = vld [vmem:[%s323 + $0x1cf] sm:$0x1]
        %v4424 = vld [vmem:[%s323 + $0x1d7] sm:$0x1]
        %v4425 = vld [vmem:[%s323 + $0x1df] sm:$0x1]
        %v4426 = vld [vmem:[%s323 + $0x1e7] sm:$0x1]
        %v4427 = vld [vmem:[%s323 + $0x1ef] sm:$0x1]
        %v4428 = vld [vmem:[%s323 + $0x1f7] sm:$0x1]
        %v4429 = vld [vmem:[%s323 + $0x1ff] sm:$0x1]
        %v4430 = vld [vmem:[%s323 + $0x207] sm:$0x1]
        %v4431 = vld [vmem:[%s323 + $0x20f] sm:$0x1]
        %v4432 = vld [vmem:[%s323 + $0x217] sm:$0x1]
        %v4433 = vld [vmem:[%s323 + $0x21f] sm:$0x1]
        %v4434 = vld [vmem:[%s323 + $0x227] sm:$0x1]
        %v4435 = vld [vmem:[%s323 + $0x22f] sm:$0x1]
        %v4436 = vld [vmem:[%s323 + $0x237] sm:$0x1]
        %v4437 = vld [vmem:[%s323 + $0x23f] sm:$0x1]
        %v4438 = vld [vmem:[%s323 + $0x247] sm:$0x1]
        %v4439 = vld [vmem:[%s323 + $0x24f] sm:$0x1]
        %v4440 = vld [vmem:[%s323 + $0x257] sm:$0x1]
        %v4441 = vld [vmem:[%s323 + $0x25f] sm:$0x1]
        %v4442 = vld [vmem:[%s323 + $0x267] sm:$0x1]
        %v4443 = vld [vmem:[%s323 + $0x26f] sm:$0x1]
        %v4444 = vld [vmem:[%s323 + $0x277] sm:$0x1]
        %v4445 = vld [vmem:[%s323 + $0x27f] sm:$0x1]
        %v4446 = vld [vmem:[%s323 + $0x287] sm:$0x1]
        %v4447 = vld [vmem:[%s323 + $0x28f] sm:$0x1]
        %v4448 = vld [vmem:[%s323 + $0x297] sm:$0x1]
        %v4449 = vld [vmem:[%s323 + $0x29f] sm:$0x1]
        %v4450 = vld [vmem:[%s323 + $0x2a7] sm:$0x1]
        %v4451 = vld [vmem:[%s323 + $0x2af] sm:$0x1]
        %v4452 = vld [vmem:[%s323 + $0x2b7] sm:$0x1]
        %v4453 = vld [vmem:[%s323 + $0x2bf] sm:$0x1]
        %v4454 = vld [vmem:[%s323 + $0x2c7] sm:$0x1]
        %v4455 = vld [vmem:[%s323 + $0x2cf] sm:$0x1]
        %v4456 = vld [vmem:[%s323 + $0x2d7] sm:$0x1]
        %v4457 = vld [vmem:[%s323 + $0x2df] sm:$0x1]
        %v4458 = vld [vmem:[%s323 + $0x2e7] sm:$0x1]
        %v4459 = vld [vmem:[%s323 + $0x2ef] sm:$0x1]
        %v4460 = vld [vmem:[%s323 + $0x2f7] sm:$0x1]
        %v4461 = vld [vmem:[%s323 + $0x2ff] sm:$0x1]
        %v4462 = vld [vmem:[%s323 + $0x307] sm:$0x1]
        %v4463 = vld [vmem:[%s323 + $0x30f] sm:$0x1]
        %v4464 = vld [vmem:[%s323 + $0x317] sm:$0x1]
        %v4465 = vld [vmem:[%s323 + $0x31f] sm:$0x1]
        %v4466 = vld [vmem:[%s323 + $0x327] sm:$0x1]
        %v4467 = vld [vmem:[%s323 + $0x32f] sm:$0x1]
        %v4468 = vld [vmem:[%s323 + $0x337] sm:$0x1]
        %v4469 = vld [vmem:[%s323 + $0x33f] sm:$0x1]
        %v4470 = vld [vmem:[%s323 + $0x347] sm:$0x1]
        %v4471 = vld [vmem:[%s323 + $0x34f] sm:$0x1]
        %v4472 = vld [vmem:[%s323 + $0x357] sm:$0x1]
        %v4473 = vld [vmem:[%s323 + $0x35f] sm:$0x1]
        %v4474 = vld [vmem:[%s323 + $0x367] sm:$0x1]
        %v4475 = vld [vmem:[%s323 + $0x36f] sm:$0x1]
        %v4476 = vld [vmem:[%s323 + $0x377] sm:$0x1]
        %v4477 = vld [vmem:[%s323 + $0x37f] sm:$0x1]
        %v4478 = vld [vmem:[%s323 + $0x387] sm:$0x1]
        %v4479 = vld [vmem:[%s323 + $0x38f] sm:$0x1]
        %v4480 = vld [vmem:[%s323 + $0x397] sm:$0x1]
        %v4481 = vld [vmem:[%s323 + $0x39f] sm:$0x1]
        %v4482 = vld [vmem:[%s323 + $0x3a7] sm:$0x1]
        %v4483 = vld [vmem:[%s323 + $0x3af] sm:$0x1]
        %v4484 = vld [vmem:[%s323 + $0x3b7] sm:$0x1]
        %v4485 = vld [vmem:[%s323 + $0x3bf] sm:$0x1]
        %v4486 = vld [vmem:[%s323 + $0x3c7] sm:$0x1]
        %v4487 = vld [vmem:[%s323 + $0x3cf] sm:$0x1]
        %v4488 = vld [vmem:[%s323 + $0x3d7] sm:$0x1]
        %v4489 = vld [vmem:[%s323 + $0x3df] sm:$0x1]
        %v4490 = vld [vmem:[%s323 + $0x3e7] sm:$0x1]
        %v4491 = vld [vmem:[%s323 + $0x3ef] sm:$0x1]
        %v4492 = vld [vmem:[%s323 + $0x3f7] sm:$0x1]
        %v4493 = vld [vmem:[%s323 + $0x3ff] sm:$0x1]
        %v4622 = vrot.slane %v4367, 7
        %v4623 = vsel %vm627, %v4622, %v4366
        %v4624 = vrot.slane %v4368, 6
        %v4625 = vsel %vm630, %v4624, %v4623
        %v4626 = vrot.slane %v4369, 5
        %v4627 = vsel %vm633, %v4626, %v4625
        %v4628 = vrot.slane %v4370, 4
        %v4629 = vsel %vm636, %v4628, %v4627
        %v4630 = vrot.slane %v4371, 3
        %v4631 = vsel %vm639, %v4630, %v4629
        %v4632 = vrot.slane %v4372, 2
        %v4633 = vsel %vm642, %v4632, %v4631
        %v4634 = vrot.slane %v4373, 1
        %v4635 = vsel %vm645, %v4634, %v4633
        %v4636 = vrot.slane %v4375, 7
        %v4637 = vsel %vm627, %v4636, %v4374
        %v4638 = vrot.slane %v4376, 6
        %v4639 = vsel %vm630, %v4638, %v4637
        %v4640 = vrot.slane %v4377, 5
        %v4641 = vsel %vm633, %v4640, %v4639
        %v4642 = vrot.slane %v4378, 4
        %v4643 = vsel %vm636, %v4642, %v4641
        %v4644 = vrot.slane %v4379, 3
        %v4645 = vsel %vm639, %v4644, %v4643
        %v4646 = vrot.slane %v4380, 2
        %v4647 = vsel %vm642, %v4646, %v4645
        %v4648 = vrot.slane %v4381, 1
        %v4649 = vsel %vm645, %v4648, %v4647
        %v4650 = vrot.slane %v4383, 7
        %v4651 = vsel %vm627, %v4650, %v4382
        %v4652 = vrot.slane %v4384, 6
        %v4653 = vsel %vm630, %v4652, %v4651
        %v4654 = vrot.slane %v4385, 5
        %v4655 = vsel %vm633, %v4654, %v4653
        %v4656 = vrot.slane %v4386, 4
        %v4657 = vsel %vm636, %v4656, %v4655
        %v4658 = vrot.slane %v4387, 3
        %v4659 = vsel %vm639, %v4658, %v4657
        %v4660 = vrot.slane %v4388, 2
        %v4661 = vsel %vm642, %v4660, %v4659
        %v4662 = vrot.slane %v4389, 1
        %v4663 = vsel %vm645, %v4662, %v4661
        %v4664 = vrot.slane %v4391, 7
        %v4665 = vsel %vm627, %v4664, %v4390
        %v4666 = vrot.slane %v4392, 6
        %v4667 = vsel %vm630, %v4666, %v4665
        %v4668 = vrot.slane %v4393, 5
        %v4669 = vsel %vm633, %v4668, %v4667
        %v4670 = vrot.slane %v4394, 4
        %v4671 = vsel %vm636, %v4670, %v4669
        %v4672 = vrot.slane %v4395, 3
        %v4673 = vsel %vm639, %v4672, %v4671
        %v4674 = vrot.slane %v4396, 2
        %v4675 = vsel %vm642, %v4674, %v4673
        %v4676 = vrot.slane %v4397, 1
        %v4677 = vsel %vm645, %v4676, %v4675
        %v4678 = vrot.slane %v4399, 7
        %v4679 = vsel %vm627, %v4678, %v4398
        %v4680 = vrot.slane %v4400, 6
        %v4681 = vsel %vm630, %v4680, %v4679
        %v4682 = vrot.slane %v4401, 5
        %v4683 = vsel %vm633, %v4682, %v4681
        %v4684 = vrot.slane %v4402, 4
        %v4685 = vsel %vm636, %v4684, %v4683
        %v4686 = vrot.slane %v4403, 3
        %v4687 = vsel %vm639, %v4686, %v4685
        %v4688 = vrot.slane %v4404, 2
        %v4689 = vsel %vm642, %v4688, %v4687
        %v4690 = vrot.slane %v4405, 1
        %v4691 = vsel %vm645, %v4690, %v4689
        %v4692 = vrot.slane %v4407, 7
        %v4693 = vsel %vm627, %v4692, %v4406
        %v4694 = vrot.slane %v4408, 6
        %v4695 = vsel %vm630, %v4694, %v4693
        %v4696 = vrot.slane %v4409, 5
        %v4697 = vsel %vm633, %v4696, %v4695
        %v4698 = vrot.slane %v4410, 4
        %v4699 = vsel %vm636, %v4698, %v4697
        %v4700 = vrot.slane %v4411, 3
        %v4701 = vsel %vm639, %v4700, %v4699
        %v4702 = vrot.slane %v4412, 2
        %v4703 = vsel %vm642, %v4702, %v4701
        %v4704 = vrot.slane %v4413, 1
        %v4705 = vsel %vm645, %v4704, %v4703
        %v4706 = vrot.slane %v4415, 7
        %v4707 = vsel %vm627, %v4706, %v4414
        %v4708 = vrot.slane %v4416, 6
        %v4709 = vsel %vm630, %v4708, %v4707
        %v4710 = vrot.slane %v4417, 5
        %v4711 = vsel %vm633, %v4710, %v4709
        %v4712 = vrot.slane %v4418, 4
        %v4713 = vsel %vm636, %v4712, %v4711
        %v4714 = vrot.slane %v4419, 3
        %v4715 = vsel %vm639, %v4714, %v4713
        %v4716 = vrot.slane %v4420, 2
        %v4717 = vsel %vm642, %v4716, %v4715
        %v4718 = vrot.slane %v4421, 1
        %v4719 = vsel %vm645, %v4718, %v4717
        %v4720 = vrot.slane %v4423, 7
        %v4721 = vsel %vm627, %v4720, %v4422
        %v4722 = vrot.slane %v4424, 6
        %v4723 = vsel %vm630, %v4722, %v4721
        %v4724 = vrot.slane %v4425, 5
        %v4725 = vsel %vm633, %v4724, %v4723
        %v4726 = vrot.slane %v4426, 4
        %v4727 = vsel %vm636, %v4726, %v4725
        %v4728 = vrot.slane %v4427, 3
        %v4729 = vsel %vm639, %v4728, %v4727
        %v4730 = vrot.slane %v4428, 2
        %v4731 = vsel %vm642, %v4730, %v4729
        %v4732 = vrot.slane %v4429, 1
        %v4733 = vsel %vm645, %v4732, %v4731
        %v4734 = vrot.slane %v4431, 7
        %v4735 = vsel %vm627, %v4734, %v4430
        %v4736 = vrot.slane %v4432, 6
        %v4737 = vsel %vm630, %v4736, %v4735
        %v4738 = vrot.slane %v4433, 5
        %v4739 = vsel %vm633, %v4738, %v4737
        %v4740 = vrot.slane %v4434, 4
        %v4741 = vsel %vm636, %v4740, %v4739
        %v4742 = vrot.slane %v4435, 3
        %v4743 = vsel %vm639, %v4742, %v4741
        %v4744 = vrot.slane %v4436, 2
        %v4745 = vsel %vm642, %v4744, %v4743
        %v4746 = vrot.slane %v4437, 1
        %v4747 = vsel %vm645, %v4746, %v4745
        %v4748 = vrot.slane %v4439, 7
        %v4749 = vsel %vm627, %v4748, %v4438
        %v4750 = vrot.slane %v4440, 6
        %v4751 = vsel %vm630, %v4750, %v4749
        %v4752 = vrot.slane %v4441, 5
        %v4753 = vsel %vm633, %v4752, %v4751
        %v4754 = vrot.slane %v4442, 4
        %v4755 = vsel %vm636, %v4754, %v4753
        %v4756 = vrot.slane %v4443, 3
        %v4757 = vsel %vm639, %v4756, %v4755
        %v4758 = vrot.slane %v4444, 2
        %v4759 = vsel %vm642, %v4758, %v4757
        %v4760 = vrot.slane %v4445, 1
        %v4761 = vsel %vm645, %v4760, %v4759
        %v4762 = vrot.slane %v4447, 7
        %v4763 = vsel %vm627, %v4762, %v4446
        %v4764 = vrot.slane %v4448, 6
        %v4765 = vsel %vm630, %v4764, %v4763
        %v4766 = vrot.slane %v4449, 5
        %v4767 = vsel %vm633, %v4766, %v4765
        %v4768 = vrot.slane %v4450, 4
        %v4769 = vsel %vm636, %v4768, %v4767
        %v4770 = vrot.slane %v4451, 3
        %v4771 = vsel %vm639, %v4770, %v4769
        %v4772 = vrot.slane %v4452, 2
        %v4773 = vsel %vm642, %v4772, %v4771
        %v4774 = vrot.slane %v4453, 1
        %v4775 = vsel %vm645, %v4774, %v4773
        %v4776 = vrot.slane %v4455, 7
        %v4777 = vsel %vm627, %v4776, %v4454
        %v4778 = vrot.slane %v4456, 6
        %v4779 = vsel %vm630, %v4778, %v4777
        %v4780 = vrot.slane %v4457, 5
        %v4781 = vsel %vm633, %v4780, %v4779
        %v4782 = vrot.slane %v4458, 4
        %v4783 = vsel %vm636, %v4782, %v4781
        %v4784 = vrot.slane %v4459, 3
        %v4785 = vsel %vm639, %v4784, %v4783
        %v4786 = vrot.slane %v4460, 2
        %v4787 = vsel %vm642, %v4786, %v4785
        %v4788 = vrot.slane %v4461, 1
        %v4789 = vsel %vm645, %v4788, %v4787
        %v4790 = vrot.slane %v4463, 7
        %v4791 = vsel %vm627, %v4790, %v4462
        %v4792 = vrot.slane %v4464, 6
        %v4793 = vsel %vm630, %v4792, %v4791
        %v4794 = vrot.slane %v4465, 5
        %v4795 = vsel %vm633, %v4794, %v4793
        %v4796 = vrot.slane %v4466, 4
        %v4797 = vsel %vm636, %v4796, %v4795
        %v4798 = vrot.slane %v4467, 3
        %v4799 = vsel %vm639, %v4798, %v4797
        %v4800 = vrot.slane %v4468, 2
        %v4801 = vsel %vm642, %v4800, %v4799
        %v4802 = vrot.slane %v4469, 1
        %v4803 = vsel %vm645, %v4802, %v4801
        %v4804 = vrot.slane %v4471, 7
        %v4805 = vsel %vm627, %v4804, %v4470
        %v4806 = vrot.slane %v4472, 6
        %v4807 = vsel %vm630, %v4806, %v4805
        %v4808 = vrot.slane %v4473, 5
        %v4809 = vsel %vm633, %v4808, %v4807
        %v4810 = vrot.slane %v4474, 4
        %v4811 = vsel %vm636, %v4810, %v4809
        %v4812 = vrot.slane %v4475, 3
        %v4813 = vsel %vm639, %v4812, %v4811
        %v4814 = vrot.slane %v4476, 2
        %v4815 = vsel %vm642, %v4814, %v4813
        %v4816 = vrot.slane %v4477, 1
        %v4817 = vsel %vm645, %v4816, %v4815
        %v4818 = vrot.slane %v4479, 7
        %v4819 = vsel %vm627, %v4818, %v4478
        %v4820 = vrot.slane %v4480, 6
        %v4821 = vsel %vm630, %v4820, %v4819
        %v4822 = vrot.slane %v4481, 5
        %v4823 = vsel %vm633, %v4822, %v4821
        %v4824 = vrot.slane %v4482, 4
        %v4825 = vsel %vm636, %v4824, %v4823
        %v4826 = vrot.slane %v4483, 3
        %v4827 = vsel %vm639, %v4826, %v4825
        %v4828 = vrot.slane %v4484, 2
        %v4829 = vsel %vm642, %v4828, %v4827
        %v4830 = vrot.slane %v4485, 1
        %v4831 = vsel %vm645, %v4830, %v4829
        %v4832 = vrot.slane %v4487, 7
        %v4833 = vsel %vm627, %v4832, %v4486
        %v4834 = vrot.slane %v4488, 6
        %v4835 = vsel %vm630, %v4834, %v4833
        %v4836 = vrot.slane %v4489, 5
        %v4837 = vsel %vm633, %v4836, %v4835
        %v4838 = vrot.slane %v4490, 4
        %v4839 = vsel %vm636, %v4838, %v4837
        %v4840 = vrot.slane %v4491, 3
        %v4841 = vsel %vm639, %v4840, %v4839
        %v4842 = vrot.slane %v4492, 2
        %v4843 = vsel %vm642, %v4842, %v4841
        %v4844 = vrot.slane %v4493, 1
        %v4845 = vsel %vm645, %v4844, %v4843
        %4862 = vmatprep.subr.mxu0 0.0
        %4863 = vmatpush1.xpose.msra.mxu0 %v4845
        %4864 = vmatprep.subr.mxu0 0.0
        %4865 = vmatpush1.xpose.msra.mxu0 %v4831
        %4866 = vmatprep.subr.mxu0 0.0
        %4867 = vmatpush1.xpose.msra.mxu0 %v4817
        %4868 = vmatprep.subr.mxu0 0.0
        %4869 = vmatpush1.xpose.msra.mxu0 %v4803
        %4870 = vmatprep.subr.mxu0 0.0
        %4871 = vmatpush1.xpose.msra.mxu0 %v4789
        %4872 = vmatprep.subr.mxu0 0.0
        %4873 = vmatpush1.xpose.msra.mxu0 %v4775
        %4874 = vmatprep.subr.mxu0 0.0
        %4875 = vmatpush1.xpose.msra.mxu0 %v4761
        %4876 = vmatprep.subr.mxu0 0.0
        %4877 = vmatpush1.xpose.msra.mxu0 %v4747
        %4878 = vmatprep.subr.mxu0 0.0
        %4879 = vmatpush1.xpose.msra.mxu0 %v4733
        %4880 = vmatprep.subr.mxu0 0.0
        %4881 = vmatpush1.xpose.msra.mxu0 %v4719
        %4882 = vmatprep.subr.mxu0 0.0
        %4883 = vmatpush1.xpose.msra.mxu0 %v4705
        %4884 = vmatprep.subr.mxu0 0.0
        %4885 = vmatpush1.xpose.msra.mxu0 %v4691
        %4886 = vmatprep.subr.mxu0 0.0
        %4887 = vmatpush1.xpose.msra.mxu0 %v4677
        %4888 = vmatprep.subr.mxu0 0.0
        %4889 = vmatpush1.xpose.msra.mxu0 %v4663
        %4890 = vmatprep.subr.mxu0 0.0
        %4891 = vmatpush1.xpose.msra.mxu0 %v4649
        %4892 = vmatprep.subr.mxu0 0.0
        %4893 = vmatpush1.xpose.msra.mxu0 %v4635
        %4894 = vmatprep.subr.mxu0 0.0
        %4895 = vmatpush2.xpose.msra.mxu0 0.0
        %4896 = vmatprep.subr.mxu0 0.0
        %4897 = vmatpush2.xpose.msra.mxu0 0.0
        %4898 = vmatprep.subr.mxu0 0.0
        %4899 = vmatpush2.xpose.msra.mxu0 0.0
        %4900 = vmatprep.subr.mxu0 0.0
        %4901 = vmatpush2.xpose.msra.mxu0 0.0
        %4902 = vmatprep.subr.mxu0 0.0
        %4903 = vmatpush2.xpose.msra.mxu0 0.0
        %4904 = vmatprep.subr.mxu0 0.0
        %4905 = vmatpush2.xpose.msra.mxu0 0.0
        %4906 = vmatprep.subr.mxu0 0.0
        %4907 = vmatpush2.xpose.msra.mxu0 0.0
        %4908 = vmatprep.subr.mxu0 0.0
        %4909 = vmatpush2.xpose.msra.mxu0 0.0
        %4910 = vmatprep.subr.mxu0 0.0
        %4911 = vmatpush2.xpose.msra.mxu0 0.0
        %4912 = vmatprep.subr.mxu0 0.0
        %4913 = vmatpush2.xpose.msra.mxu0 0.0
        %4914 = vmatprep.subr.mxu0 0.0
        %4915 = vmatpush2.xpose.msra.mxu0 0.0
        %4916 = vmatprep.subr.mxu0 0.0
        %4917 = vmatpush2.xpose.msra.mxu0 0.0
        %4918 = vmatprep.subr.mxu0 0.0
        %4919 = vmatpush2.xpose.msra.mxu0 0.0
        %4920 = vmatprep.subr.mxu0 0.0
        %4921 = vmatpush2.xpose.msra.mxu0 0.0
        %4922 = vmatprep.subr.mxu0 0.0
        %4923 = vmatpush2.xpose.msra.mxu0 0.0
        %4924 = vmatprep.subr.mxu0 0.0
        %4925 = vmatpush2.xpose.msra.mxu0 0.0
        %4926 = vmatprep.mubr.f32.mxu0 0.0
        %4927 = vmatmul.mubr.f32.gmra.mxu0 %v368
        %v4928 = vpop.f32.mrf.mxu0
        %v4929 = vadd.f32 0.0, %v4928
        %v4930 = vpop.f32.mrf.mxu0
        %4931 = vdwg.mxu0
        %s4932 = sadd.s32 %s369, 7
        %s4933 = smul.u32 %s4932, 8
        %s4934 = scalar_lea.vmem [#allocation2], %s4933
        %4935 = vst [vmem:[%s4934] sm:$0xff] %v4929
        %p4936 = scmp.eq.s32.totalorder %s29, 3
        // Predicated region
        $region69: #{tpu_custom_call.1} parent=43 // pred_check
          %p4937 = pneg %p4936
        $region70: #{tpu_custom_call.1} parent=43 // pred_check_branch
          %4939 = sbr.rel (%p4937) target = $region72
        $region71: #{tpu_custom_call.1} parent=43 // pred_region
          %v4940 = vld [vmem:[#allocation8] sm:$0xff]
          %s4941 = scalar_lea.vmem [#allocation2], 248
          %v4942 = vld [vmem:[%s4941] sm:$0xff]
          loop: start=0, step=1, limit=32
          $region73: #{tpu_custom_call.1} parent=71 // loop_pre_header
            _
          $region74: #{tpu_custom_call.1} parent=71 // loop_header
            %s4944 = sphi 0, %s4948
            %p4945 = scmp.ge.s32.totalorder %s4944, 32
            %v4949 = vphi %v4942, %v4970
          $region75: #{tpu_custom_call.1} parent=71 // loop_header_branch
            %4947 = sbr.rel (%p4945) target = $region79
          $region76: #{tpu_custom_call.1} parent=71 // loop_body
            %s4950 = scalar_lea.vmem [#allocation11], %s4944
            %v4951 = vld [vmem:[%s4950] sm:$0x1]
            %v4952 = vsub.f32 1.0, %v4951
            %v4954 = vlaneseq
            %v4955 = vshrl.u32 %v4954, 7
            %v4956 = vsub.s32 0, %v4955
            %v4957 = vrot.slane %v4952, %v4956
            %v4959 = vmul.f32 %v4957, %v4949
            %s4960 = smul.u32 %s4944, 8
            %s4961 = scalar_lea.vmem [#allocation2], %s4960
            %v4962 = vld [vmem:[%s4961] sm:$0xff]
            %v4964 = vlaneseq
            %v4965 = vshrl.u32 %v4964, 7
            %v4966 = vsub.s32 0, %v4965
            %v4967 = vrot.slane %v4951, %v4966
            %v4969 = vmul.f32 %v4967, %v4962
            %v4970 = vadd.f32 %v4959, %v4969
            %4971 = vst [vmem:[%s4961] sm:$0xff] %v4970
          $region77: #{tpu_custom_call.1} parent=71 // loop_footer
            %s4948 = sadd.s32 1, %s4944
          $region78: #{tpu_custom_call.1} parent=71 // loop_footer_branch
            %4943 = sbr.rel target = $region74
          $region79: #{tpu_custom_call.1} parent=71 // loop_exit
            _
          %v4972 = vlaneseq
          %v4973 = vshrl.u32 %v4972, 7
          %vm4974 = vcmask 64512
          %v4975 = vsel %vm4974, %v4940, -inf
          %4976 = vmax.xlane.f32.xlu0 %v4975
          %v4977 = vpop.xlane.xlu0 %4976
          %v4978 = vsub.f32 %v4940, %v4977
          %v4979 = vmul.f32 %v4978, 1.442695
          %v4980 = vpow.pop %v4979
          %4982 = vset.pattern.permute.xlu0 0
          %4983 = vperm.xlu0 %4982, %v4980
          %v4984 = vpop.permute.xlu0 %4983
          %4986 = vset.pattern.permute.xlu0 1
          %4987 = vperm.xlu0 %4986, %v4980
          %v4988 = vpop.permute.xlu0 %4987
          %4990 = vset.pattern.permute.xlu0 2
          %4991 = vperm.xlu0 %4990, %v4980
          %v4992 = vpop.permute.xlu0 %4991
          %4994 = vset.pattern.permute.xlu0 3
          %4995 = vperm.xlu0 %4994, %v4980
          %v4996 = vpop.permute.xlu0 %4995
          %4998 = vset.pattern.permute.xlu0 4
          %4999 = vperm.xlu0 %4998, %v4980
          %v5000 = vpop.permute.xlu0 %4999
          %5002 = vset.pattern.permute.xlu0 5
          %5003 = vperm.xlu0 %5002, %v4980
          %v5004 = vpop.permute.xlu0 %5003
          %5006 = vset.pattern.permute.xlu0 6
          %5007 = vperm.xlu0 %5006, %v4980
          %v5008 = vpop.permute.xlu0 %5007
          %5010 = vset.pattern.permute.xlu0 7
          %5011 = vperm.xlu0 %5010, %v4980
          %v5012 = vpop.permute.xlu0 %5011
          %s5014 = scalar_lea.vmem [#allocation9], 31
          %v5015 = vld [vmem:[%s5014] sm:$0x1]
          %v5016 = vlaneseq
          %v5017 = vshrl.u32 %v5016, 7
          %v5018 = vsub.s32 0, %v5017
          %v5019 = vrot.slane %v5015, %v5018
          %vm5020 = vcmp.eq.s32.totalorder %v4973, %v5019
          %v5021 = vsel %vm5020, 1, 0
          %v5022 = vcvt.s32.f32 %v5021
          %v5023 = vld [vmem:[%s4941] sm:$0xff]
          %v5024 = vmul.f32 %v5023, %v5022
          %s5025 = scalar_lea.vmem [#allocation11], 31
          %v5026 = vld [vmem:[%s5025] sm:$0x1]
          %v5028 = vlaneseq
          %v5029 = vshrl.u32 %v5028, 7
          %v5030 = vsub.s32 0, %v5029
          %v5031 = vrot.slane %v5026, %v5030
          %v5033 = vmul.f32 %v5024, %v5031
          loop: start=0, step=1, limit=31
          $region80: #{tpu_custom_call.1} parent=71 // loop_pre_header
            _
          $region81: #{tpu_custom_call.1} parent=71 // loop_header
            %s5035 = sphi 0, %s5039
            %p5036 = scmp.ge.s32.totalorder %s5035, 31
            %v5040 = vphi 0.0, %v5117
            %v5041 = vphi %v5033, %v5217
            %v5042 = vphi %v5022, %v5127
          $region82: #{tpu_custom_call.1} parent=71 // loop_header_branch
            %5038 = sbr.rel (%p5036) target = $region86
          $region83: #{tpu_custom_call.1} parent=71 // loop_body
            %s5043 = ssub.s32 31, %s5035
            %s5044 = scalar_lea.vmem [#allocation11], %s5043
            %v5045 = vld [vmem:[%s5044] sm:$0x1]
            %s5046 = smul.u32 %s5043, 8
            %s5047 = scalar_lea.vmem [#allocation2], %s5046
            %v5048 = vld [vmem:[%s5047] sm:$0xff]
            %v5049 = vadd.f32 %v5048, %v5040
            %v5050 = vrot.slane %v5049, 4
            %v5051 = vmax.f32 %v5049, %v5050
            %v5052 = vrot.slane %v5051, 2
            %v5053 = vmax.f32 %v5051, %v5052
            %v5054 = vrot.slane %v5053, 1
            %v5055 = vmax.f32 %v5053, %v5054
            %v5056 = vsub.f32 %v5049, %v5055
            %v5057 = vmul.f32 %v5056, 1.442695
            %v5058 = vpow.pop %v5057
            %v5059 = vlaneseq
            %v5060 = vshrl.u32 %v5059, 7
            %v5061 = vsub.s32 0, %v5060
            %v5062 = vrot.slane %v5058, %v5061
            %v5063 = vmul.f32 %v4984, %v5062
            %v5064 = vlaneseq
            %v5065 = vshrl.u32 %v5064, 7
            %v5066 = vsub.s32 1, %v5065
            %v5067 = vrot.slane %v5058, %v5066
            %v5068 = vmul.f32 %v4988, %v5067
            %v5069 = vadd.f32 %v5063, %v5068
            %v5070 = vlaneseq
            %v5071 = vshrl.u32 %v5070, 7
            %v5072 = vsub.s32 2, %v5071
            %v5073 = vrot.slane %v5058, %v5072
            %v5074 = vmul.f32 %v4992, %v5073
            %v5075 = vadd.f32 %v5069, %v5074
            %v5076 = vlaneseq
            %v5077 = vshrl.u32 %v5076, 7
            %v5078 = vsub.s32 3, %v5077
            %v5079 = vrot.slane %v5058, %v5078
            %v5080 = vmul.f32 %v4996, %v5079
            %v5081 = vadd.f32 %v5075, %v5080
            %v5082 = vlaneseq
            %v5083 = vshrl.u32 %v5082, 7
            %v5084 = vsub.s32 4, %v5083
            %v5085 = vrot.slane %v5058, %v5084
            %v5086 = vmul.f32 %v5000, %v5085
            %v5087 = vadd.f32 %v5081, %v5086
            %v5088 = vlaneseq
            %v5089 = vshrl.u32 %v5088, 7
            %v5090 = vsub.s32 5, %v5089
            %v5091 = vrot.slane %v5058, %v5090
            %v5092 = vmul.f32 %v5004, %v5091
            %v5093 = vadd.f32 %v5087, %v5092
            %v5094 = vlaneseq
            %v5095 = vshrl.u32 %v5094, 7
            %v5096 = vsub.s32 6, %v5095
            %v5097 = vrot.slane %v5058, %v5096
            %v5098 = vmul.f32 %v5008, %v5097
            %v5099 = vadd.f32 %v5093, %v5098
            %v5100 = vlaneseq
            %v5101 = vshrl.u32 %v5100, 7
            %v5102 = vsub.s32 7, %v5101
            %v5103 = vrot.slane %v5058, %v5102
            %v5104 = vmul.f32 %v5012, %v5103
            %v5105 = vadd.f32 %v5099, %v5104
            %v5106 = vadd.f32 %v5055, %v4977
            %v5107 = vmax.f32 %v5105, 1e-37
            %v5108 = vlog2.pop %v5107
            %v5109 = vmul.f32 %v5108, 0.6931472
            %v5110 = vadd.f32 %v5106, %v5109
            %v5112 = vlaneseq
            %v5113 = vshrl.u32 %v5112, 7
            %v5114 = vsub.s32 0, %v5113
            %v5115 = vrot.slane %v5045, %v5114
            %v5117 = vmul.f32 %v5110, %v5115
            %s5118 = ssub.s32 30, %s5035
            %s5119 = scalar_lea.vmem [#allocation9], %s5118
            %v5120 = vld [vmem:[%s5119] sm:$0x1]
            %v5121 = vlaneseq
            %v5122 = vshrl.u32 %v5121, 7
            %v5123 = vsub.s32 0, %v5122
            %v5124 = vrot.slane %v5120, %v5123
            %vm5125 = vcmp.eq.s32.totalorder %v4973, %v5124
            %v5126 = vsel %vm5125, 1, 0
            %v5127 = vcvt.s32.f32 %v5126
            %s5128 = smul.u32 %s5118, 8
            %s5129 = scalar_lea.vmem [#allocation2], %s5128
            %v5130 = vld [vmem:[%s5129] sm:$0xff]
            %v5131 = vmul.f32 %v5130, %v5127
            %s5132 = scalar_lea.vmem [#allocation11], %s5118
            %v5133 = vld [vmem:[%s5132] sm:$0x1]
            %v5135 = vlaneseq
            %v5136 = vshrl.u32 %v5135, 7
            %v5137 = vsub.s32 0, %v5136
            %v5138 = vrot.slane %v5133, %v5137
            %v5140 = vmul.f32 %v5131, %v5138
            %v5141 = vadd.f32 %v5041, %v5140
            %v5143 = vsel %vm4974, %v4940, 0
            %5145 = vmatprep.subr.mxu0 0.0
            %5146 = vmatpush1.msra.mxu0 0.0
            %5147 = vmatprep.subr.mxu0 0.0
            %5148 = vmatpush1.msra.mxu0 0.0
            %5149 = vmatprep.subr.mxu0 0.0
            %5150 = vmatpush1.msra.mxu0 0.0
            %5151 = vmatprep.subr.mxu0 0.0
            %5152 = vmatpush1.msra.mxu0 0.0
            %5153 = vmatprep.subr.mxu0 0.0
            %5154 = vmatpush1.msra.mxu0 0.0
            %5155 = vmatprep.subr.mxu0 0.0
            %5156 = vmatpush1.msra.mxu0 0.0
            %5157 = vmatprep.subr.mxu0 0.0
            %5158 = vmatpush1.msra.mxu0 0.0
            %5159 = vmatprep.subr.mxu0 0.0
            %5160 = vmatpush1.msra.mxu0 0.0
            %5161 = vmatprep.subr.mxu0 0.0
            %5162 = vmatpush1.msra.mxu0 0.0
            %5163 = vmatprep.subr.mxu0 0.0
            %5164 = vmatpush1.msra.mxu0 0.0
            %5165 = vmatprep.subr.mxu0 0.0
            %5166 = vmatpush1.msra.mxu0 0.0
            %5167 = vmatprep.subr.mxu0 0.0
            %5168 = vmatpush1.msra.mxu0 0.0
            %5169 = vmatprep.subr.mxu0 0.0
            %5170 = vmatpush1.msra.mxu0 0.0
            %5171 = vmatprep.subr.mxu0 0.0
            %5172 = vmatpush1.msra.mxu0 0.0
            %5173 = vmatprep.subr.mxu0 0.0
            %5174 = vmatpush1.msra.mxu0 0.0
            %5175 = vmatprep.subr.mxu0 0.0
            %5176 = vmatpush1.msra.mxu0 %v5042
            %5177 = vmatprep.subr.mxu0 0.0
            %5178 = vmatpush2.msra.mxu0 0.0
            %5179 = vmatprep.subr.mxu0 0.0
            %5180 = vmatpush2.msra.mxu0 0.0
            %5181 = vmatprep.subr.mxu0 0.0
            %5182 = vmatpush2.msra.mxu0 0.0
            %5183 = vmatprep.subr.mxu0 0.0
            %5184 = vmatpush2.msra.mxu0 0.0
            %5185 = vmatprep.subr.mxu0 0.0
            %5186 = vmatpush2.msra.mxu0 0.0
            %5187 = vmatprep.subr.mxu0 0.0
            %5188 = vmatpush2.msra.mxu0 0.0
            %5189 = vmatprep.subr.mxu0 0.0
            %5190 = vmatpush2.msra.mxu0 0.0
            %5191 = vmatprep.subr.mxu0 0.0
            %5192 = vmatpush2.msra.mxu0 0.0
            %5193 = vmatprep.subr.mxu0 0.0
            %5194 = vmatpush2.msra.mxu0 0.0
            %5195 = vmatprep.subr.mxu0 0.0
            %5196 = vmatpush2.msra.mxu0 0.0
            %5197 = vmatprep.subr.mxu0 0.0
            %5198 = vmatpush2.msra.mxu0 0.0
            %5199 = vmatprep.subr.mxu0 0.0
            %5200 = vmatpush2.msra.mxu0 0.0
            %5201 = vmatprep.subr.mxu0 0.0
            %5202 = vmatpush2.msra.mxu0 0.0
            %5203 = vmatprep.subr.mxu0 0.0
            %5204 = vmatpush2.msra.mxu0 0.0
            %5205 = vmatprep.subr.mxu0 0.0
            %5206 = vmatpush2.msra.mxu0 0.0
            %5207 = vmatprep.subr.mxu0 0.0
            %5208 = vmatpush2.msra.mxu0 0.0
            %5209 = vmatprep.mubr.f32.mxu0 0.0
            %5210 = vmatmul.mubr.f32.gmra.mxu0 %v5143
            %v5211 = vpop.f32.mrf.mxu0
            %v5212 = vadd.f32 0.0, %v5211
            %v5213 = vpop.f32.mrf.mxu0
            %5214 = vdwg.mxu0
            %v5215 = vmul.f32 %v5127, %v5212
            %v5216 = vmul.f32 %v5215, %v5115
            %v5217 = vadd.f32 %v5141, %v5216
          $region84: #{tpu_custom_call.1} parent=71 // loop_footer
            %s5039 = sadd.s32 1, %s5035
          $region85: #{tpu_custom_call.1} parent=71 // loop_footer_branch
            %5034 = sbr.rel target = $region81
          $region86: #{tpu_custom_call.1} parent=71 // loop_exit
            _
          %v5218 = vld [vmem:[#allocation2] sm:$0xff]
          %v5219 = vadd.f32 %v5218, %v5040
          %v5220 = vrot.slane %v5219, 4
          %v5221 = vmax.f32 %v5219, %v5220
          %v5222 = vrot.slane %v5221, 2
          %v5223 = vmax.f32 %v5221, %v5222
          %v5224 = vrot.slane %v5223, 1
          %v5225 = vmax.f32 %v5223, %v5224
          %v5226 = vsub.f32 %v5219, %v5225
          %v5227 = vmul.f32 %v5226, 1.442695
          %v5228 = vpow.pop %v5227
          %v5229 = vrot.slane %v5228, 4
          %v5230 = vadd.f32 %v5228, %v5229
          %v5231 = vrot.slane %v5230, 2
          %v5232 = vadd.f32 %v5230, %v5231
          %v5233 = vrot.slane %v5232, 1
          %v5234 = vadd.f32 %v5232, %v5233
          %v5235 = vlog2.pop %v5234
          %v5236 = vmul.f32 %v5235, 0.6931472
          %v5237 = vadd.f32 %v5225, %v5236
          %v5238 = vrot.slane %v5041, 4
          %v5239 = vadd.f32 %v5041, %v5238
          %v5240 = vrot.slane %v5239, 2
          %v5241 = vadd.f32 %v5239, %v5240
          %v5242 = vrot.slane %v5241, 1
          %v5243 = vadd.f32 %v5241, %v5242
          %v5244 = vsub.f32 %v5243, %v5237
          %v5245 = vld [vmem:[#allocation12] sm:$0x1]
          %v5246 = vmul.f32 %v5244, %v5245
          %5247 = vst [vmem:[#allocation14] sm:$0x1] %v5246
        $region72: #{tpu_custom_call.1} parent=43 // pred_fallthru
          _
        // Predicated region
        $region87: #{tpu_custom_call.1} parent=43 // pred_check
          %p5248 = pneg %p202
        $region88: #{tpu_custom_call.1} parent=43 // pred_check_branch
          %5250 = sbr.rel (%p5248) target = $region90
        $region89: #{tpu_custom_call.1} parent=43 // pred_region
          %s5252 = ssub.s32 16, 16
          %5253 = vsyncadd [#allocation5], %s5252
          %s5254 = smul.addr %s28, 16
          %s5255 = scalar_lea.hbm %s6, %s5254
          %s5257 = sshll.u32 [#allocation14], 4
          %s5258 = int_to_ptr.vmem [resolvable:$true] %s5257
          %5260 = dma.vmem_to_hbm [thread:$0]  %s5258, 16, %s5255, [#allocation5]
        $region90: #{tpu_custom_call.1} parent=43 // pred_fallthru
          _
        // Predicated region
        $region91: #{tpu_custom_call.1} parent=43 // pred_check
          %p5261 = pneg %p202
        $region92: #{tpu_custom_call.1} parent=43 // pred_check_branch
          %5263 = sbr.rel (%p5261) target = $region94
        $region93: #{tpu_custom_call.1} parent=43 // pred_region
          %5264 = dma.done [#allocation5], 16
        $region94: #{tpu_custom_call.1} parent=43 // pred_fallthru
          _
      $region44: #{tpu_custom_call.1} parent=5 // pred_fallthru
        _
      %p5265 = scmp.le.s32.totalorder 2, %s19
      // Predicated region
      $region95: #{tpu_custom_call.1} parent=5 // pred_check
        %p5266 = pneg %p5265
      $region96: #{tpu_custom_call.1} parent=5 // pred_check_branch
        %5268 = sbr.rel (%p5266) target = $region98
      $region97: #{tpu_custom_call.1} parent=5 // pred_region
        %s5269 = ssub.s32 %s19, 2
      $region98: #{tpu_custom_call.1} parent=5 // pred_fallthru
        _
    $region6: #{tpu_custom_call.1} parent=1 // loop_footer
      %s23 = sadd.s32 1, %s19
    $region7: #{tpu_custom_call.1} parent=1 // loop_footer_branch
      %18 = sbr.rel target = $region3
    $region8: #{tpu_custom_call.1} parent=1 // loop_exit
      _
    %5270 = vsyncpa [#allocation4], 1
    %s5271 = scalar_lea.sflag [#allocation4], 1
    %5272 = vsyncpa %s5271, 1
    %5273 = vsyncpa [#allocation7], 1
    %5274 = vsyncpa [#allocation10], 1
    %5275 = vsyncpa [#allocation13], 1
    %5276 = vsyncpa [#allocation5], 1
    %s5277 = scalar_lea.sflag [#allocation5], 1
    %5278 = vsyncpa %s5277, 1

</llo_original>
